<compile_context>
chip_gen: v5e
topology: v5e:2x2
jax: 0.10.0
libtpu: 0.0.40
codegen_flags: <defaults>
</compile_context>

<pallas_src>
import functools

import jax
import jax.numpy as jnp
import numpy as np
from jax import lax
from jax.experimental import pallas as pl
from jax.experimental.pallas import tpu as pltpu


def _round_up(a, b):
    return (a + b - 1) // b * b


def _convt_row_tile_kernel(xp_ref, w_ref, b_ref, o_ref, patch_ref, *,
                           kH, kW, Cp, tH, W_out):
    """One (batch, row-tile) grid step of the transposed convolution.

    xp_ref   : (1, Hp_pad, Cp, Wp)    padded (and dilated, for stride>1) input image for this
                                      batch; VMEM-resident across the batch's row tiles.
    w_ref    : (C_out, T*Cp)          spatially flipped weight, taps folded into K.
    b_ref    : (C_out, 1)             bias.
    o_ref    : (1, tH, C_out, W_out)  output row tile.
    patch_ref: (T*Cp, W_out)          VMEM scratch: per-output-row GEMM RHS.
    """
    j = pl.program_id(1)
    row0 = pl.multiple_of(j * tH, tH)

    w2 = w_ref[...]
    b = b_ref[...].astype(jnp.float32)

    for r in range(tH):                               # static unroll over the tile's rows
        oh = row0 + r
        for kh in range(kH):
            row = xp_ref[0, oh + kh]                  # (Cp, Wp): one load per (row, kh)
            for kw in range(kW):
                t = kh * kW + kw
                # Aligned full-(Cp) sublane block write (channels were padded to Cp).
                patch_ref[t * Cp:(t + 1) * Cp, :] = row[:, kw:kw + W_out]
        # One MXU matmul per output row: (C_out, T*Cp) @ (T*Cp, W_out), f32 accumulation.
        acc = jnp.dot(w2, patch_ref[...], preferred_element_type=jnp.float32)
        o_ref[0, r, :, :] = (acc + b).astype(o_ref.dtype)


def conv_transpose2d_pallas(x, weight, bias, stride=1, padding=0, output_padding=0,
                            tile_h=None):
    """Equivalent of F.conv_transpose2d(x, weight, bias, stride, padding, output_padding).

    x      : (N, C_in, H, W)            NCHW
    weight : (C_in, C_out, kH, kW)      PyTorch conv_transpose layout
    bias   : (C_out,)
    returns: (N, C_out, H_out, W_out)   NCHW
    """
    N, C_in, H, W = x.shape
    w_cin, C_out, kH, kW = weight.shape
    assert w_cin == C_in
    s, p, op = int(stride), int(padding), int(output_padding)

    H_out = (H - 1) * s - 2 * p + kH + op
    W_out = (W - 1) * s - 2 * p + kW + op
    T = kH * kW
    Cp = _round_up(C_in, 8)                   # per-tap K sub-block padded to a sublane multiple
    itemsize = jnp.dtype(x.dtype).itemsize

    # Row-tile size: multiple of 8, modest static unroll, output tile kept small in VMEM.
    if tile_h is None:
        tile_h = min(32, _round_up(H_out, 8))
        while tile_h > 8 and 2 * tile_h * C_out * W_out * itemsize > (4 << 20):
            tile_h -= 8
    tH = int(tile_h)
    H_pad = _round_up(H_out, tH)

    # ---- wrapper glue: one zero-pad (+ interior dilation for stride>1); channels -> Cp.
    # TODO(synk): for stride > 1 the interior (s-1) zero-dilation inflates HBM ~s^2; a
    #             phase-decomposed kernel would avoid materializing those zeros.
    x_hcw = jnp.transpose(x, (0, 2, 1, 3))    # (N, H, C_in, W): rows outer, width in lanes
    xp = lax.pad(
        x_hcw, jnp.array(0, x.dtype),
        (
            (0, 0, 0),
            (kH - 1 - p, kH - 1 - p + op + (H_pad - H_out), s - 1),   # H halo + round-up rows
            (0, Cp - C_in, 0),                                        # channel pad to Cp
            (kW - 1 - p, kW - 1 - p + op, s - 1),                     # W halo
        ),
    )
    Hp_pad, Wp = xp.shape[1], xp.shape[3]
    assert Hp_pad == H_pad + kH - 1 and Wp == W_out + kW - 1

    # Spatially flipped weight with taps folded into the contraction axis:
    #   w2[co, (kh*kW + kw)*Cp + ci] = weight[ci, co, kH-1-kh, kW-1-kw]
    w_flip = jnp.transpose(weight, (2, 3, 0, 1))[::-1, ::-1]          # (kH, kW, C_in, C_out)
    if Cp != C_in:
        w_flip = jnp.pad(w_flip, ((0, 0), (0, 0), (0, Cp - C_in), (0, 0)))
    w2 = jnp.transpose(w_flip, (3, 0, 1, 2)).reshape(C_out, T * Cp).astype(x.dtype)
    b2 = bias.reshape(C_out, 1).astype(jnp.float32)

    # ---- Pallas kernel ----
    grid = (N, H_pad // tH)
    kernel = functools.partial(_convt_row_tile_kernel,
                               kH=kH, kW=kW, Cp=Cp, tH=tH, W_out=W_out)
    flops = 2 * N * H_pad * W_out * C_out * T * Cp
    bytes_accessed = (xp.size * itemsize
                      + w2.size * w2.dtype.itemsize
                      + b2.size * b2.dtype.itemsize
                      + N * H_pad * C_out * W_out * itemsize)

    out_pad = pl.pallas_call(
        kernel,
        out_shape=jax.ShapeDtypeStruct((N, H_pad, C_out, W_out), x.dtype),
        grid=grid,
        in_specs=[
            # Full padded image per batch; block index constant across the row-tile axis,
            # so it is DMA'd once per batch and stays resident in VMEM.
            pl.BlockSpec((1, Hp_pad, Cp, Wp), lambda n, j: (n, 0, 0, 0)),
            pl.BlockSpec((C_out, T * Cp), lambda n, j: (0, 0)),
            pl.BlockSpec((C_out, 1), lambda n, j: (0, 0)),
        ],
        out_specs=pl.BlockSpec((1, tH, C_out, W_out), lambda n, j: (n, j, 0, 0)),
        scratch_shapes=[pltpu.VMEM((T * Cp, W_out), x.dtype)],
        compiler_params=pltpu.CompilerParams(
            dimension_semantics=("parallel", "parallel")),
        cost_estimate=pl.CostEstimate(flops=flops, transcendentals=0,
                                      bytes_accessed=bytes_accessed),
    )(xp, w2, b2)

    # Crop the rounded-up rows and return NCHW.
    return jnp.transpose(out_pad[:, :H_out], (0, 2, 1, 3))


def conv_transpose2d_ref(x, w, b, stride, padding, output_padding):
    """Brute-force numpy reference of F.conv_transpose2d (NCHW)."""
    x, w, b = np.asarray(x), np.asarray(w), np.asarray(b)
    N, C_in, H, W = x.shape
    _, C_out, kH, kW = w.shape
    s, p, op = stride, padding, output_padding
    H_out = (H - 1) * s - 2 * p + kH + op
    W_out = (W - 1) * s - 2 * p + kW + op
    Hf = (H - 1) * s + kH + op
    Wf = (W - 1) * s + kW + op
    full = np.zeros((N, C_out, Hf, Wf), np.float32)
    contrib = np.einsum('nchw,cokl->nohwkl', x, w)
    for kh in range(kH):
        for kw in range(kW):
            full[:, :, kh:kh + (H - 1) * s + 1:s, kw:kw + (W - 1) * s + 1:s] += contrib[..., kh, kw]
    return full[:, :, p:p + H_out, p:p + W_out] + b[None, :, None, None]


if __name__ == "__main__":
    # Module defaults: kernel_size=2, stride=1, padding=0, output_padding=0.
    N, C_in, H, W = 2, 4, 16, 16
    C_out, ksize, stride, padding, output_padding = 8, 2, 1, 0, 0

    key = jax.random.PRNGKey(0)
    k1, k2, k3 = jax.random.split(key, 3)
    x = jax.random.normal(k1, (N, C_in, H, W), jnp.float32)
    # dMyConv2D.__init__ zero-fills weight/bias; use deterministic random values of the
    # same shapes so the kernel is actually exercised.
    weight = jax.random.normal(k2, (C_in, C_out, ksize, ksize), jnp.float32)
    bias = jax.random.normal(k3, (C_out,), jnp.float32)

    out = conv_transpose2d_pallas(x, weight, bias, stride, padding, output_padding)
    out = jax.block_until_ready(out)

    ref = conv_transpose2d_ref(x, weight, bias, stride, padding, output_padding)
    np.testing.assert_allclose(np.asarray(out), ref, rtol=1e-4, atol=1e-4)
    print("KERNEL_OK")
</pallas_src>

<mosaic_0001>
module attributes {stable_mosaic.version = 11 : i64} {
  func.func @_convt_row_tile_kernel(%arg0: i32, %arg1: i32, %arg2: memref<1x25x8x18xf32, #tpu.memory_space<vmem>>, %arg3: memref<8x32xf32, #tpu.memory_space<vmem>>, %arg4: memref<8x1xf32, #tpu.memory_space<vmem>>, %arg5: memref<1x24x8x17xf32, #tpu.memory_space<vmem>>, %arg6: memref<32x17xf32, #tpu.memory_space<vmem>>) attributes {dimension_semantics = [#tpu.dimension_semantics<parallel>, #tpu.dimension_semantics<parallel>], iteration_bounds = array<i64: 2, 1>, scalar_prefetch = 0 : i64, scratch_operands = 1 : i64, tpu.core_type = #tpu.core_type<tc>, window_params = [{transform_indices = @transform_0, window_bounds = array<i64: 1, 25, 8, 18>}, {pipeline_mode = #tpu.pipeline_mode<synchronous>, transform_indices = @transform_1, window_bounds = array<i64: 8, 32>}, {pipeline_mode = #tpu.pipeline_mode<synchronous>, transform_indices = @transform_2, window_bounds = array<i64: 8, 1>}, {transform_indices = @transform_3, window_bounds = array<i64: 1, 24, 8, 17>}]} {
    %c24_i32 = arith.constant 24 : i32
    %0 = arith.muli %arg1, %c24_i32 : i32
    %1 = tpu.assume_multiple %0, 24 : i32
    %c0 = arith.constant 0 : index
    %c0_0 = arith.constant 0 : index
    %2 = vector.load %arg3[%c0, %c0_0] : memref<8x32xf32, #tpu.memory_space<vmem>>, vector<8x32xf32>
    %c0_1 = arith.constant 0 : index
    %c0_2 = arith.constant 0 : index
    %3 = vector.load %arg4[%c0_1, %c0_2] : memref<8x1xf32, #tpu.memory_space<vmem>>, vector<8x1xf32>
    %c0_i32 = arith.constant 0 : i32
    %4 = arith.addi %1, %c0_i32 : i32
    %c0_i32_3 = arith.constant 0 : i32
    %5 = arith.addi %4, %c0_i32_3 : i32
    %c0_4 = arith.constant 0 : index
    %6 = arith.index_cast %5 : i32 to index
    %c0_5 = arith.constant 0 : index
    %c0_6 = arith.constant 0 : index
    %7 = vector.load %arg2[%c0_4, %6, %c0_5, %c0_6] : memref<1x25x8x18xf32, #tpu.memory_space<vmem>>, vector<1x1x8x18xf32>
    %8 = vector.shape_cast %7 : vector<1x1x8x18xf32> to vector<8x18xf32>
    %9 = vector.extract_strided_slice %8 {offsets = [0, 0], sizes = [8, 17], strides = [1, 1]} : vector<8x18xf32> to vector<8x17xf32>
    %c0_7 = arith.constant 0 : index
    %c0_8 = arith.constant 0 : index
    %10 = vector.load %arg6[%c0_7, %c0_8] : memref<32x17xf32, #tpu.memory_space<vmem>>, vector<8x17xf32>
    tpu.vector_store %arg6[%c0_7, %c0_8], %9 {strides = array<i32>} : memref<32x17xf32, #tpu.memory_space<vmem>>, vector<8x17xf32>,
    %11 = vector.extract_strided_slice %8 {offsets = [0, 1], sizes = [8, 17], strides = [1, 1]} : vector<8x18xf32> to vector<8x17xf32>
    %c8 = arith.constant 8 : index
    %c0_9 = arith.constant 0 : index
    %12 = vector.load %arg6[%c8, %c0_9] : memref<32x17xf32, #tpu.memory_space<vmem>>, vector<8x17xf32>
    tpu.vector_store %arg6[%c8, %c0_9], %11 {strides = array<i32>} : memref<32x17xf32, #tpu.memory_space<vmem>>, vector<8x17xf32>,
    %c1_i32 = arith.constant 1 : i32
    %13 = arith.addi %4, %c1_i32 : i32
    %c0_10 = arith.constant 0 : index
    %14 = arith.index_cast %13 : i32 to index
    %c0_11 = arith.constant 0 : index
    %c0_12 = arith.constant 0 : index
    %15 = vector.load %arg2[%c0_10, %14, %c0_11, %c0_12] : memref<1x25x8x18xf32, #tpu.memory_space<vmem>>, vector<1x1x8x18xf32>
    %16 = vector.shape_cast %15 : vector<1x1x8x18xf32> to vector<8x18xf32>
    %17 = vector.extract_strided_slice %16 {offsets = [0, 0], sizes = [8, 17], strides = [1, 1]} : vector<8x18xf32> to vector<8x17xf32>
    %c16 = arith.constant 16 : index
    %c0_13 = arith.constant 0 : index
    %18 = vector.load %arg6[%c16, %c0_13] : memref<32x17xf32, #tpu.memory_space<vmem>>, vector<8x17xf32>
    tpu.vector_store %arg6[%c16, %c0_13], %17 {strides = array<i32>} : memref<32x17xf32, #tpu.memory_space<vmem>>, vector<8x17xf32>,
    %19 = vector.extract_strided_slice %16 {offsets = [0, 1], sizes = [8, 17], strides = [1, 1]} : vector<8x18xf32> to vector<8x17xf32>
    %c24 = arith.constant 24 : index
    %c0_14 = arith.constant 0 : index
    %20 = vector.load %arg6[%c24, %c0_14] : memref<32x17xf32, #tpu.memory_space<vmem>>, vector<8x17xf32>
    tpu.vector_store %arg6[%c24, %c0_14], %19 {strides = array<i32>} : memref<32x17xf32, #tpu.memory_space<vmem>>, vector<8x17xf32>,
    %c0_15 = arith.constant 0 : index
    %c0_16 = arith.constant 0 : index
    %21 = vector.load %arg6[%c0_15, %c0_16] : memref<32x17xf32, #tpu.memory_space<vmem>>, vector<32x17xf32>
    %cst = arith.constant dense<0.000000e+00> : vector<8x17xf32>
    %22 = tpu.matmul %2, %21, %cst {dimension_numbers = #tpu.dot_dimension_numbers<[1], [0], [0], [1], [0, 0, 1, 1], [], []>} : vector<8x32xf32>, vector<32x17xf32>, vector<8x17xf32> -> vector<8x17xf32>
    %23 = vector.broadcast %3 : vector<8x1xf32> to vector<8x17xf32>
    %24 = arith.addf %22, %23 : vector<8x17xf32>
    %c0_17 = arith.constant 0 : index
    %c0_18 = arith.constant 0 : index
    %c0_19 = arith.constant 0 : index
    %c0_20 = arith.constant 0 : index
    %25 = vector.load %arg5[%c0_17, %c0_18, %c0_19, %c0_20] : memref<1x24x8x17xf32, #tpu.memory_space<vmem>>, vector<1x1x8x17xf32>
    %26 = vector.shape_cast %25 : vector<1x1x8x17xf32> to vector<8x17xf32>
    %27 = vector.shape_cast %24 : vector<8x17xf32> to vector<1x1x8x17xf32>
    tpu.vector_store %arg5[%c0_17, %c0_18, %c0_19, %c0_20], %27 {strides = array<i32>} : memref<1x24x8x17xf32, #tpu.memory_space<vmem>>, vector<1x1x8x17xf32>,
    %c1_i32_21 = arith.constant 1 : i32
    %28 = arith.addi %1, %c1_i32_21 : i32
    %c0_i32_22 = arith.constant 0 : i32
    %29 = arith.addi %28, %c0_i32_22 : i32
    %c0_23 = arith.constant 0 : index
    %30 = arith.index_cast %29 : i32 to index
    %c0_24 = arith.constant 0 : index
    %c0_25 = arith.constant 0 : index
    %31 = vector.load %arg2[%c0_23, %30, %c0_24, %c0_25] : memref<1x25x8x18xf32, #tpu.memory_space<vmem>>, vector<1x1x8x18xf32>
    %32 = vector.shape_cast %31 : vector<1x1x8x18xf32> to vector<8x18xf32>
    %33 = vector.extract_strided_slice %32 {offsets = [0, 0], sizes = [8, 17], strides = [1, 1]} : vector<8x18xf32> to vector<8x17xf32>
    %c0_26 = arith.constant 0 : index
    %c0_27 = arith.constant 0 : index
    %34 = vector.load %arg6[%c0_26, %c0_27] : memref<32x17xf32, #tpu.memory_space<vmem>>, vector<8x17xf32>
    tpu.vector_store %arg6[%c0_26, %c0_27], %33 {strides = array<i32>} : memref<32x17xf32, #tpu.memory_space<vmem>>, vector<8x17xf32>,
    %35 = vector.extract_strided_slice %32 {offsets = [0, 1], sizes = [8, 17], strides = [1, 1]} : vector<8x18xf32> to vector<8x17xf32>
    %c8_28 = arith.constant 8 : index
    %c0_29 = arith.constant 0 : index
    %36 = vector.load %arg6[%c8_28, %c0_29] : memref<32x17xf32, #tpu.memory_space<vmem>>, vector<8x17xf32>
    tpu.vector_store %arg6[%c8_28, %c0_29], %35 {strides = array<i32>} : memref<32x17xf32, #tpu.memory_space<vmem>>, vector<8x17xf32>,
    %c1_i32_30 = arith.constant 1 : i32
    %37 = arith.addi %28, %c1_i32_30 : i32
    %c0_31 = arith.constant 0 : index
    %38 = arith.index_cast %37 : i32 to index
    %c0_32 = arith.constant 0 : index
    %c0_33 = arith.constant 0 : index
    %39 = vector.load %arg2[%c0_31, %38, %c0_32, %c0_33] : memref<1x25x8x18xf32, #tpu.memory_space<vmem>>, vector<1x1x8x18xf32>
    %40 = vector.shape_cast %39 : vector<1x1x8x18xf32> to vector<8x18xf32>
    %41 = vector.extract_strided_slice %40 {offsets = [0, 0], sizes = [8, 17], strides = [1, 1]} : vector<8x18xf32> to vector<8x17xf32>
    %c16_34 = arith.constant 16 : index
    %c0_35 = arith.constant 0 : index
    %42 = vector.load %arg6[%c16_34, %c0_35] : memref<32x17xf32, #tpu.memory_space<vmem>>, vector<8x17xf32>
    tpu.vector_store %arg6[%c16_34, %c0_35], %41 {strides = array<i32>} : memref<32x17xf32, #tpu.memory_space<vmem>>, vector<8x17xf32>,
    %43 = vector.extract_strided_slice %40 {offsets = [0, 1], sizes = [8, 17], strides = [1, 1]} : vector<8x18xf32> to vector<8x17xf32>
    %c24_36 = arith.constant 24 : index
    %c0_37 = arith.constant 0 : index
    %44 = vector.load %arg6[%c24_36, %c0_37] : memref<32x17xf32, #tpu.memory_space<vmem>>, vector<8x17xf32>
    tpu.vector_store %arg6[%c24_36, %c0_37], %43 {strides = array<i32>} : memref<32x17xf32, #tpu.memory_space<vmem>>, vector<8x17xf32>,
    %c0_38 = arith.constant 0 : index
    %c0_39 = arith.constant 0 : index
    %45 = vector.load %arg6[%c0_38, %c0_39] : memref<32x17xf32, #tpu.memory_space<vmem>>, vector<32x17xf32>
    %cst_40 = arith.constant dense<0.000000e+00> : vector<8x17xf32>
    %46 = tpu.matmul %2, %45, %cst_40 {dimension_numbers = #tpu.dot_dimension_numbers<[1], [0], [0], [1], [0, 0, 1, 1], [], []>} : vector<8x32xf32>, vector<32x17xf32>, vector<8x17xf32> -> vector<8x17xf32>
    %47 = vector.broadcast %3 : vector<8x1xf32> to vector<8x17xf32>
    %48 = arith.addf %46, %47 : vector<8x17xf32>
    %c0_41 = arith.constant 0 : index
    %c1 = arith.constant 1 : index
    %c0_42 = arith.constant 0 : index
    %c0_43 = arith.constant 0 : index
    %49 = vector.load %arg5[%c0_41, %c1, %c0_42, %c0_43] : memref<1x24x8x17xf32, #tpu.memory_space<vmem>>, vector<1x1x8x17xf32>
    %50 = vector.shape_cast %49 : vector<1x1x8x17xf32> to vector<8x17xf32>
    %51 = vector.shape_cast %48 : vector<8x17xf32> to vector<1x1x8x17xf32>
    tpu.vector_store %arg5[%c0_41, %c1, %c0_42, %c0_43], %51 {strides = array<i32>} : memref<1x24x8x17xf32, #tpu.memory_space<vmem>>, vector<1x1x8x17xf32>,
    %c2_i32 = arith.constant 2 : i32
    %52 = arith.addi %1, %c2_i32 : i32
    %c0_i32_44 = arith.constant 0 : i32
    %53 = arith.addi %52, %c0_i32_44 : i32
    %c0_45 = arith.constant 0 : index
    %54 = arith.index_cast %53 : i32 to index
    %c0_46 = arith.constant 0 : index
    %c0_47 = arith.constant 0 : index
    %55 = vector.load %arg2[%c0_45, %54, %c0_46, %c0_47] : memref<1x25x8x18xf32, #tpu.memory_space<vmem>>, vector<1x1x8x18xf32>
    %56 = vector.shape_cast %55 : vector<1x1x8x18xf32> to vector<8x18xf32>
    %57 = vector.extract_strided_slice %56 {offsets = [0, 0], sizes = [8, 17], strides = [1, 1]} : vector<8x18xf32> to vector<8x17xf32>
    %c0_48 = arith.constant 0 : index
    %c0_49 = arith.constant 0 : index
    %58 = vector.load %arg6[%c0_48, %c0_49] : memref<32x17xf32, #tpu.memory_space<vmem>>, vector<8x17xf32>
    tpu.vector_store %arg6[%c0_48, %c0_49], %57 {strides = array<i32>} : memref<32x17xf32, #tpu.memory_space<vmem>>, vector<8x17xf32>,
    %59 = vector.extract_strided_slice %56 {offsets = [0, 1], sizes = [8, 17], strides = [1, 1]} : vector<8x18xf32> to vector<8x17xf32>
    %c8_50 = arith.constant 8 : index
    %c0_51 = arith.constant 0 : index
    %60 = vector.load %arg6[%c8_50, %c0_51] : memref<32x17xf32, #tpu.memory_space<vmem>>, vector<8x17xf32>
    tpu.vector_store %arg6[%c8_50, %c0_51], %59 {strides = array<i32>} : memref<32x17xf32, #tpu.memory_space<vmem>>, vector<8x17xf32>,
    %c1_i32_52 = arith.constant 1 : i32
    %61 = arith.addi %52, %c1_i32_52 : i32
    %c0_53 = arith.constant 0 : index
    %62 = arith.index_cast %61 : i32 to index
    %c0_54 = arith.constant 0 : index
    %c0_55 = arith.constant 0 : index
    %63 = vector.load %arg2[%c0_53, %62, %c0_54, %c0_55] : memref<1x25x8x18xf32, #tpu.memory_space<vmem>>, vector<1x1x8x18xf32>
    %64 = vector.shape_cast %63 : vector<1x1x8x18xf32> to vector<8x18xf32>
    %65 = vector.extract_strided_slice %64 {offsets = [0, 0], sizes = [8, 17], strides = [1, 1]} : vector<8x18xf32> to vector<8x17xf32>
    %c16_56 = arith.constant 16 : index
    %c0_57 = arith.constant 0 : index
    %66 = vector.load %arg6[%c16_56, %c0_57] : memref<32x17xf32, #tpu.memory_space<vmem>>, vector<8x17xf32>
    tpu.vector_store %arg6[%c16_56, %c0_57], %65 {strides = array<i32>} : memref<32x17xf32, #tpu.memory_space<vmem>>, vector<8x17xf32>,
    %67 = vector.extract_strided_slice %64 {offsets = [0, 1], sizes = [8, 17], strides = [1, 1]} : vector<8x18xf32> to vector<8x17xf32>
    %c24_58 = arith.constant 24 : index
    %c0_59 = arith.constant 0 : index
    %68 = vector.load %arg6[%c24_58, %c0_59] : memref<32x17xf32, #tpu.memory_space<vmem>>, vector<8x17xf32>
    tpu.vector_store %arg6[%c24_58, %c0_59], %67 {strides = array<i32>} : memref<32x17xf32, #tpu.memory_space<vmem>>, vector<8x17xf32>,
    %c0_60 = arith.constant 0 : index
    %c0_61 = arith.constant 0 : index
    %69 = vector.load %arg6[%c0_60, %c0_61] : memref<32x17xf32, #tpu.memory_space<vmem>>, vector<32x17xf32>
    %cst_62 = arith.constant dense<0.000000e+00> : vector<8x17xf32>
    %70 = tpu.matmul %2, %69, %cst_62 {dimension_numbers = #tpu.dot_dimension_numbers<[1], [0], [0], [1], [0, 0, 1, 1], [], []>} : vector<8x32xf32>, vector<32x17xf32>, vector<8x17xf32> -> vector<8x17xf32>
    %71 = vector.broadcast %3 : vector<8x1xf32> to vector<8x17xf32>
    %72 = arith.addf %70, %71 : vector<8x17xf32>
    %c0_63 = arith.constant 0 : index
    %c2 = arith.constant 2 : index
    %c0_64 = arith.constant 0 : index
    %c0_65 = arith.constant 0 : index
    %73 = vector.load %arg5[%c0_63, %c2, %c0_64, %c0_65] : memref<1x24x8x17xf32, #tpu.memory_space<vmem>>, vector<1x1x8x17xf32>
    %74 = vector.shape_cast %73 : vector<1x1x8x17xf32> to vector<8x17xf32>
    %75 = vector.shape_cast %72 : vector<8x17xf32> to vector<1x1x8x17xf32>
    tpu.vector_store %arg5[%c0_63, %c2, %c0_64, %c0_65], %75 {strides = array<i32>} : memref<1x24x8x17xf32, #tpu.memory_space<vmem>>, vector<1x1x8x17xf32>,
    %c3_i32 = arith.constant 3 : i32
    %76 = arith.addi %1, %c3_i32 : i32
    %c0_i32_66 = arith.constant 0 : i32
    %77 = arith.addi %76, %c0_i32_66 : i32
    %c0_67 = arith.constant 0 : index
    %78 = arith.index_cast %77 : i32 to index
    %c0_68 = arith.constant 0 : index
    %c0_69 = arith.constant 0 : index
    %79 = vector.load %arg2[%c0_67, %78, %c0_68, %c0_69] : memref<1x25x8x18xf32, #tpu.memory_space<vmem>>, vector<1x1x8x18xf32>
    %80 = vector.shape_cast %79 : vector<1x1x8x18xf32> to vector<8x18xf32>
    %81 = vector.extract_strided_slice %80 {offsets = [0, 0], sizes = [8, 17], strides = [1, 1]} : vector<8x18xf32> to vector<8x17xf32>
    %c0_70 = arith.constant 0 : index
    %c0_71 = arith.constant 0 : index
    %82 = vector.load %arg6[%c0_70, %c0_71] : memref<32x17xf32, #tpu.memory_space<vmem>>, vector<8x17xf32>
    tpu.vector_store %arg6[%c0_70, %c0_71], %81 {strides = array<i32>} : memref<32x17xf32, #tpu.memory_space<vmem>>, vector<8x17xf32>,
    %83 = vector.extract_strided_slice %80 {offsets = [0, 1], sizes = [8, 17], strides = [1, 1]} : vector<8x18xf32> to vector<8x17xf32>
    %c8_72 = arith.constant 8 : index
    %c0_73 = arith.constant 0 : index
    %84 = vector.load %arg6[%c8_72, %c0_73] : memref<32x17xf32, #tpu.memory_space<vmem>>, vector<8x17xf32>
    tpu.vector_store %arg6[%c8_72, %c0_73], %83 {strides = array<i32>} : memref<32x17xf32, #tpu.memory_space<vmem>>, vector<8x17xf32>,
    %c1_i32_74 = arith.constant 1 : i32
    %85 = arith.addi %76, %c1_i32_74 : i32
    %c0_75 = arith.constant 0 : index
    %86 = arith.index_cast %85 : i32 to index
    %c0_76 = arith.constant 0 : index
    %c0_77 = arith.constant 0 : index
    %87 = vector.load %arg2[%c0_75, %86, %c0_76, %c0_77] : memref<1x25x8x18xf32, #tpu.memory_space<vmem>>, vector<1x1x8x18xf32>
    %88 = vector.shape_cast %87 : vector<1x1x8x18xf32> to vector<8x18xf32>
    %89 = vector.extract_strided_slice %88 {offsets = [0, 0], sizes = [8, 17], strides = [1, 1]} : vector<8x18xf32> to vector<8x17xf32>
    %c16_78 = arith.constant 16 : index
    %c0_79 = arith.constant 0 : index
    %90 = vector.load %arg6[%c16_78, %c0_79] : memref<32x17xf32, #tpu.memory_space<vmem>>, vector<8x17xf32>
    tpu.vector_store %arg6[%c16_78, %c0_79], %89 {strides = array<i32>} : memref<32x17xf32, #tpu.memory_space<vmem>>, vector<8x17xf32>,
    %91 = vector.extract_strided_slice %88 {offsets = [0, 1], sizes = [8, 17], strides = [1, 1]} : vector<8x18xf32> to vector<8x17xf32>
    %c24_80 = arith.constant 24 : index
    %c0_81 = arith.constant 0 : index
    %92 = vector.load %arg6[%c24_80, %c0_81] : memref<32x17xf32, #tpu.memory_space<vmem>>, vector<8x17xf32>
    tpu.vector_store %arg6[%c24_80, %c0_81], %91 {strides = array<i32>} : memref<32x17xf32, #tpu.memory_space<vmem>>, vector<8x17xf32>,
    %c0_82 = arith.constant 0 : index
    %c0_83 = arith.constant 0 : index
    %93 = vector.load %arg6[%c0_82, %c0_83] : memref<32x17xf32, #tpu.memory_space<vmem>>, vector<32x17xf32>
    %cst_84 = arith.constant dense<0.000000e+00> : vector<8x17xf32>
    %94 = tpu.matmul %2, %93, %cst_84 {dimension_numbers = #tpu.dot_dimension_numbers<[1], [0], [0], [1], [0, 0, 1, 1], [], []>} : vector<8x32xf32>, vector<32x17xf32>, vector<8x17xf32> -> vector<8x17xf32>
    %95 = vector.broadcast %3 : vector<8x1xf32> to vector<8x17xf32>
    %96 = arith.addf %94, %95 : vector<8x17xf32>
    %c0_85 = arith.constant 0 : index
    %c3 = arith.constant 3 : index
    %c0_86 = arith.constant 0 : index
    %c0_87 = arith.constant 0 : index
    %97 = vector.load %arg5[%c0_85, %c3, %c0_86, %c0_87] : memref<1x24x8x17xf32, #tpu.memory_space<vmem>>, vector<1x1x8x17xf32>
    %98 = vector.shape_cast %97 : vector<1x1x8x17xf32> to vector<8x17xf32>
    %99 = vector.shape_cast %96 : vector<8x17xf32> to vector<1x1x8x17xf32>
    tpu.vector_store %arg5[%c0_85, %c3, %c0_86, %c0_87], %99 {strides = array<i32>} : memref<1x24x8x17xf32, #tpu.memory_space<vmem>>, vector<1x1x8x17xf32>,
    %c4_i32 = arith.constant 4 : i32
    %100 = arith.addi %1, %c4_i32 : i32
    %c0_i32_88 = arith.constant 0 : i32
    %101 = arith.addi %100, %c0_i32_88 : i32
    %c0_89 = arith.constant 0 : index
    %102 = arith.index_cast %101 : i32 to index
    %c0_90 = arith.constant 0 : index
    %c0_91 = arith.constant 0 : index
    %103 = vector.load %arg2[%c0_89, %102, %c0_90, %c0_91] : memref<1x25x8x18xf32, #tpu.memory_space<vmem>>, vector<1x1x8x18xf32>
    %104 = vector.shape_cast %103 : vector<1x1x8x18xf32> to vector<8x18xf32>
    %105 = vector.extract_strided_slice %104 {offsets = [0, 0], sizes = [8, 17], strides = [1, 1]} : vector<8x18xf32> to vector<8x17xf32>
    %c0_92 = arith.constant 0 : index
    %c0_93 = arith.constant 0 : index
    %106 = vector.load %arg6[%c0_92, %c0_93] : memref<32x17xf32, #tpu.memory_space<vmem>>, vector<8x17xf32>
    tpu.vector_store %arg6[%c0_92, %c0_93], %105 {strides = array<i32>} : memref<32x17xf32, #tpu.memory_space<vmem>>, vector<8x17xf32>,
    %107 = vector.extract_strided_slice %104 {offsets = [0, 1], sizes = [8, 17], strides = [1, 1]} : vector<8x18xf32> to vector<8x17xf32>
    %c8_94 = arith.constant 8 : index
    %c0_95 = arith.constant 0 : index
    %108 = vector.load %arg6[%c8_94, %c0_95] : memref<32x17xf32, #tpu.memory_space<vmem>>, vector<8x17xf32>
    tpu.vector_store %arg6[%c8_94, %c0_95], %107 {strides = array<i32>} : memref<32x17xf32, #tpu.memory_space<vmem>>, vector<8x17xf32>,
    %c1_i32_96 = arith.constant 1 : i32
    %109 = arith.addi %100, %c1_i32_96 : i32
    %c0_97 = arith.constant 0 : index
    %110 = arith.index_cast %109 : i32 to index
    %c0_98 = arith.constant 0 : index
    %c0_99 = arith.constant 0 : index
    %111 = vector.load %arg2[%c0_97, %110, %c0_98, %c0_99] : memref<1x25x8x18xf32, #tpu.memory_space<vmem>>, vector<1x1x8x18xf32>
    %112 = vector.shape_cast %111 : vector<1x1x8x18xf32> to vector<8x18xf32>
    %113 = vector.extract_strided_slice %112 {offsets = [0, 0], sizes = [8, 17], strides = [1, 1]} : vector<8x18xf32> to vector<8x17xf32>
    %c16_100 = arith.constant 16 : index
    %c0_101 = arith.constant 0 : index
    %114 = vector.load %arg6[%c16_100, %c0_101] : memref<32x17xf32, #tpu.memory_space<vmem>>, vector<8x17xf32>
    tpu.vector_store %arg6[%c16_100, %c0_101], %113 {strides = array<i32>} : memref<32x17xf32, #tpu.memory_space<vmem>>, vector<8x17xf32>,
    %115 = vector.extract_strided_slice %112 {offsets = [0, 1], sizes = [8, 17], strides = [1, 1]} : vector<8x18xf32> to vector<8x17xf32>
    %c24_102 = arith.constant 24 : index
    %c0_103 = arith.constant 0 : index
    %116 = vector.load %arg6[%c24_102, %c0_103] : memref<32x17xf32, #tpu.memory_space<vmem>>, vector<8x17xf32>
    tpu.vector_store %arg6[%c24_102, %c0_103], %115 {strides = array<i32>} : memref<32x17xf32, #tpu.memory_space<vmem>>, vector<8x17xf32>,
    %c0_104 = arith.constant 0 : index
    %c0_105 = arith.constant 0 : index
    %117 = vector.load %arg6[%c0_104, %c0_105] : memref<32x17xf32, #tpu.memory_space<vmem>>, vector<32x17xf32>
    %cst_106 = arith.constant dense<0.000000e+00> : vector<8x17xf32>
    %118 = tpu.matmul %2, %117, %cst_106 {dimension_numbers = #tpu.dot_dimension_numbers<[1], [0], [0], [1], [0, 0, 1, 1], [], []>} : vector<8x32xf32>, vector<32x17xf32>, vector<8x17xf32> -> vector<8x17xf32>
    %119 = vector.broadcast %3 : vector<8x1xf32> to vector<8x17xf32>
    %120 = arith.addf %118, %119 : vector<8x17xf32>
    %c0_107 = arith.constant 0 : index
    %c4 = arith.constant 4 : index
    %c0_108 = arith.constant 0 : index
    %c0_109 = arith.constant 0 : index
    %121 = vector.load %arg5[%c0_107, %c4, %c0_108, %c0_109] : memref<1x24x8x17xf32, #tpu.memory_space<vmem>>, vector<1x1x8x17xf32>
    %122 = vector.shape_cast %121 : vector<1x1x8x17xf32> to vector<8x17xf32>
    %123 = vector.shape_cast %120 : vector<8x17xf32> to vector<1x1x8x17xf32>
    tpu.vector_store %arg5[%c0_107, %c4, %c0_108, %c0_109], %123 {strides = array<i32>} : memref<1x24x8x17xf32, #tpu.memory_space<vmem>>, vector<1x1x8x17xf32>,
    %c5_i32 = arith.constant 5 : i32
    %124 = arith.addi %1, %c5_i32 : i32
    %c0_i32_110 = arith.constant 0 : i32
    %125 = arith.addi %124, %c0_i32_110 : i32
    %c0_111 = arith.constant 0 : index
    %126 = arith.index_cast %125 : i32 to index
    %c0_112 = arith.constant 0 : index
    %c0_113 = arith.constant 0 : index
    %127 = vector.load %arg2[%c0_111, %126, %c0_112, %c0_113] : memref<1x25x8x18xf32, #tpu.memory_space<vmem>>, vector<1x1x8x18xf32>
    %128 = vector.shape_cast %127 : vector<1x1x8x18xf32> to vector<8x18xf32>
    %129 = vector.extract_strided_slice %128 {offsets = [0, 0], sizes = [8, 17], strides = [1, 1]} : vector<8x18xf32> to vector<8x17xf32>
    %c0_114 = arith.constant 0 : index
    %c0_115 = arith.constant 0 : index
    %130 = vector.load %arg6[%c0_114, %c0_115] : memref<32x17xf32, #tpu.memory_space<vmem>>, vector<8x17xf32>
    tpu.vector_store %arg6[%c0_114, %c0_115], %129 {strides = array<i32>} : memref<32x17xf32, #tpu.memory_space<vmem>>, vector<8x17xf32>,
    %131 = vector.extract_strided_slice %128 {offsets = [0, 1], sizes = [8, 17], strides = [1, 1]} : vector<8x18xf32> to vector<8x17xf32>
    %c8_116 = arith.constant 8 : index
    %c0_117 = arith.constant 0 : index
    %132 = vector.load %arg6[%c8_116, %c0_117] : memref<32x17xf32, #tpu.memory_space<vmem>>, vector<8x17xf32>
    tpu.vector_store %arg6[%c8_116, %c0_117], %131 {strides = array<i32>} : memref<32x17xf32, #tpu.memory_space<vmem>>, vector<8x17xf32>,
    %c1_i32_118 = arith.constant 1 : i32
    %133 = arith.addi %124, %c1_i32_118 : i32
    %c0_119 = arith.constant 0 : index
    %134 = arith.index_cast %133 : i32 to index
    %c0_120 = arith.constant 0 : index
    %c0_121 = arith.constant 0 : index
    %135 = vector.load %arg2[%c0_119, %134, %c0_120, %c0_121] : memref<1x25x8x18xf32, #tpu.memory_space<vmem>>, vector<1x1x8x18xf32>
    %136 = vector.shape_cast %135 : vector<1x1x8x18xf32> to vector<8x18xf32>
    %137 = vector.extract_strided_slice %136 {offsets = [0, 0], sizes = [8, 17], strides = [1, 1]} : vector<8x18xf32> to vector<8x17xf32>
    %c16_122 = arith.constant 16 : index
    %c0_123 = arith.constant 0 : index
    %138 = vector.load %arg6[%c16_122, %c0_123] : memref<32x17xf32, #tpu.memory_space<vmem>>, vector<8x17xf32>
    tpu.vector_store %arg6[%c16_122, %c0_123], %137 {strides = array<i32>} : memref<32x17xf32, #tpu.memory_space<vmem>>, vector<8x17xf32>,
    %139 = vector.extract_strided_slice %136 {offsets = [0, 1], sizes = [8, 17], strides = [1, 1]} : vector<8x18xf32> to vector<8x17xf32>
    %c24_124 = arith.constant 24 : index
    %c0_125 = arith.constant 0 : index
    %140 = vector.load %arg6[%c24_124, %c0_125] : memref<32x17xf32, #tpu.memory_space<vmem>>, vector<8x17xf32>
    tpu.vector_store %arg6[%c24_124, %c0_125], %139 {strides = array<i32>} : memref<32x17xf32, #tpu.memory_space<vmem>>, vector<8x17xf32>,
    %c0_126 = arith.constant 0 : index
    %c0_127 = arith.constant 0 : index
    %141 = vector.load %arg6[%c0_126, %c0_127] : memref<32x17xf32, #tpu.memory_space<vmem>>, vector<32x17xf32>
    %cst_128 = arith.constant dense<0.000000e+00> : vector<8x17xf32>
    %142 = tpu.matmul %2, %141, %cst_128 {dimension_numbers = #tpu.dot_dimension_numbers<[1], [0], [0], [1], [0, 0, 1, 1], [], []>} : vector<8x32xf32>, vector<32x17xf32>, vector<8x17xf32> -> vector<8x17xf32>
    %143 = vector.broadcast %3 : vector<8x1xf32> to vector<8x17xf32>
    %144 = arith.addf %142, %143 : vector<8x17xf32>
    %c0_129 = arith.constant 0 : index
    %c5 = arith.constant 5 : index
    %c0_130 = arith.constant 0 : index
    %c0_131 = arith.constant 0 : index
    %145 = vector.load %arg5[%c0_129, %c5, %c0_130, %c0_131] : memref<1x24x8x17xf32, #tpu.memory_space<vmem>>, vector<1x1x8x17xf32>
    %146 = vector.shape_cast %145 : vector<1x1x8x17xf32> to vector<8x17xf32>
    %147 = vector.shape_cast %144 : vector<8x17xf32> to vector<1x1x8x17xf32>
    tpu.vector_store %arg5[%c0_129, %c5, %c0_130, %c0_131], %147 {strides = array<i32>} : memref<1x24x8x17xf32, #tpu.memory_space<vmem>>, vector<1x1x8x17xf32>,
    %c6_i32 = arith.constant 6 : i32
    %148 = arith.addi %1, %c6_i32 : i32
    %c0_i32_132 = arith.constant 0 : i32
    %149 = arith.addi %148, %c0_i32_132 : i32
    %c0_133 = arith.constant 0 : index
    %150 = arith.index_cast %149 : i32 to index
    %c0_134 = arith.constant 0 : index
    %c0_135 = arith.constant 0 : index
    %151 = vector.load %arg2[%c0_133, %150, %c0_134, %c0_135] : memref<1x25x8x18xf32, #tpu.memory_space<vmem>>, vector<1x1x8x18xf32>
    %152 = vector.shape_cast %151 : vector<1x1x8x18xf32> to vector<8x18xf32>
    %153 = vector.extract_strided_slice %152 {offsets = [0, 0], sizes = [8, 17], strides = [1, 1]} : vector<8x18xf32> to vector<8x17xf32>
    %c0_136 = arith.constant 0 : index
    %c0_137 = arith.constant 0 : index
    %154 = vector.load %arg6[%c0_136, %c0_137] : memref<32x17xf32, #tpu.memory_space<vmem>>, vector<8x17xf32>
    tpu.vector_store %arg6[%c0_136, %c0_137], %153 {strides = array<i32>} : memref<32x17xf32, #tpu.memory_space<vmem>>, vector<8x17xf32>,
    %155 = vector.extract_strided_slice %152 {offsets = [0, 1], sizes = [8, 17], strides = [1, 1]} : vector<8x18xf32> to vector<8x17xf32>
    %c8_138 = arith.constant 8 : index
    %c0_139 = arith.constant 0 : index
    %156 = vector.load %arg6[%c8_138, %c0_139] : memref<32x17xf32, #tpu.memory_space<vmem>>, vector<8x17xf32>
    tpu.vector_store %arg6[%c8_138, %c0_139], %155 {strides = array<i32>} : memref<32x17xf32, #tpu.memory_space<vmem>>, vector<8x17xf32>,
    %c1_i32_140 = arith.constant 1 : i32
    %157 = arith.addi %148, %c1_i32_140 : i32
    %c0_141 = arith.constant 0 : index
    %158 = arith.index_cast %157 : i32 to index
    %c0_142 = arith.constant 0 : index
    %c0_143 = arith.constant 0 : index
    %159 = vector.load %arg2[%c0_141, %158, %c0_142, %c0_143] : memref<1x25x8x18xf32, #tpu.memory_space<vmem>>, vector<1x1x8x18xf32>
    %160 = vector.shape_cast %159 : vector<1x1x8x18xf32> to vector<8x18xf32>
    %161 = vector.extract_strided_slice %160 {offsets = [0, 0], sizes = [8, 17], strides = [1, 1]} : vector<8x18xf32> to vector<8x17xf32>
    %c16_144 = arith.constant 16 : index
    %c0_145 = arith.constant 0 : index
    %162 = vector.load %arg6[%c16_144, %c0_145] : memref<32x17xf32, #tpu.memory_space<vmem>>, vector<8x17xf32>
    tpu.vector_store %arg6[%c16_144, %c0_145], %161 {strides = array<i32>} : memref<32x17xf32, #tpu.memory_space<vmem>>, vector<8x17xf32>,
    %163 = vector.extract_strided_slice %160 {offsets = [0, 1], sizes = [8, 17], strides = [1, 1]} : vector<8x18xf32> to vector<8x17xf32>
    %c24_146 = arith.constant 24 : index
    %c0_147 = arith.constant 0 : index
    %164 = vector.load %arg6[%c24_146, %c0_147] : memref<32x17xf32, #tpu.memory_space<vmem>>, vector<8x17xf32>
    tpu.vector_store %arg6[%c24_146, %c0_147], %163 {strides = array<i32>} : memref<32x17xf32, #tpu.memory_space<vmem>>, vector<8x17xf32>,
    %c0_148 = arith.constant 0 : index
    %c0_149 = arith.constant 0 : index
    %165 = vector.load %arg6[%c0_148, %c0_149] : memref<32x17xf32, #tpu.memory_space<vmem>>, vector<32x17xf32>
    %cst_150 = arith.constant dense<0.000000e+00> : vector<8x17xf32>
    %166 = tpu.matmul %2, %165, %cst_150 {dimension_numbers = #tpu.dot_dimension_numbers<[1], [0], [0], [1], [0, 0, 1, 1], [], []>} : vector<8x32xf32>, vector<32x17xf32>, vector<8x17xf32> -> vector<8x17xf32>
    %167 = vector.broadcast %3 : vector<8x1xf32> to vector<8x17xf32>
    %168 = arith.addf %166, %167 : vector<8x17xf32>
    %c0_151 = arith.constant 0 : index
    %c6 = arith.constant 6 : index
    %c0_152 = arith.constant 0 : index
    %c0_153 = arith.constant 0 : index
    %169 = vector.load %arg5[%c0_151, %c6, %c0_152, %c0_153] : memref<1x24x8x17xf32, #tpu.memory_space<vmem>>, vector<1x1x8x17xf32>
    %170 = vector.shape_cast %169 : vector<1x1x8x17xf32> to vector<8x17xf32>
    %171 = vector.shape_cast %168 : vector<8x17xf32> to vector<1x1x8x17xf32>
    tpu.vector_store %arg5[%c0_151, %c6, %c0_152, %c0_153], %171 {strides = array<i32>} : memref<1x24x8x17xf32, #tpu.memory_space<vmem>>, vector<1x1x8x17xf32>,
    %c7_i32 = arith.constant 7 : i32
    %172 = arith.addi %1, %c7_i32 : i32
    %c0_i32_154 = arith.constant 0 : i32
    %173 = arith.addi %172, %c0_i32_154 : i32
    %c0_155 = arith.constant 0 : index
    %174 = arith.index_cast %173 : i32 to index
    %c0_156 = arith.constant 0 : index
    %c0_157 = arith.constant 0 : index
    %175 = vector.load %arg2[%c0_155, %174, %c0_156, %c0_157] : memref<1x25x8x18xf32, #tpu.memory_space<vmem>>, vector<1x1x8x18xf32>
    %176 = vector.shape_cast %175 : vector<1x1x8x18xf32> to vector<8x18xf32>
    %177 = vector.extract_strided_slice %176 {offsets = [0, 0], sizes = [8, 17], strides = [1, 1]} : vector<8x18xf32> to vector<8x17xf32>
    %c0_158 = arith.constant 0 : index
    %c0_159 = arith.constant 0 : index
    %178 = vector.load %arg6[%c0_158, %c0_159] : memref<32x17xf32, #tpu.memory_space<vmem>>, vector<8x17xf32>
    tpu.vector_store %arg6[%c0_158, %c0_159], %177 {strides = array<i32>} : memref<32x17xf32, #tpu.memory_space<vmem>>, vector<8x17xf32>,
    %179 = vector.extract_strided_slice %176 {offsets = [0, 1], sizes = [8, 17], strides = [1, 1]} : vector<8x18xf32> to vector<8x17xf32>
    %c8_160 = arith.constant 8 : index
    %c0_161 = arith.constant 0 : index
    %180 = vector.load %arg6[%c8_160, %c0_161] : memref<32x17xf32, #tpu.memory_space<vmem>>, vector<8x17xf32>
    tpu.vector_store %arg6[%c8_160, %c0_161], %179 {strides = array<i32>} : memref<32x17xf32, #tpu.memory_space<vmem>>, vector<8x17xf32>,
    %c1_i32_162 = arith.constant 1 : i32
    %181 = arith.addi %172, %c1_i32_162 : i32
    %c0_163 = arith.constant 0 : index
    %182 = arith.index_cast %181 : i32 to index
    %c0_164 = arith.constant 0 : index
    %c0_165 = arith.constant 0 : index
    %183 = vector.load %arg2[%c0_163, %182, %c0_164, %c0_165] : memref<1x25x8x18xf32, #tpu.memory_space<vmem>>, vector<1x1x8x18xf32>
    %184 = vector.shape_cast %183 : vector<1x1x8x18xf32> to vector<8x18xf32>
    %185 = vector.extract_strided_slice %184 {offsets = [0, 0], sizes = [8, 17], strides = [1, 1]} : vector<8x18xf32> to vector<8x17xf32>
    %c16_166 = arith.constant 16 : index
    %c0_167 = arith.constant 0 : index
    %186 = vector.load %arg6[%c16_166, %c0_167] : memref<32x17xf32, #tpu.memory_space<vmem>>, vector<8x17xf32>
    tpu.vector_store %arg6[%c16_166, %c0_167], %185 {strides = array<i32>} : memref<32x17xf32, #tpu.memory_space<vmem>>, vector<8x17xf32>,
    %187 = vector.extract_strided_slice %184 {offsets = [0, 1], sizes = [8, 17], strides = [1, 1]} : vector<8x18xf32> to vector<8x17xf32>
    %c24_168 = arith.constant 24 : index
    %c0_169 = arith.constant 0 : index
    %188 = vector.load %arg6[%c24_168, %c0_169] : memref<32x17xf32, #tpu.memory_space<vmem>>, vector<8x17xf32>
    tpu.vector_store %arg6[%c24_168, %c0_169], %187 {strides = array<i32>} : memref<32x17xf32, #tpu.memory_space<vmem>>, vector<8x17xf32>,
    %c0_170 = arith.constant 0 : index
    %c0_171 = arith.constant 0 : index
    %189 = vector.load %arg6[%c0_170, %c0_171] : memref<32x17xf32, #tpu.memory_space<vmem>>, vector<32x17xf32>
    %cst_172 = arith.constant dense<0.000000e+00> : vector<8x17xf32>
    %190 = tpu.matmul %2, %189, %cst_172 {dimension_numbers = #tpu.dot_dimension_numbers<[1], [0], [0], [1], [0, 0, 1, 1], [], []>} : vector<8x32xf32>, vector<32x17xf32>, vector<8x17xf32> -> vector<8x17xf32>
    %191 = vector.broadcast %3 : vector<8x1xf32> to vector<8x17xf32>
    %192 = arith.addf %190, %191 : vector<8x17xf32>
    %c0_173 = arith.constant 0 : index
    %c7 = arith.constant 7 : index
    %c0_174 = arith.constant 0 : index
    %c0_175 = arith.constant 0 : index
    %193 = vector.load %arg5[%c0_173, %c7, %c0_174, %c0_175] : memref<1x24x8x17xf32, #tpu.memory_space<vmem>>, vector<1x1x8x17xf32>
    %194 = vector.shape_cast %193 : vector<1x1x8x17xf32> to vector<8x17xf32>
    %195 = vector.shape_cast %192 : vector<8x17xf32> to vector<1x1x8x17xf32>
    tpu.vector_store %arg5[%c0_173, %c7, %c0_174, %c0_175], %195 {strides = array<i32>} : memref<1x24x8x17xf32, #tpu.memory_space<vmem>>, vector<1x1x8x17xf32>,
    %c8_i32 = arith.constant 8 : i32
    %196 = arith.addi %1, %c8_i32 : i32
    %c0_i32_176 = arith.constant 0 : i32
    %197 = arith.addi %196, %c0_i32_176 : i32
    %c0_177 = arith.constant 0 : index
    %198 = arith.index_cast %197 : i32 to index
    %c0_178 = arith.constant 0 : index
    %c0_179 = arith.constant 0 : index
    %199 = vector.load %arg2[%c0_177, %198, %c0_178, %c0_179] : memref<1x25x8x18xf32, #tpu.memory_space<vmem>>, vector<1x1x8x18xf32>
    %200 = vector.shape_cast %199 : vector<1x1x8x18xf32> to vector<8x18xf32>
    %201 = vector.extract_strided_slice %200 {offsets = [0, 0], sizes = [8, 17], strides = [1, 1]} : vector<8x18xf32> to vector<8x17xf32>
    %c0_180 = arith.constant 0 : index
    %c0_181 = arith.constant 0 : index
    %202 = vector.load %arg6[%c0_180, %c0_181] : memref<32x17xf32, #tpu.memory_space<vmem>>, vector<8x17xf32>
    tpu.vector_store %arg6[%c0_180, %c0_181], %201 {strides = array<i32>} : memref<32x17xf32, #tpu.memory_space<vmem>>, vector<8x17xf32>,
    %203 = vector.extract_strided_slice %200 {offsets = [0, 1], sizes = [8, 17], strides = [1, 1]} : vector<8x18xf32> to vector<8x17xf32>
    %c8_182 = arith.constant 8 : index
    %c0_183 = arith.constant 0 : index
    %204 = vector.load %arg6[%c8_182, %c0_183] : memref<32x17xf32, #tpu.memory_space<vmem>>, vector<8x17xf32>
    tpu.vector_store %arg6[%c8_182, %c0_183], %203 {strides = array<i32>} : memref<32x17xf32, #tpu.memory_space<vmem>>, vector<8x17xf32>,
    %c1_i32_184 = arith.constant 1 : i32
    %205 = arith.addi %196, %c1_i32_184 : i32
    %c0_185 = arith.constant 0 : index
    %206 = arith.index_cast %205 : i32 to index
    %c0_186 = arith.constant 0 : index
    %c0_187 = arith.constant 0 : index
    %207 = vector.load %arg2[%c0_185, %206, %c0_186, %c0_187] : memref<1x25x8x18xf32, #tpu.memory_space<vmem>>, vector<1x1x8x18xf32>
    %208 = vector.shape_cast %207 : vector<1x1x8x18xf32> to vector<8x18xf32>
    %209 = vector.extract_strided_slice %208 {offsets = [0, 0], sizes = [8, 17], strides = [1, 1]} : vector<8x18xf32> to vector<8x17xf32>
    %c16_188 = arith.constant 16 : index
    %c0_189 = arith.constant 0 : index
    %210 = vector.load %arg6[%c16_188, %c0_189] : memref<32x17xf32, #tpu.memory_space<vmem>>, vector<8x17xf32>
    tpu.vector_store %arg6[%c16_188, %c0_189], %209 {strides = array<i32>} : memref<32x17xf32, #tpu.memory_space<vmem>>, vector<8x17xf32>,
    %211 = vector.extract_strided_slice %208 {offsets = [0, 1], sizes = [8, 17], strides = [1, 1]} : vector<8x18xf32> to vector<8x17xf32>
    %c24_190 = arith.constant 24 : index
    %c0_191 = arith.constant 0 : index
    %212 = vector.load %arg6[%c24_190, %c0_191] : memref<32x17xf32, #tpu.memory_space<vmem>>, vector<8x17xf32>
    tpu.vector_store %arg6[%c24_190, %c0_191], %211 {strides = array<i32>} : memref<32x17xf32, #tpu.memory_space<vmem>>, vector<8x17xf32>,
    %c0_192 = arith.constant 0 : index
    %c0_193 = arith.constant 0 : index
    %213 = vector.load %arg6[%c0_192, %c0_193] : memref<32x17xf32, #tpu.memory_space<vmem>>, vector<32x17xf32>
    %cst_194 = arith.constant dense<0.000000e+00> : vector<8x17xf32>
    %214 = tpu.matmul %2, %213, %cst_194 {dimension_numbers = #tpu.dot_dimension_numbers<[1], [0], [0], [1], [0, 0, 1, 1], [], []>} : vector<8x32xf32>, vector<32x17xf32>, vector<8x17xf32> -> vector<8x17xf32>
    %215 = vector.broadcast %3 : vector<8x1xf32> to vector<8x17xf32>
    %216 = arith.addf %214, %215 : vector<8x17xf32>
    %c0_195 = arith.constant 0 : index
    %c8_196 = arith.constant 8 : index
    %c0_197 = arith.constant 0 : index
    %c0_198 = arith.constant 0 : index
    %217 = vector.load %arg5[%c0_195, %c8_196, %c0_197, %c0_198] : memref<1x24x8x17xf32, #tpu.memory_space<vmem>>, vector<1x1x8x17xf32>
    %218 = vector.shape_cast %217 : vector<1x1x8x17xf32> to vector<8x17xf32>
    %219 = vector.shape_cast %216 : vector<8x17xf32> to vector<1x1x8x17xf32>
    tpu.vector_store %arg5[%c0_195, %c8_196, %c0_197, %c0_198], %219 {strides = array<i32>} : memref<1x24x8x17xf32, #tpu.memory_space<vmem>>, vector<1x1x8x17xf32>,
    %c9_i32 = arith.constant 9 : i32
    %220 = arith.addi %1, %c9_i32 : i32
    %c0_i32_199 = arith.constant 0 : i32
    %221 = arith.addi %220, %c0_i32_199 : i32
    %c0_200 = arith.constant 0 : index
    %222 = arith.index_cast %221 : i32 to index
    %c0_201 = arith.constant 0 : index
    %c0_202 = arith.constant 0 : index
    %223 = vector.load %arg2[%c0_200, %222, %c0_201, %c0_202] : memref<1x25x8x18xf32, #tpu.memory_space<vmem>>, vector<1x1x8x18xf32>
    %224 = vector.shape_cast %223 : vector<1x1x8x18xf32> to vector<8x18xf32>
    %225 = vector.extract_strided_slice %224 {offsets = [0, 0], sizes = [8, 17], strides = [1, 1]} : vector<8x18xf32> to vector<8x17xf32>
    %c0_203 = arith.constant 0 : index
    %c0_204 = arith.constant 0 : index
    %226 = vector.load %arg6[%c0_203, %c0_204] : memref<32x17xf32, #tpu.memory_space<vmem>>, vector<8x17xf32>
    tpu.vector_store %arg6[%c0_203, %c0_204], %225 {strides = array<i32>} : memref<32x17xf32, #tpu.memory_space<vmem>>, vector<8x17xf32>,
    %227 = vector.extract_strided_slice %224 {offsets = [0, 1], sizes = [8, 17], strides = [1, 1]} : vector<8x18xf32> to vector<8x17xf32>
    %c8_205 = arith.constant 8 : index
    %c0_206 = arith.constant 0 : index
    %228 = vector.load %arg6[%c8_205, %c0_206] : memref<32x17xf32, #tpu.memory_space<vmem>>, vector<8x17xf32>
    tpu.vector_store %arg6[%c8_205, %c0_206], %227 {strides = array<i32>} : memref<32x17xf32, #tpu.memory_space<vmem>>, vector<8x17xf32>,
    %c1_i32_207 = arith.constant 1 : i32
    %229 = arith.addi %220, %c1_i32_207 : i32
    %c0_208 = arith.constant 0 : index
    %230 = arith.index_cast %229 : i32 to index
    %c0_209 = arith.constant 0 : index
    %c0_210 = arith.constant 0 : index
    %231 = vector.load %arg2[%c0_208, %230, %c0_209, %c0_210] : memref<1x25x8x18xf32, #tpu.memory_space<vmem>>, vector<1x1x8x18xf32>
    %232 = vector.shape_cast %231 : vector<1x1x8x18xf32> to vector<8x18xf32>
    %233 = vector.extract_strided_slice %232 {offsets = [0, 0], sizes = [8, 17], strides = [1, 1]} : vector<8x18xf32> to vector<8x17xf32>
    %c16_211 = arith.constant 16 : index
    %c0_212 = arith.constant 0 : index
    %234 = vector.load %arg6[%c16_211, %c0_212] : memref<32x17xf32, #tpu.memory_space<vmem>>, vector<8x17xf32>
    tpu.vector_store %arg6[%c16_211, %c0_212], %233 {strides = array<i32>} : memref<32x17xf32, #tpu.memory_space<vmem>>, vector<8x17xf32>,
    %235 = vector.extract_strided_slice %232 {offsets = [0, 1], sizes = [8, 17], strides = [1, 1]} : vector<8x18xf32> to vector<8x17xf32>
    %c24_213 = arith.constant 24 : index
    %c0_214 = arith.constant 0 : index
    %236 = vector.load %arg6[%c24_213, %c0_214] : memref<32x17xf32, #tpu.memory_space<vmem>>, vector<8x17xf32>
    tpu.vector_store %arg6[%c24_213, %c0_214], %235 {strides = array<i32>} : memref<32x17xf32, #tpu.memory_space<vmem>>, vector<8x17xf32>,
    %c0_215 = arith.constant 0 : index
    %c0_216 = arith.constant 0 : index
    %237 = vector.load %arg6[%c0_215, %c0_216] : memref<32x17xf32, #tpu.memory_space<vmem>>, vector<32x17xf32>
    %cst_217 = arith.constant dense<0.000000e+00> : vector<8x17xf32>
    %238 = tpu.matmul %2, %237, %cst_217 {dimension_numbers = #tpu.dot_dimension_numbers<[1], [0], [0], [1], [0, 0, 1, 1], [], []>} : vector<8x32xf32>, vector<32x17xf32>, vector<8x17xf32> -> vector<8x17xf32>
    %239 = vector.broadcast %3 : vector<8x1xf32> to vector<8x17xf32>
    %240 = arith.addf %238, %239 : vector<8x17xf32>
    %c0_218 = arith.constant 0 : index
    %c9 = arith.constant 9 : index
    %c0_219 = arith.constant 0 : index
    %c0_220 = arith.constant 0 : index
    %241 = vector.load %arg5[%c0_218, %c9, %c0_219, %c0_220] : memref<1x24x8x17xf32, #tpu.memory_space<vmem>>, vector<1x1x8x17xf32>
    %242 = vector.shape_cast %241 : vector<1x1x8x17xf32> to vector<8x17xf32>
    %243 = vector.shape_cast %240 : vector<8x17xf32> to vector<1x1x8x17xf32>
    tpu.vector_store %arg5[%c0_218, %c9, %c0_219, %c0_220], %243 {strides = array<i32>} : memref<1x24x8x17xf32, #tpu.memory_space<vmem>>, vector<1x1x8x17xf32>,
    %c10_i32 = arith.constant 10 : i32
    %244 = arith.addi %1, %c10_i32 : i32
    %c0_i32_221 = arith.constant 0 : i32
    %245 = arith.addi %244, %c0_i32_221 : i32
    %c0_222 = arith.constant 0 : index
    %246 = arith.index_cast %245 : i32 to index
    %c0_223 = arith.constant 0 : index
    %c0_224 = arith.constant 0 : index
    %247 = vector.load %arg2[%c0_222, %246, %c0_223, %c0_224] : memref<1x25x8x18xf32, #tpu.memory_space<vmem>>, vector<1x1x8x18xf32>
    %248 = vector.shape_cast %247 : vector<1x1x8x18xf32> to vector<8x18xf32>
    %249 = vector.extract_strided_slice %248 {offsets = [0, 0], sizes = [8, 17], strides = [1, 1]} : vector<8x18xf32> to vector<8x17xf32>
    %c0_225 = arith.constant 0 : index
    %c0_226 = arith.constant 0 : index
    %250 = vector.load %arg6[%c0_225, %c0_226] : memref<32x17xf32, #tpu.memory_space<vmem>>, vector<8x17xf32>
    tpu.vector_store %arg6[%c0_225, %c0_226], %249 {strides = array<i32>} : memref<32x17xf32, #tpu.memory_space<vmem>>, vector<8x17xf32>,
    %251 = vector.extract_strided_slice %248 {offsets = [0, 1], sizes = [8, 17], strides = [1, 1]} : vector<8x18xf32> to vector<8x17xf32>
    %c8_227 = arith.constant 8 : index
    %c0_228 = arith.constant 0 : index
    %252 = vector.load %arg6[%c8_227, %c0_228] : memref<32x17xf32, #tpu.memory_space<vmem>>, vector<8x17xf32>
    tpu.vector_store %arg6[%c8_227, %c0_228], %251 {strides = array<i32>} : memref<32x17xf32, #tpu.memory_space<vmem>>, vector<8x17xf32>,
    %c1_i32_229 = arith.constant 1 : i32
    %253 = arith.addi %244, %c1_i32_229 : i32
    %c0_230 = arith.constant 0 : index
    %254 = arith.index_cast %253 : i32 to index
    %c0_231 = arith.constant 0 : index
    %c0_232 = arith.constant 0 : index
    %255 = vector.load %arg2[%c0_230, %254, %c0_231, %c0_232] : memref<1x25x8x18xf32, #tpu.memory_space<vmem>>, vector<1x1x8x18xf32>
    %256 = vector.shape_cast %255 : vector<1x1x8x18xf32> to vector<8x18xf32>
    %257 = vector.extract_strided_slice %256 {offsets = [0, 0], sizes = [8, 17], strides = [1, 1]} : vector<8x18xf32> to vector<8x17xf32>
    %c16_233 = arith.constant 16 : index
    %c0_234 = arith.constant 0 : index
    %258 = vector.load %arg6[%c16_233, %c0_234] : memref<32x17xf32, #tpu.memory_space<vmem>>, vector<8x17xf32>
    tpu.vector_store %arg6[%c16_233, %c0_234], %257 {strides = array<i32>} : memref<32x17xf32, #tpu.memory_space<vmem>>, vector<8x17xf32>,
    %259 = vector.extract_strided_slice %256 {offsets = [0, 1], sizes = [8, 17], strides = [1, 1]} : vector<8x18xf32> to vector<8x17xf32>
    %c24_235 = arith.constant 24 : index
    %c0_236 = arith.constant 0 : index
    %260 = vector.load %arg6[%c24_235, %c0_236] : memref<32x17xf32, #tpu.memory_space<vmem>>, vector<8x17xf32>
    tpu.vector_store %arg6[%c24_235, %c0_236], %259 {strides = array<i32>} : memref<32x17xf32, #tpu.memory_space<vmem>>, vector<8x17xf32>,
    %c0_237 = arith.constant 0 : index
    %c0_238 = arith.constant 0 : index
    %261 = vector.load %arg6[%c0_237, %c0_238] : memref<32x17xf32, #tpu.memory_space<vmem>>, vector<32x17xf32>
    %cst_239 = arith.constant dense<0.000000e+00> : vector<8x17xf32>
    %262 = tpu.matmul %2, %261, %cst_239 {dimension_numbers = #tpu.dot_dimension_numbers<[1], [0], [0], [1], [0, 0, 1, 1], [], []>} : vector<8x32xf32>, vector<32x17xf32>, vector<8x17xf32> -> vector<8x17xf32>
    %263 = vector.broadcast %3 : vector<8x1xf32> to vector<8x17xf32>
    %264 = arith.addf %262, %263 : vector<8x17xf32>
    %c0_240 = arith.constant 0 : index
    %c10 = arith.constant 10 : index
    %c0_241 = arith.constant 0 : index
    %c0_242 = arith.constant 0 : index
    %265 = vector.load %arg5[%c0_240, %c10, %c0_241, %c0_242] : memref<1x24x8x17xf32, #tpu.memory_space<vmem>>, vector<1x1x8x17xf32>
    %266 = vector.shape_cast %265 : vector<1x1x8x17xf32> to vector<8x17xf32>
    %267 = vector.shape_cast %264 : vector<8x17xf32> to vector<1x1x8x17xf32>
    tpu.vector_store %arg5[%c0_240, %c10, %c0_241, %c0_242], %267 {strides = array<i32>} : memref<1x24x8x17xf32, #tpu.memory_space<vmem>>, vector<1x1x8x17xf32>,
    %c11_i32 = arith.constant 11 : i32
    %268 = arith.addi %1, %c11_i32 : i32
    %c0_i32_243 = arith.constant 0 : i32
    %269 = arith.addi %268, %c0_i32_243 : i32
    %c0_244 = arith.constant 0 : index
    %270 = arith.index_cast %269 : i32 to index
    %c0_245 = arith.constant 0 : index
    %c0_246 = arith.constant 0 : index
    %271 = vector.load %arg2[%c0_244, %270, %c0_245, %c0_246] : memref<1x25x8x18xf32, #tpu.memory_space<vmem>>, vector<1x1x8x18xf32>
    %272 = vector.shape_cast %271 : vector<1x1x8x18xf32> to vector<8x18xf32>
    %273 = vector.extract_strided_slice %272 {offsets = [0, 0], sizes = [8, 17], strides = [1, 1]} : vector<8x18xf32> to vector<8x17xf32>
    %c0_247 = arith.constant 0 : index
    %c0_248 = arith.constant 0 : index
    %274 = vector.load %arg6[%c0_247, %c0_248] : memref<32x17xf32, #tpu.memory_space<vmem>>, vector<8x17xf32>
    tpu.vector_store %arg6[%c0_247, %c0_248], %273 {strides = array<i32>} : memref<32x17xf32, #tpu.memory_space<vmem>>, vector<8x17xf32>,
    %275 = vector.extract_strided_slice %272 {offsets = [0, 1], sizes = [8, 17], strides = [1, 1]} : vector<8x18xf32> to vector<8x17xf32>
    %c8_249 = arith.constant 8 : index
    %c0_250 = arith.constant 0 : index
    %276 = vector.load %arg6[%c8_249, %c0_250] : memref<32x17xf32, #tpu.memory_space<vmem>>, vector<8x17xf32>
    tpu.vector_store %arg6[%c8_249, %c0_250], %275 {strides = array<i32>} : memref<32x17xf32, #tpu.memory_space<vmem>>, vector<8x17xf32>,
    %c1_i32_251 = arith.constant 1 : i32
    %277 = arith.addi %268, %c1_i32_251 : i32
    %c0_252 = arith.constant 0 : index
    %278 = arith.index_cast %277 : i32 to index
    %c0_253 = arith.constant 0 : index
    %c0_254 = arith.constant 0 : index
    %279 = vector.load %arg2[%c0_252, %278, %c0_253, %c0_254] : memref<1x25x8x18xf32, #tpu.memory_space<vmem>>, vector<1x1x8x18xf32>
    %280 = vector.shape_cast %279 : vector<1x1x8x18xf32> to vector<8x18xf32>
    %281 = vector.extract_strided_slice %280 {offsets = [0, 0], sizes = [8, 17], strides = [1, 1]} : vector<8x18xf32> to vector<8x17xf32>
    %c16_255 = arith.constant 16 : index
    %c0_256 = arith.constant 0 : index
    %282 = vector.load %arg6[%c16_255, %c0_256] : memref<32x17xf32, #tpu.memory_space<vmem>>, vector<8x17xf32>
    tpu.vector_store %arg6[%c16_255, %c0_256], %281 {strides = array<i32>} : memref<32x17xf32, #tpu.memory_space<vmem>>, vector<8x17xf32>,
    %283 = vector.extract_strided_slice %280 {offsets = [0, 1], sizes = [8, 17], strides = [1, 1]} : vector<8x18xf32> to vector<8x17xf32>
    %c24_257 = arith.constant 24 : index
    %c0_258 = arith.constant 0 : index
    %284 = vector.load %arg6[%c24_257, %c0_258] : memref<32x17xf32, #tpu.memory_space<vmem>>, vector<8x17xf32>
    tpu.vector_store %arg6[%c24_257, %c0_258], %283 {strides = array<i32>} : memref<32x17xf32, #tpu.memory_space<vmem>>, vector<8x17xf32>,
    %c0_259 = arith.constant 0 : index
    %c0_260 = arith.constant 0 : index
    %285 = vector.load %arg6[%c0_259, %c0_260] : memref<32x17xf32, #tpu.memory_space<vmem>>, vector<32x17xf32>
    %cst_261 = arith.constant dense<0.000000e+00> : vector<8x17xf32>
    %286 = tpu.matmul %2, %285, %cst_261 {dimension_numbers = #tpu.dot_dimension_numbers<[1], [0], [0], [1], [0, 0, 1, 1], [], []>} : vector<8x32xf32>, vector<32x17xf32>, vector<8x17xf32> -> vector<8x17xf32>
    %287 = vector.broadcast %3 : vector<8x1xf32> to vector<8x17xf32>
    %288 = arith.addf %286, %287 : vector<8x17xf32>
    %c0_262 = arith.constant 0 : index
    %c11 = arith.constant 11 : index
    %c0_263 = arith.constant 0 : index
    %c0_264 = arith.constant 0 : index
    %289 = vector.load %arg5[%c0_262, %c11, %c0_263, %c0_264] : memref<1x24x8x17xf32, #tpu.memory_space<vmem>>, vector<1x1x8x17xf32>
    %290 = vector.shape_cast %289 : vector<1x1x8x17xf32> to vector<8x17xf32>
    %291 = vector.shape_cast %288 : vector<8x17xf32> to vector<1x1x8x17xf32>
    tpu.vector_store %arg5[%c0_262, %c11, %c0_263, %c0_264], %291 {strides = array<i32>} : memref<1x24x8x17xf32, #tpu.memory_space<vmem>>, vector<1x1x8x17xf32>,
    %c12_i32 = arith.constant 12 : i32
    %292 = arith.addi %1, %c12_i32 : i32
    %c0_i32_265 = arith.constant 0 : i32
    %293 = arith.addi %292, %c0_i32_265 : i32
    %c0_266 = arith.constant 0 : index
    %294 = arith.index_cast %293 : i32 to index
    %c0_267 = arith.constant 0 : index
    %c0_268 = arith.constant 0 : index
    %295 = vector.load %arg2[%c0_266, %294, %c0_267, %c0_268] : memref<1x25x8x18xf32, #tpu.memory_space<vmem>>, vector<1x1x8x18xf32>
    %296 = vector.shape_cast %295 : vector<1x1x8x18xf32> to vector<8x18xf32>
    %297 = vector.extract_strided_slice %296 {offsets = [0, 0], sizes = [8, 17], strides = [1, 1]} : vector<8x18xf32> to vector<8x17xf32>
    %c0_269 = arith.constant 0 : index
    %c0_270 = arith.constant 0 : index
    %298 = vector.load %arg6[%c0_269, %c0_270] : memref<32x17xf32, #tpu.memory_space<vmem>>, vector<8x17xf32>
    tpu.vector_store %arg6[%c0_269, %c0_270], %297 {strides = array<i32>} : memref<32x17xf32, #tpu.memory_space<vmem>>, vector<8x17xf32>,
    %299 = vector.extract_strided_slice %296 {offsets = [0, 1], sizes = [8, 17], strides = [1, 1]} : vector<8x18xf32> to vector<8x17xf32>
    %c8_271 = arith.constant 8 : index
    %c0_272 = arith.constant 0 : index
    %300 = vector.load %arg6[%c8_271, %c0_272] : memref<32x17xf32, #tpu.memory_space<vmem>>, vector<8x17xf32>
    tpu.vector_store %arg6[%c8_271, %c0_272], %299 {strides = array<i32>} : memref<32x17xf32, #tpu.memory_space<vmem>>, vector<8x17xf32>,
    %c1_i32_273 = arith.constant 1 : i32
    %301 = arith.addi %292, %c1_i32_273 : i32
    %c0_274 = arith.constant 0 : index
    %302 = arith.index_cast %301 : i32 to index
    %c0_275 = arith.constant 0 : index
    %c0_276 = arith.constant 0 : index
    %303 = vector.load %arg2[%c0_274, %302, %c0_275, %c0_276] : memref<1x25x8x18xf32, #tpu.memory_space<vmem>>, vector<1x1x8x18xf32>
    %304 = vector.shape_cast %303 : vector<1x1x8x18xf32> to vector<8x18xf32>
    %305 = vector.extract_strided_slice %304 {offsets = [0, 0], sizes = [8, 17], strides = [1, 1]} : vector<8x18xf32> to vector<8x17xf32>
    %c16_277 = arith.constant 16 : index
    %c0_278 = arith.constant 0 : index
    %306 = vector.load %arg6[%c16_277, %c0_278] : memref<32x17xf32, #tpu.memory_space<vmem>>, vector<8x17xf32>
    tpu.vector_store %arg6[%c16_277, %c0_278], %305 {strides = array<i32>} : memref<32x17xf32, #tpu.memory_space<vmem>>, vector<8x17xf32>,
    %307 = vector.extract_strided_slice %304 {offsets = [0, 1], sizes = [8, 17], strides = [1, 1]} : vector<8x18xf32> to vector<8x17xf32>
    %c24_279 = arith.constant 24 : index
    %c0_280 = arith.constant 0 : index
    %308 = vector.load %arg6[%c24_279, %c0_280] : memref<32x17xf32, #tpu.memory_space<vmem>>, vector<8x17xf32>
    tpu.vector_store %arg6[%c24_279, %c0_280], %307 {strides = array<i32>} : memref<32x17xf32, #tpu.memory_space<vmem>>, vector<8x17xf32>,
    %c0_281 = arith.constant 0 : index
    %c0_282 = arith.constant 0 : index
    %309 = vector.load %arg6[%c0_281, %c0_282] : memref<32x17xf32, #tpu.memory_space<vmem>>, vector<32x17xf32>
    %cst_283 = arith.constant dense<0.000000e+00> : vector<8x17xf32>
    %310 = tpu.matmul %2, %309, %cst_283 {dimension_numbers = #tpu.dot_dimension_numbers<[1], [0], [0], [1], [0, 0, 1, 1], [], []>} : vector<8x32xf32>, vector<32x17xf32>, vector<8x17xf32> -> vector<8x17xf32>
    %311 = vector.broadcast %3 : vector<8x1xf32> to vector<8x17xf32>
    %312 = arith.addf %310, %311 : vector<8x17xf32>
    %c0_284 = arith.constant 0 : index
    %c12 = arith.constant 12 : index
    %c0_285 = arith.constant 0 : index
    %c0_286 = arith.constant 0 : index
    %313 = vector.load %arg5[%c0_284, %c12, %c0_285, %c0_286] : memref<1x24x8x17xf32, #tpu.memory_space<vmem>>, vector<1x1x8x17xf32>
    %314 = vector.shape_cast %313 : vector<1x1x8x17xf32> to vector<8x17xf32>
    %315 = vector.shape_cast %312 : vector<8x17xf32> to vector<1x1x8x17xf32>
    tpu.vector_store %arg5[%c0_284, %c12, %c0_285, %c0_286], %315 {strides = array<i32>} : memref<1x24x8x17xf32, #tpu.memory_space<vmem>>, vector<1x1x8x17xf32>,
    %c13_i32 = arith.constant 13 : i32
    %316 = arith.addi %1, %c13_i32 : i32
    %c0_i32_287 = arith.constant 0 : i32
    %317 = arith.addi %316, %c0_i32_287 : i32
    %c0_288 = arith.constant 0 : index
    %318 = arith.index_cast %317 : i32 to index
    %c0_289 = arith.constant 0 : index
    %c0_290 = arith.constant 0 : index
    %319 = vector.load %arg2[%c0_288, %318, %c0_289, %c0_290] : memref<1x25x8x18xf32, #tpu.memory_space<vmem>>, vector<1x1x8x18xf32>
    %320 = vector.shape_cast %319 : vector<1x1x8x18xf32> to vector<8x18xf32>
    %321 = vector.extract_strided_slice %320 {offsets = [0, 0], sizes = [8, 17], strides = [1, 1]} : vector<8x18xf32> to vector<8x17xf32>
    %c0_291 = arith.constant 0 : index
    %c0_292 = arith.constant 0 : index
    %322 = vector.load %arg6[%c0_291, %c0_292] : memref<32x17xf32, #tpu.memory_space<vmem>>, vector<8x17xf32>
    tpu.vector_store %arg6[%c0_291, %c0_292], %321 {strides = array<i32>} : memref<32x17xf32, #tpu.memory_space<vmem>>, vector<8x17xf32>,
    %323 = vector.extract_strided_slice %320 {offsets = [0, 1], sizes = [8, 17], strides = [1, 1]} : vector<8x18xf32> to vector<8x17xf32>
    %c8_293 = arith.constant 8 : index
    %c0_294 = arith.constant 0 : index
    %324 = vector.load %arg6[%c8_293, %c0_294] : memref<32x17xf32, #tpu.memory_space<vmem>>, vector<8x17xf32>
    tpu.vector_store %arg6[%c8_293, %c0_294], %323 {strides = array<i32>} : memref<32x17xf32, #tpu.memory_space<vmem>>, vector<8x17xf32>,
    %c1_i32_295 = arith.constant 1 : i32
    %325 = arith.addi %316, %c1_i32_295 : i32
    %c0_296 = arith.constant 0 : index
    %326 = arith.index_cast %325 : i32 to index
    %c0_297 = arith.constant 0 : index
    %c0_298 = arith.constant 0 : index
    %327 = vector.load %arg2[%c0_296, %326, %c0_297, %c0_298] : memref<1x25x8x18xf32, #tpu.memory_space<vmem>>, vector<1x1x8x18xf32>
    %328 = vector.shape_cast %327 : vector<1x1x8x18xf32> to vector<8x18xf32>
    %329 = vector.extract_strided_slice %328 {offsets = [0, 0], sizes = [8, 17], strides = [1, 1]} : vector<8x18xf32> to vector<8x17xf32>
    %c16_299 = arith.constant 16 : index
    %c0_300 = arith.constant 0 : index
    %330 = vector.load %arg6[%c16_299, %c0_300] : memref<32x17xf32, #tpu.memory_space<vmem>>, vector<8x17xf32>
    tpu.vector_store %arg6[%c16_299, %c0_300], %329 {strides = array<i32>} : memref<32x17xf32, #tpu.memory_space<vmem>>, vector<8x17xf32>,
    %331 = vector.extract_strided_slice %328 {offsets = [0, 1], sizes = [8, 17], strides = [1, 1]} : vector<8x18xf32> to vector<8x17xf32>
    %c24_301 = arith.constant 24 : index
    %c0_302 = arith.constant 0 : index
    %332 = vector.load %arg6[%c24_301, %c0_302] : memref<32x17xf32, #tpu.memory_space<vmem>>, vector<8x17xf32>
    tpu.vector_store %arg6[%c24_301, %c0_302], %331 {strides = array<i32>} : memref<32x17xf32, #tpu.memory_space<vmem>>, vector<8x17xf32>,
    %c0_303 = arith.constant 0 : index
    %c0_304 = arith.constant 0 : index
    %333 = vector.load %arg6[%c0_303, %c0_304] : memref<32x17xf32, #tpu.memory_space<vmem>>, vector<32x17xf32>
    %cst_305 = arith.constant dense<0.000000e+00> : vector<8x17xf32>
    %334 = tpu.matmul %2, %333, %cst_305 {dimension_numbers = #tpu.dot_dimension_numbers<[1], [0], [0], [1], [0, 0, 1, 1], [], []>} : vector<8x32xf32>, vector<32x17xf32>, vector<8x17xf32> -> vector<8x17xf32>
    %335 = vector.broadcast %3 : vector<8x1xf32> to vector<8x17xf32>
    %336 = arith.addf %334, %335 : vector<8x17xf32>
    %c0_306 = arith.constant 0 : index
    %c13 = arith.constant 13 : index
    %c0_307 = arith.constant 0 : index
    %c0_308 = arith.constant 0 : index
    %337 = vector.load %arg5[%c0_306, %c13, %c0_307, %c0_308] : memref<1x24x8x17xf32, #tpu.memory_space<vmem>>, vector<1x1x8x17xf32>
    %338 = vector.shape_cast %337 : vector<1x1x8x17xf32> to vector<8x17xf32>
    %339 = vector.shape_cast %336 : vector<8x17xf32> to vector<1x1x8x17xf32>
    tpu.vector_store %arg5[%c0_306, %c13, %c0_307, %c0_308], %339 {strides = array<i32>} : memref<1x24x8x17xf32, #tpu.memory_space<vmem>>, vector<1x1x8x17xf32>,
    %c14_i32 = arith.constant 14 : i32
    %340 = arith.addi %1, %c14_i32 : i32
    %c0_i32_309 = arith.constant 0 : i32
    %341 = arith.addi %340, %c0_i32_309 : i32
    %c0_310 = arith.constant 0 : index
    %342 = arith.index_cast %341 : i32 to index
    %c0_311 = arith.constant 0 : index
    %c0_312 = arith.constant 0 : index
    %343 = vector.load %arg2[%c0_310, %342, %c0_311, %c0_312] : memref<1x25x8x18xf32, #tpu.memory_space<vmem>>, vector<1x1x8x18xf32>
    %344 = vector.shape_cast %343 : vector<1x1x8x18xf32> to vector<8x18xf32>
    %345 = vector.extract_strided_slice %344 {offsets = [0, 0], sizes = [8, 17], strides = [1, 1]} : vector<8x18xf32> to vector<8x17xf32>
    %c0_313 = arith.constant 0 : index
    %c0_314 = arith.constant 0 : index
    %346 = vector.load %arg6[%c0_313, %c0_314] : memref<32x17xf32, #tpu.memory_space<vmem>>, vector<8x17xf32>
    tpu.vector_store %arg6[%c0_313, %c0_314], %345 {strides = array<i32>} : memref<32x17xf32, #tpu.memory_space<vmem>>, vector<8x17xf32>,
    %347 = vector.extract_strided_slice %344 {offsets = [0, 1], sizes = [8, 17], strides = [1, 1]} : vector<8x18xf32> to vector<8x17xf32>
    %c8_315 = arith.constant 8 : index
    %c0_316 = arith.constant 0 : index
    %348 = vector.load %arg6[%c8_315, %c0_316] : memref<32x17xf32, #tpu.memory_space<vmem>>, vector<8x17xf32>
    tpu.vector_store %arg6[%c8_315, %c0_316], %347 {strides = array<i32>} : memref<32x17xf32, #tpu.memory_space<vmem>>, vector<8x17xf32>,
    %c1_i32_317 = arith.constant 1 : i32
    %349 = arith.addi %340, %c1_i32_317 : i32
    %c0_318 = arith.constant 0 : index
    %350 = arith.index_cast %349 : i32 to index
    %c0_319 = arith.constant 0 : index
    %c0_320 = arith.constant 0 : index
    %351 = vector.load %arg2[%c0_318, %350, %c0_319, %c0_320] : memref<1x25x8x18xf32, #tpu.memory_space<vmem>>, vector<1x1x8x18xf32>
    %352 = vector.shape_cast %351 : vector<1x1x8x18xf32> to vector<8x18xf32>
    %353 = vector.extract_strided_slice %352 {offsets = [0, 0], sizes = [8, 17], strides = [1, 1]} : vector<8x18xf32> to vector<8x17xf32>
    %c16_321 = arith.constant 16 : index
    %c0_322 = arith.constant 0 : index
    %354 = vector.load %arg6[%c16_321, %c0_322] : memref<32x17xf32, #tpu.memory_space<vmem>>, vector<8x17xf32>
    tpu.vector_store %arg6[%c16_321, %c0_322], %353 {strides = array<i32>} : memref<32x17xf32, #tpu.memory_space<vmem>>, vector<8x17xf32>,
    %355 = vector.extract_strided_slice %352 {offsets = [0, 1], sizes = [8, 17], strides = [1, 1]} : vector<8x18xf32> to vector<8x17xf32>
    %c24_323 = arith.constant 24 : index
    %c0_324 = arith.constant 0 : index
    %356 = vector.load %arg6[%c24_323, %c0_324] : memref<32x17xf32, #tpu.memory_space<vmem>>, vector<8x17xf32>
    tpu.vector_store %arg6[%c24_323, %c0_324], %355 {strides = array<i32>} : memref<32x17xf32, #tpu.memory_space<vmem>>, vector<8x17xf32>,
    %c0_325 = arith.constant 0 : index
    %c0_326 = arith.constant 0 : index
    %357 = vector.load %arg6[%c0_325, %c0_326] : memref<32x17xf32, #tpu.memory_space<vmem>>, vector<32x17xf32>
    %cst_327 = arith.constant dense<0.000000e+00> : vector<8x17xf32>
    %358 = tpu.matmul %2, %357, %cst_327 {dimension_numbers = #tpu.dot_dimension_numbers<[1], [0], [0], [1], [0, 0, 1, 1], [], []>} : vector<8x32xf32>, vector<32x17xf32>, vector<8x17xf32> -> vector<8x17xf32>
    %359 = vector.broadcast %3 : vector<8x1xf32> to vector<8x17xf32>
    %360 = arith.addf %358, %359 : vector<8x17xf32>
    %c0_328 = arith.constant 0 : index
    %c14 = arith.constant 14 : index
    %c0_329 = arith.constant 0 : index
    %c0_330 = arith.constant 0 : index
    %361 = vector.load %arg5[%c0_328, %c14, %c0_329, %c0_330] : memref<1x24x8x17xf32, #tpu.memory_space<vmem>>, vector<1x1x8x17xf32>
    %362 = vector.shape_cast %361 : vector<1x1x8x17xf32> to vector<8x17xf32>
    %363 = vector.shape_cast %360 : vector<8x17xf32> to vector<1x1x8x17xf32>
    tpu.vector_store %arg5[%c0_328, %c14, %c0_329, %c0_330], %363 {strides = array<i32>} : memref<1x24x8x17xf32, #tpu.memory_space<vmem>>, vector<1x1x8x17xf32>,
    %c15_i32 = arith.constant 15 : i32
    %364 = arith.addi %1, %c15_i32 : i32
    %c0_i32_331 = arith.constant 0 : i32
    %365 = arith.addi %364, %c0_i32_331 : i32
    %c0_332 = arith.constant 0 : index
    %366 = arith.index_cast %365 : i32 to index
    %c0_333 = arith.constant 0 : index
    %c0_334 = arith.constant 0 : index
    %367 = vector.load %arg2[%c0_332, %366, %c0_333, %c0_334] : memref<1x25x8x18xf32, #tpu.memory_space<vmem>>, vector<1x1x8x18xf32>
    %368 = vector.shape_cast %367 : vector<1x1x8x18xf32> to vector<8x18xf32>
    %369 = vector.extract_strided_slice %368 {offsets = [0, 0], sizes = [8, 17], strides = [1, 1]} : vector<8x18xf32> to vector<8x17xf32>
    %c0_335 = arith.constant 0 : index
    %c0_336 = arith.constant 0 : index
    %370 = vector.load %arg6[%c0_335, %c0_336] : memref<32x17xf32, #tpu.memory_space<vmem>>, vector<8x17xf32>
    tpu.vector_store %arg6[%c0_335, %c0_336], %369 {strides = array<i32>} : memref<32x17xf32, #tpu.memory_space<vmem>>, vector<8x17xf32>,
    %371 = vector.extract_strided_slice %368 {offsets = [0, 1], sizes = [8, 17], strides = [1, 1]} : vector<8x18xf32> to vector<8x17xf32>
    %c8_337 = arith.constant 8 : index
    %c0_338 = arith.constant 0 : index
    %372 = vector.load %arg6[%c8_337, %c0_338] : memref<32x17xf32, #tpu.memory_space<vmem>>, vector<8x17xf32>
    tpu.vector_store %arg6[%c8_337, %c0_338], %371 {strides = array<i32>} : memref<32x17xf32, #tpu.memory_space<vmem>>, vector<8x17xf32>,
    %c1_i32_339 = arith.constant 1 : i32
    %373 = arith.addi %364, %c1_i32_339 : i32
    %c0_340 = arith.constant 0 : index
    %374 = arith.index_cast %373 : i32 to index
    %c0_341 = arith.constant 0 : index
    %c0_342 = arith.constant 0 : index
    %375 = vector.load %arg2[%c0_340, %374, %c0_341, %c0_342] : memref<1x25x8x18xf32, #tpu.memory_space<vmem>>, vector<1x1x8x18xf32>
    %376 = vector.shape_cast %375 : vector<1x1x8x18xf32> to vector<8x18xf32>
    %377 = vector.extract_strided_slice %376 {offsets = [0, 0], sizes = [8, 17], strides = [1, 1]} : vector<8x18xf32> to vector<8x17xf32>
    %c16_343 = arith.constant 16 : index
    %c0_344 = arith.constant 0 : index
    %378 = vector.load %arg6[%c16_343, %c0_344] : memref<32x17xf32, #tpu.memory_space<vmem>>, vector<8x17xf32>
    tpu.vector_store %arg6[%c16_343, %c0_344], %377 {strides = array<i32>} : memref<32x17xf32, #tpu.memory_space<vmem>>, vector<8x17xf32>,
    %379 = vector.extract_strided_slice %376 {offsets = [0, 1], sizes = [8, 17], strides = [1, 1]} : vector<8x18xf32> to vector<8x17xf32>
    %c24_345 = arith.constant 24 : index
    %c0_346 = arith.constant 0 : index
    %380 = vector.load %arg6[%c24_345, %c0_346] : memref<32x17xf32, #tpu.memory_space<vmem>>, vector<8x17xf32>
    tpu.vector_store %arg6[%c24_345, %c0_346], %379 {strides = array<i32>} : memref<32x17xf32, #tpu.memory_space<vmem>>, vector<8x17xf32>,
    %c0_347 = arith.constant 0 : index
    %c0_348 = arith.constant 0 : index
    %381 = vector.load %arg6[%c0_347, %c0_348] : memref<32x17xf32, #tpu.memory_space<vmem>>, vector<32x17xf32>
    %cst_349 = arith.constant dense<0.000000e+00> : vector<8x17xf32>
    %382 = tpu.matmul %2, %381, %cst_349 {dimension_numbers = #tpu.dot_dimension_numbers<[1], [0], [0], [1], [0, 0, 1, 1], [], []>} : vector<8x32xf32>, vector<32x17xf32>, vector<8x17xf32> -> vector<8x17xf32>
    %383 = vector.broadcast %3 : vector<8x1xf32> to vector<8x17xf32>
    %384 = arith.addf %382, %383 : vector<8x17xf32>
    %c0_350 = arith.constant 0 : index
    %c15 = arith.constant 15 : index
    %c0_351 = arith.constant 0 : index
    %c0_352 = arith.constant 0 : index
    %385 = vector.load %arg5[%c0_350, %c15, %c0_351, %c0_352] : memref<1x24x8x17xf32, #tpu.memory_space<vmem>>, vector<1x1x8x17xf32>
    %386 = vector.shape_cast %385 : vector<1x1x8x17xf32> to vector<8x17xf32>
    %387 = vector.shape_cast %384 : vector<8x17xf32> to vector<1x1x8x17xf32>
    tpu.vector_store %arg5[%c0_350, %c15, %c0_351, %c0_352], %387 {strides = array<i32>} : memref<1x24x8x17xf32, #tpu.memory_space<vmem>>, vector<1x1x8x17xf32>,
    %c16_i32 = arith.constant 16 : i32
    %388 = arith.addi %1, %c16_i32 : i32
    %c0_i32_353 = arith.constant 0 : i32
    %389 = arith.addi %388, %c0_i32_353 : i32
    %c0_354 = arith.constant 0 : index
    %390 = arith.index_cast %389 : i32 to index
    %c0_355 = arith.constant 0 : index
    %c0_356 = arith.constant 0 : index
    %391 = vector.load %arg2[%c0_354, %390, %c0_355, %c0_356] : memref<1x25x8x18xf32, #tpu.memory_space<vmem>>, vector<1x1x8x18xf32>
    %392 = vector.shape_cast %391 : vector<1x1x8x18xf32> to vector<8x18xf32>
    %393 = vector.extract_strided_slice %392 {offsets = [0, 0], sizes = [8, 17], strides = [1, 1]} : vector<8x18xf32> to vector<8x17xf32>
    %c0_357 = arith.constant 0 : index
    %c0_358 = arith.constant 0 : index
    %394 = vector.load %arg6[%c0_357, %c0_358] : memref<32x17xf32, #tpu.memory_space<vmem>>, vector<8x17xf32>
    tpu.vector_store %arg6[%c0_357, %c0_358], %393 {strides = array<i32>} : memref<32x17xf32, #tpu.memory_space<vmem>>, vector<8x17xf32>,
    %395 = vector.extract_strided_slice %392 {offsets = [0, 1], sizes = [8, 17], strides = [1, 1]} : vector<8x18xf32> to vector<8x17xf32>
    %c8_359 = arith.constant 8 : index
    %c0_360 = arith.constant 0 : index
    %396 = vector.load %arg6[%c8_359, %c0_360] : memref<32x17xf32, #tpu.memory_space<vmem>>, vector<8x17xf32>
    tpu.vector_store %arg6[%c8_359, %c0_360], %395 {strides = array<i32>} : memref<32x17xf32, #tpu.memory_space<vmem>>, vector<8x17xf32>,
    %c1_i32_361 = arith.constant 1 : i32
    %397 = arith.addi %388, %c1_i32_361 : i32
    %c0_362 = arith.constant 0 : index
    %398 = arith.index_cast %397 : i32 to index
    %c0_363 = arith.constant 0 : index
    %c0_364 = arith.constant 0 : index
    %399 = vector.load %arg2[%c0_362, %398, %c0_363, %c0_364] : memref<1x25x8x18xf32, #tpu.memory_space<vmem>>, vector<1x1x8x18xf32>
    %400 = vector.shape_cast %399 : vector<1x1x8x18xf32> to vector<8x18xf32>
    %401 = vector.extract_strided_slice %400 {offsets = [0, 0], sizes = [8, 17], strides = [1, 1]} : vector<8x18xf32> to vector<8x17xf32>
    %c16_365 = arith.constant 16 : index
    %c0_366 = arith.constant 0 : index
    %402 = vector.load %arg6[%c16_365, %c0_366] : memref<32x17xf32, #tpu.memory_space<vmem>>, vector<8x17xf32>
    tpu.vector_store %arg6[%c16_365, %c0_366], %401 {strides = array<i32>} : memref<32x17xf32, #tpu.memory_space<vmem>>, vector<8x17xf32>,
    %403 = vector.extract_strided_slice %400 {offsets = [0, 1], sizes = [8, 17], strides = [1, 1]} : vector<8x18xf32> to vector<8x17xf32>
    %c24_367 = arith.constant 24 : index
    %c0_368 = arith.constant 0 : index
    %404 = vector.load %arg6[%c24_367, %c0_368] : memref<32x17xf32, #tpu.memory_space<vmem>>, vector<8x17xf32>
    tpu.vector_store %arg6[%c24_367, %c0_368], %403 {strides = array<i32>} : memref<32x17xf32, #tpu.memory_space<vmem>>, vector<8x17xf32>,
    %c0_369 = arith.constant 0 : index
    %c0_370 = arith.constant 0 : index
    %405 = vector.load %arg6[%c0_369, %c0_370] : memref<32x17xf32, #tpu.memory_space<vmem>>, vector<32x17xf32>
    %cst_371 = arith.constant dense<0.000000e+00> : vector<8x17xf32>
    %406 = tpu.matmul %2, %405, %cst_371 {dimension_numbers = #tpu.dot_dimension_numbers<[1], [0], [0], [1], [0, 0, 1, 1], [], []>} : vector<8x32xf32>, vector<32x17xf32>, vector<8x17xf32> -> vector<8x17xf32>
    %407 = vector.broadcast %3 : vector<8x1xf32> to vector<8x17xf32>
    %408 = arith.addf %406, %407 : vector<8x17xf32>
    %c0_372 = arith.constant 0 : index
    %c16_373 = arith.constant 16 : index
    %c0_374 = arith.constant 0 : index
    %c0_375 = arith.constant 0 : index
    %409 = vector.load %arg5[%c0_372, %c16_373, %c0_374, %c0_375] : memref<1x24x8x17xf32, #tpu.memory_space<vmem>>, vector<1x1x8x17xf32>
    %410 = vector.shape_cast %409 : vector<1x1x8x17xf32> to vector<8x17xf32>
    %411 = vector.shape_cast %408 : vector<8x17xf32> to vector<1x1x8x17xf32>
    tpu.vector_store %arg5[%c0_372, %c16_373, %c0_374, %c0_375], %411 {strides = array<i32>} : memref<1x24x8x17xf32, #tpu.memory_space<vmem>>, vector<1x1x8x17xf32>,
    %c17_i32 = arith.constant 17 : i32
    %412 = arith.addi %1, %c17_i32 : i32
    %c0_i32_376 = arith.constant 0 : i32
    %413 = arith.addi %412, %c0_i32_376 : i32
    %c0_377 = arith.constant 0 : index
    %414 = arith.index_cast %413 : i32 to index
    %c0_378 = arith.constant 0 : index
    %c0_379 = arith.constant 0 : index
    %415 = vector.load %arg2[%c0_377, %414, %c0_378, %c0_379] : memref<1x25x8x18xf32, #tpu.memory_space<vmem>>, vector<1x1x8x18xf32>
    %416 = vector.shape_cast %415 : vector<1x1x8x18xf32> to vector<8x18xf32>
    %417 = vector.extract_strided_slice %416 {offsets = [0, 0], sizes = [8, 17], strides = [1, 1]} : vector<8x18xf32> to vector<8x17xf32>
    %c0_380 = arith.constant 0 : index
    %c0_381 = arith.constant 0 : index
    %418 = vector.load %arg6[%c0_380, %c0_381] : memref<32x17xf32, #tpu.memory_space<vmem>>, vector<8x17xf32>
    tpu.vector_store %arg6[%c0_380, %c0_381], %417 {strides = array<i32>} : memref<32x17xf32, #tpu.memory_space<vmem>>, vector<8x17xf32>,
    %419 = vector.extract_strided_slice %416 {offsets = [0, 1], sizes = [8, 17], strides = [1, 1]} : vector<8x18xf32> to vector<8x17xf32>
    %c8_382 = arith.constant 8 : index
    %c0_383 = arith.constant 0 : index
    %420 = vector.load %arg6[%c8_382, %c0_383] : memref<32x17xf32, #tpu.memory_space<vmem>>, vector<8x17xf32>
    tpu.vector_store %arg6[%c8_382, %c0_383], %419 {strides = array<i32>} : memref<32x17xf32, #tpu.memory_space<vmem>>, vector<8x17xf32>,
    %c1_i32_384 = arith.constant 1 : i32
    %421 = arith.addi %412, %c1_i32_384 : i32
    %c0_385 = arith.constant 0 : index
    %422 = arith.index_cast %421 : i32 to index
    %c0_386 = arith.constant 0 : index
    %c0_387 = arith.constant 0 : index
    %423 = vector.load %arg2[%c0_385, %422, %c0_386, %c0_387] : memref<1x25x8x18xf32, #tpu.memory_space<vmem>>, vector<1x1x8x18xf32>
    %424 = vector.shape_cast %423 : vector<1x1x8x18xf32> to vector<8x18xf32>
    %425 = vector.extract_strided_slice %424 {offsets = [0, 0], sizes = [8, 17], strides = [1, 1]} : vector<8x18xf32> to vector<8x17xf32>
    %c16_388 = arith.constant 16 : index
    %c0_389 = arith.constant 0 : index
    %426 = vector.load %arg6[%c16_388, %c0_389] : memref<32x17xf32, #tpu.memory_space<vmem>>, vector<8x17xf32>
    tpu.vector_store %arg6[%c16_388, %c0_389], %425 {strides = array<i32>} : memref<32x17xf32, #tpu.memory_space<vmem>>, vector<8x17xf32>,
    %427 = vector.extract_strided_slice %424 {offsets = [0, 1], sizes = [8, 17], strides = [1, 1]} : vector<8x18xf32> to vector<8x17xf32>
    %c24_390 = arith.constant 24 : index
    %c0_391 = arith.constant 0 : index
    %428 = vector.load %arg6[%c24_390, %c0_391] : memref<32x17xf32, #tpu.memory_space<vmem>>, vector<8x17xf32>
    tpu.vector_store %arg6[%c24_390, %c0_391], %427 {strides = array<i32>} : memref<32x17xf32, #tpu.memory_space<vmem>>, vector<8x17xf32>,
    %c0_392 = arith.constant 0 : index
    %c0_393 = arith.constant 0 : index
    %429 = vector.load %arg6[%c0_392, %c0_393] : memref<32x17xf32, #tpu.memory_space<vmem>>, vector<32x17xf32>
    %cst_394 = arith.constant dense<0.000000e+00> : vector<8x17xf32>
    %430 = tpu.matmul %2, %429, %cst_394 {dimension_numbers = #tpu.dot_dimension_numbers<[1], [0], [0], [1], [0, 0, 1, 1], [], []>} : vector<8x32xf32>, vector<32x17xf32>, vector<8x17xf32> -> vector<8x17xf32>
    %431 = vector.broadcast %3 : vector<8x1xf32> to vector<8x17xf32>
    %432 = arith.addf %430, %431 : vector<8x17xf32>
    %c0_395 = arith.constant 0 : index
    %c17 = arith.constant 17 : index
    %c0_396 = arith.constant 0 : index
    %c0_397 = arith.constant 0 : index
    %433 = vector.load %arg5[%c0_395, %c17, %c0_396, %c0_397] : memref<1x24x8x17xf32, #tpu.memory_space<vmem>>, vector<1x1x8x17xf32>
    %434 = vector.shape_cast %433 : vector<1x1x8x17xf32> to vector<8x17xf32>
    %435 = vector.shape_cast %432 : vector<8x17xf32> to vector<1x1x8x17xf32>
    tpu.vector_store %arg5[%c0_395, %c17, %c0_396, %c0_397], %435 {strides = array<i32>} : memref<1x24x8x17xf32, #tpu.memory_space<vmem>>, vector<1x1x8x17xf32>,
    %c18_i32 = arith.constant 18 : i32
    %436 = arith.addi %1, %c18_i32 : i32
    %c0_i32_398 = arith.constant 0 : i32
    %437 = arith.addi %436, %c0_i32_398 : i32
    %c0_399 = arith.constant 0 : index
    %438 = arith.index_cast %437 : i32 to index
    %c0_400 = arith.constant 0 : index
    %c0_401 = arith.constant 0 : index
    %439 = vector.load %arg2[%c0_399, %438, %c0_400, %c0_401] : memref<1x25x8x18xf32, #tpu.memory_space<vmem>>, vector<1x1x8x18xf32>
    %440 = vector.shape_cast %439 : vector<1x1x8x18xf32> to vector<8x18xf32>
    %441 = vector.extract_strided_slice %440 {offsets = [0, 0], sizes = [8, 17], strides = [1, 1]} : vector<8x18xf32> to vector<8x17xf32>
    %c0_402 = arith.constant 0 : index
    %c0_403 = arith.constant 0 : index
    %442 = vector.load %arg6[%c0_402, %c0_403] : memref<32x17xf32, #tpu.memory_space<vmem>>, vector<8x17xf32>
    tpu.vector_store %arg6[%c0_402, %c0_403], %441 {strides = array<i32>} : memref<32x17xf32, #tpu.memory_space<vmem>>, vector<8x17xf32>,
    %443 = vector.extract_strided_slice %440 {offsets = [0, 1], sizes = [8, 17], strides = [1, 1]} : vector<8x18xf32> to vector<8x17xf32>
    %c8_404 = arith.constant 8 : index
    %c0_405 = arith.constant 0 : index
    %444 = vector.load %arg6[%c8_404, %c0_405] : memref<32x17xf32, #tpu.memory_space<vmem>>, vector<8x17xf32>
    tpu.vector_store %arg6[%c8_404, %c0_405], %443 {strides = array<i32>} : memref<32x17xf32, #tpu.memory_space<vmem>>, vector<8x17xf32>,
    %c1_i32_406 = arith.constant 1 : i32
    %445 = arith.addi %436, %c1_i32_406 : i32
    %c0_407 = arith.constant 0 : index
    %446 = arith.index_cast %445 : i32 to index
    %c0_408 = arith.constant 0 : index
    %c0_409 = arith.constant 0 : index
    %447 = vector.load %arg2[%c0_407, %446, %c0_408, %c0_409] : memref<1x25x8x18xf32, #tpu.memory_space<vmem>>, vector<1x1x8x18xf32>
    %448 = vector.shape_cast %447 : vector<1x1x8x18xf32> to vector<8x18xf32>
    %449 = vector.extract_strided_slice %448 {offsets = [0, 0], sizes = [8, 17], strides = [1, 1]} : vector<8x18xf32> to vector<8x17xf32>
    %c16_410 = arith.constant 16 : index
    %c0_411 = arith.constant 0 : index
    %450 = vector.load %arg6[%c16_410, %c0_411] : memref<32x17xf32, #tpu.memory_space<vmem>>, vector<8x17xf32>
    tpu.vector_store %arg6[%c16_410, %c0_411], %449 {strides = array<i32>} : memref<32x17xf32, #tpu.memory_space<vmem>>, vector<8x17xf32>,
    %451 = vector.extract_strided_slice %448 {offsets = [0, 1], sizes = [8, 17], strides = [1, 1]} : vector<8x18xf32> to vector<8x17xf32>
    %c24_412 = arith.constant 24 : index
    %c0_413 = arith.constant 0 : index
    %452 = vector.load %arg6[%c24_412, %c0_413] : memref<32x17xf32, #tpu.memory_space<vmem>>, vector<8x17xf32>
    tpu.vector_store %arg6[%c24_412, %c0_413], %451 {strides = array<i32>} : memref<32x17xf32, #tpu.memory_space<vmem>>, vector<8x17xf32>,
    %c0_414 = arith.constant 0 : index
    %c0_415 = arith.constant 0 : index
    %453 = vector.load %arg6[%c0_414, %c0_415] : memref<32x17xf32, #tpu.memory_space<vmem>>, vector<32x17xf32>
    %cst_416 = arith.constant dense<0.000000e+00> : vector<8x17xf32>
    %454 = tpu.matmul %2, %453, %cst_416 {dimension_numbers = #tpu.dot_dimension_numbers<[1], [0], [0], [1], [0, 0, 1, 1], [], []>} : vector<8x32xf32>, vector<32x17xf32>, vector<8x17xf32> -> vector<8x17xf32>
    %455 = vector.broadcast %3 : vector<8x1xf32> to vector<8x17xf32>
    %456 = arith.addf %454, %455 : vector<8x17xf32>
    %c0_417 = arith.constant 0 : index
    %c18 = arith.constant 18 : index
    %c0_418 = arith.constant 0 : index
    %c0_419 = arith.constant 0 : index
    %457 = vector.load %arg5[%c0_417, %c18, %c0_418, %c0_419] : memref<1x24x8x17xf32, #tpu.memory_space<vmem>>, vector<1x1x8x17xf32>
    %458 = vector.shape_cast %457 : vector<1x1x8x17xf32> to vector<8x17xf32>
    %459 = vector.shape_cast %456 : vector<8x17xf32> to vector<1x1x8x17xf32>
    tpu.vector_store %arg5[%c0_417, %c18, %c0_418, %c0_419], %459 {strides = array<i32>} : memref<1x24x8x17xf32, #tpu.memory_space<vmem>>, vector<1x1x8x17xf32>,
    %c19_i32 = arith.constant 19 : i32
    %460 = arith.addi %1, %c19_i32 : i32
    %c0_i32_420 = arith.constant 0 : i32
    %461 = arith.addi %460, %c0_i32_420 : i32
    %c0_421 = arith.constant 0 : index
    %462 = arith.index_cast %461 : i32 to index
    %c0_422 = arith.constant 0 : index
    %c0_423 = arith.constant 0 : index
    %463 = vector.load %arg2[%c0_421, %462, %c0_422, %c0_423] : memref<1x25x8x18xf32, #tpu.memory_space<vmem>>, vector<1x1x8x18xf32>
    %464 = vector.shape_cast %463 : vector<1x1x8x18xf32> to vector<8x18xf32>
    %465 = vector.extract_strided_slice %464 {offsets = [0, 0], sizes = [8, 17], strides = [1, 1]} : vector<8x18xf32> to vector<8x17xf32>
    %c0_424 = arith.constant 0 : index
    %c0_425 = arith.constant 0 : index
    %466 = vector.load %arg6[%c0_424, %c0_425] : memref<32x17xf32, #tpu.memory_space<vmem>>, vector<8x17xf32>
    tpu.vector_store %arg6[%c0_424, %c0_425], %465 {strides = array<i32>} : memref<32x17xf32, #tpu.memory_space<vmem>>, vector<8x17xf32>,
    %467 = vector.extract_strided_slice %464 {offsets = [0, 1], sizes = [8, 17], strides = [1, 1]} : vector<8x18xf32> to vector<8x17xf32>
    %c8_426 = arith.constant 8 : index
    %c0_427 = arith.constant 0 : index
    %468 = vector.load %arg6[%c8_426, %c0_427] : memref<32x17xf32, #tpu.memory_space<vmem>>, vector<8x17xf32>
    tpu.vector_store %arg6[%c8_426, %c0_427], %467 {strides = array<i32>} : memref<32x17xf32, #tpu.memory_space<vmem>>, vector<8x17xf32>,
    %c1_i32_428 = arith.constant 1 : i32
    %469 = arith.addi %460, %c1_i32_428 : i32
    %c0_429 = arith.constant 0 : index
    %470 = arith.index_cast %469 : i32 to index
    %c0_430 = arith.constant 0 : index
    %c0_431 = arith.constant 0 : index
    %471 = vector.load %arg2[%c0_429, %470, %c0_430, %c0_431] : memref<1x25x8x18xf32, #tpu.memory_space<vmem>>, vector<1x1x8x18xf32>
    %472 = vector.shape_cast %471 : vector<1x1x8x18xf32> to vector<8x18xf32>
    %473 = vector.extract_strided_slice %472 {offsets = [0, 0], sizes = [8, 17], strides = [1, 1]} : vector<8x18xf32> to vector<8x17xf32>
    %c16_432 = arith.constant 16 : index
    %c0_433 = arith.constant 0 : index
    %474 = vector.load %arg6[%c16_432, %c0_433] : memref<32x17xf32, #tpu.memory_space<vmem>>, vector<8x17xf32>
    tpu.vector_store %arg6[%c16_432, %c0_433], %473 {strides = array<i32>} : memref<32x17xf32, #tpu.memory_space<vmem>>, vector<8x17xf32>,
    %475 = vector.extract_strided_slice %472 {offsets = [0, 1], sizes = [8, 17], strides = [1, 1]} : vector<8x18xf32> to vector<8x17xf32>
    %c24_434 = arith.constant 24 : index
    %c0_435 = arith.constant 0 : index
    %476 = vector.load %arg6[%c24_434, %c0_435] : memref<32x17xf32, #tpu.memory_space<vmem>>, vector<8x17xf32>
    tpu.vector_store %arg6[%c24_434, %c0_435], %475 {strides = array<i32>} : memref<32x17xf32, #tpu.memory_space<vmem>>, vector<8x17xf32>,
    %c0_436 = arith.constant 0 : index
    %c0_437 = arith.constant 0 : index
    %477 = vector.load %arg6[%c0_436, %c0_437] : memref<32x17xf32, #tpu.memory_space<vmem>>, vector<32x17xf32>
    %cst_438 = arith.constant dense<0.000000e+00> : vector<8x17xf32>
    %478 = tpu.matmul %2, %477, %cst_438 {dimension_numbers = #tpu.dot_dimension_numbers<[1], [0], [0], [1], [0, 0, 1, 1], [], []>} : vector<8x32xf32>, vector<32x17xf32>, vector<8x17xf32> -> vector<8x17xf32>
    %479 = vector.broadcast %3 : vector<8x1xf32> to vector<8x17xf32>
    %480 = arith.addf %478, %479 : vector<8x17xf32>
    %c0_439 = arith.constant 0 : index
    %c19 = arith.constant 19 : index
    %c0_440 = arith.constant 0 : index
    %c0_441 = arith.constant 0 : index
    %481 = vector.load %arg5[%c0_439, %c19, %c0_440, %c0_441] : memref<1x24x8x17xf32, #tpu.memory_space<vmem>>, vector<1x1x8x17xf32>
    %482 = vector.shape_cast %481 : vector<1x1x8x17xf32> to vector<8x17xf32>
    %483 = vector.shape_cast %480 : vector<8x17xf32> to vector<1x1x8x17xf32>
    tpu.vector_store %arg5[%c0_439, %c19, %c0_440, %c0_441], %483 {strides = array<i32>} : memref<1x24x8x17xf32, #tpu.memory_space<vmem>>, vector<1x1x8x17xf32>,
    %c20_i32 = arith.constant 20 : i32
    %484 = arith.addi %1, %c20_i32 : i32
    %c0_i32_442 = arith.constant 0 : i32
    %485 = arith.addi %484, %c0_i32_442 : i32
    %c0_443 = arith.constant 0 : index
    %486 = arith.index_cast %485 : i32 to index
    %c0_444 = arith.constant 0 : index
    %c0_445 = arith.constant 0 : index
    %487 = vector.load %arg2[%c0_443, %486, %c0_444, %c0_445] : memref<1x25x8x18xf32, #tpu.memory_space<vmem>>, vector<1x1x8x18xf32>
    %488 = vector.shape_cast %487 : vector<1x1x8x18xf32> to vector<8x18xf32>
    %489 = vector.extract_strided_slice %488 {offsets = [0, 0], sizes = [8, 17], strides = [1, 1]} : vector<8x18xf32> to vector<8x17xf32>
    %c0_446 = arith.constant 0 : index
    %c0_447 = arith.constant 0 : index
    %490 = vector.load %arg6[%c0_446, %c0_447] : memref<32x17xf32, #tpu.memory_space<vmem>>, vector<8x17xf32>
    tpu.vector_store %arg6[%c0_446, %c0_447], %489 {strides = array<i32>} : memref<32x17xf32, #tpu.memory_space<vmem>>, vector<8x17xf32>,
    %491 = vector.extract_strided_slice %488 {offsets = [0, 1], sizes = [8, 17], strides = [1, 1]} : vector<8x18xf32> to vector<8x17xf32>
    %c8_448 = arith.constant 8 : index
    %c0_449 = arith.constant 0 : index
    %492 = vector.load %arg6[%c8_448, %c0_449] : memref<32x17xf32, #tpu.memory_space<vmem>>, vector<8x17xf32>
    tpu.vector_store %arg6[%c8_448, %c0_449], %491 {strides = array<i32>} : memref<32x17xf32, #tpu.memory_space<vmem>>, vector<8x17xf32>,
    %c1_i32_450 = arith.constant 1 : i32
    %493 = arith.addi %484, %c1_i32_450 : i32
    %c0_451 = arith.constant 0 : index
    %494 = arith.index_cast %493 : i32 to index
    %c0_452 = arith.constant 0 : index
    %c0_453 = arith.constant 0 : index
    %495 = vector.load %arg2[%c0_451, %494, %c0_452, %c0_453] : memref<1x25x8x18xf32, #tpu.memory_space<vmem>>, vector<1x1x8x18xf32>
    %496 = vector.shape_cast %495 : vector<1x1x8x18xf32> to vector<8x18xf32>
    %497 = vector.extract_strided_slice %496 {offsets = [0, 0], sizes = [8, 17], strides = [1, 1]} : vector<8x18xf32> to vector<8x17xf32>
    %c16_454 = arith.constant 16 : index
    %c0_455 = arith.constant 0 : index
    %498 = vector.load %arg6[%c16_454, %c0_455] : memref<32x17xf32, #tpu.memory_space<vmem>>, vector<8x17xf32>
    tpu.vector_store %arg6[%c16_454, %c0_455], %497 {strides = array<i32>} : memref<32x17xf32, #tpu.memory_space<vmem>>, vector<8x17xf32>,
    %499 = vector.extract_strided_slice %496 {offsets = [0, 1], sizes = [8, 17], strides = [1, 1]} : vector<8x18xf32> to vector<8x17xf32>
    %c24_456 = arith.constant 24 : index
    %c0_457 = arith.constant 0 : index
    %500 = vector.load %arg6[%c24_456, %c0_457] : memref<32x17xf32, #tpu.memory_space<vmem>>, vector<8x17xf32>
    tpu.vector_store %arg6[%c24_456, %c0_457], %499 {strides = array<i32>} : memref<32x17xf32, #tpu.memory_space<vmem>>, vector<8x17xf32>,
    %c0_458 = arith.constant 0 : index
    %c0_459 = arith.constant 0 : index
    %501 = vector.load %arg6[%c0_458, %c0_459] : memref<32x17xf32, #tpu.memory_space<vmem>>, vector<32x17xf32>
    %cst_460 = arith.constant dense<0.000000e+00> : vector<8x17xf32>
    %502 = tpu.matmul %2, %501, %cst_460 {dimension_numbers = #tpu.dot_dimension_numbers<[1], [0], [0], [1], [0, 0, 1, 1], [], []>} : vector<8x32xf32>, vector<32x17xf32>, vector<8x17xf32> -> vector<8x17xf32>
    %503 = vector.broadcast %3 : vector<8x1xf32> to vector<8x17xf32>
    %504 = arith.addf %502, %503 : vector<8x17xf32>
    %c0_461 = arith.constant 0 : index
    %c20 = arith.constant 20 : index
    %c0_462 = arith.constant 0 : index
    %c0_463 = arith.constant 0 : index
    %505 = vector.load %arg5[%c0_461, %c20, %c0_462, %c0_463] : memref<1x24x8x17xf32, #tpu.memory_space<vmem>>, vector<1x1x8x17xf32>
    %506 = vector.shape_cast %505 : vector<1x1x8x17xf32> to vector<8x17xf32>
    %507 = vector.shape_cast %504 : vector<8x17xf32> to vector<1x1x8x17xf32>
    tpu.vector_store %arg5[%c0_461, %c20, %c0_462, %c0_463], %507 {strides = array<i32>} : memref<1x24x8x17xf32, #tpu.memory_space<vmem>>, vector<1x1x8x17xf32>,
    %c21_i32 = arith.constant 21 : i32
    %508 = arith.addi %1, %c21_i32 : i32
    %c0_i32_464 = arith.constant 0 : i32
    %509 = arith.addi %508, %c0_i32_464 : i32
    %c0_465 = arith.constant 0 : index
    %510 = arith.index_cast %509 : i32 to index
    %c0_466 = arith.constant 0 : index
    %c0_467 = arith.constant 0 : index
    %511 = vector.load %arg2[%c0_465, %510, %c0_466, %c0_467] : memref<1x25x8x18xf32, #tpu.memory_space<vmem>>, vector<1x1x8x18xf32>
    %512 = vector.shape_cast %511 : vector<1x1x8x18xf32> to vector<8x18xf32>
    %513 = vector.extract_strided_slice %512 {offsets = [0, 0], sizes = [8, 17], strides = [1, 1]} : vector<8x18xf32> to vector<8x17xf32>
    %c0_468 = arith.constant 0 : index
    %c0_469 = arith.constant 0 : index
    %514 = vector.load %arg6[%c0_468, %c0_469] : memref<32x17xf32, #tpu.memory_space<vmem>>, vector<8x17xf32>
    tpu.vector_store %arg6[%c0_468, %c0_469], %513 {strides = array<i32>} : memref<32x17xf32, #tpu.memory_space<vmem>>, vector<8x17xf32>,
    %515 = vector.extract_strided_slice %512 {offsets = [0, 1], sizes = [8, 17], strides = [1, 1]} : vector<8x18xf32> to vector<8x17xf32>
    %c8_470 = arith.constant 8 : index
    %c0_471 = arith.constant 0 : index
    %516 = vector.load %arg6[%c8_470, %c0_471] : memref<32x17xf32, #tpu.memory_space<vmem>>, vector<8x17xf32>
    tpu.vector_store %arg6[%c8_470, %c0_471], %515 {strides = array<i32>} : memref<32x17xf32, #tpu.memory_space<vmem>>, vector<8x17xf32>,
    %c1_i32_472 = arith.constant 1 : i32
    %517 = arith.addi %508, %c1_i32_472 : i32
    %c0_473 = arith.constant 0 : index
    %518 = arith.index_cast %517 : i32 to index
    %c0_474 = arith.constant 0 : index
    %c0_475 = arith.constant 0 : index
    %519 = vector.load %arg2[%c0_473, %518, %c0_474, %c0_475] : memref<1x25x8x18xf32, #tpu.memory_space<vmem>>, vector<1x1x8x18xf32>
    %520 = vector.shape_cast %519 : vector<1x1x8x18xf32> to vector<8x18xf32>
    %521 = vector.extract_strided_slice %520 {offsets = [0, 0], sizes = [8, 17], strides = [1, 1]} : vector<8x18xf32> to vector<8x17xf32>
    %c16_476 = arith.constant 16 : index
    %c0_477 = arith.constant 0 : index
    %522 = vector.load %arg6[%c16_476, %c0_477] : memref<32x17xf32, #tpu.memory_space<vmem>>, vector<8x17xf32>
    tpu.vector_store %arg6[%c16_476, %c0_477], %521 {strides = array<i32>} : memref<32x17xf32, #tpu.memory_space<vmem>>, vector<8x17xf32>,
    %523 = vector.extract_strided_slice %520 {offsets = [0, 1], sizes = [8, 17], strides = [1, 1]} : vector<8x18xf32> to vector<8x17xf32>
    %c24_478 = arith.constant 24 : index
    %c0_479 = arith.constant 0 : index
    %524 = vector.load %arg6[%c24_478, %c0_479] : memref<32x17xf32, #tpu.memory_space<vmem>>, vector<8x17xf32>
    tpu.vector_store %arg6[%c24_478, %c0_479], %523 {strides = array<i32>} : memref<32x17xf32, #tpu.memory_space<vmem>>, vector<8x17xf32>,
    %c0_480 = arith.constant 0 : index
    %c0_481 = arith.constant 0 : index
    %525 = vector.load %arg6[%c0_480, %c0_481] : memref<32x17xf32, #tpu.memory_space<vmem>>, vector<32x17xf32>
    %cst_482 = arith.constant dense<0.000000e+00> : vector<8x17xf32>
    %526 = tpu.matmul %2, %525, %cst_482 {dimension_numbers = #tpu.dot_dimension_numbers<[1], [0], [0], [1], [0, 0, 1, 1], [], []>} : vector<8x32xf32>, vector<32x17xf32>, vector<8x17xf32> -> vector<8x17xf32>
    %527 = vector.broadcast %3 : vector<8x1xf32> to vector<8x17xf32>
    %528 = arith.addf %526, %527 : vector<8x17xf32>
    %c0_483 = arith.constant 0 : index
    %c21 = arith.constant 21 : index
    %c0_484 = arith.constant 0 : index
    %c0_485 = arith.constant 0 : index
    %529 = vector.load %arg5[%c0_483, %c21, %c0_484, %c0_485] : memref<1x24x8x17xf32, #tpu.memory_space<vmem>>, vector<1x1x8x17xf32>
    %530 = vector.shape_cast %529 : vector<1x1x8x17xf32> to vector<8x17xf32>
    %531 = vector.shape_cast %528 : vector<8x17xf32> to vector<1x1x8x17xf32>
    tpu.vector_store %arg5[%c0_483, %c21, %c0_484, %c0_485], %531 {strides = array<i32>} : memref<1x24x8x17xf32, #tpu.memory_space<vmem>>, vector<1x1x8x17xf32>,
    %c22_i32 = arith.constant 22 : i32
    %532 = arith.addi %1, %c22_i32 : i32
    %c0_i32_486 = arith.constant 0 : i32
    %533 = arith.addi %532, %c0_i32_486 : i32
    %c0_487 = arith.constant 0 : index
    %534 = arith.index_cast %533 : i32 to index
    %c0_488 = arith.constant 0 : index
    %c0_489 = arith.constant 0 : index
    %535 = vector.load %arg2[%c0_487, %534, %c0_488, %c0_489] : memref<1x25x8x18xf32, #tpu.memory_space<vmem>>, vector<1x1x8x18xf32>
    %536 = vector.shape_cast %535 : vector<1x1x8x18xf32> to vector<8x18xf32>
    %537 = vector.extract_strided_slice %536 {offsets = [0, 0], sizes = [8, 17], strides = [1, 1]} : vector<8x18xf32> to vector<8x17xf32>
    %c0_490 = arith.constant 0 : index
    %c0_491 = arith.constant 0 : index
    %538 = vector.load %arg6[%c0_490, %c0_491] : memref<32x17xf32, #tpu.memory_space<vmem>>, vector<8x17xf32>
    tpu.vector_store %arg6[%c0_490, %c0_491], %537 {strides = array<i32>} : memref<32x17xf32, #tpu.memory_space<vmem>>, vector<8x17xf32>,
    %539 = vector.extract_strided_slice %536 {offsets = [0, 1], sizes = [8, 17], strides = [1, 1]} : vector<8x18xf32> to vector<8x17xf32>
    %c8_492 = arith.constant 8 : index
    %c0_493 = arith.constant 0 : index
    %540 = vector.load %arg6[%c8_492, %c0_493] : memref<32x17xf32, #tpu.memory_space<vmem>>, vector<8x17xf32>
    tpu.vector_store %arg6[%c8_492, %c0_493], %539 {strides = array<i32>} : memref<32x17xf32, #tpu.memory_space<vmem>>, vector<8x17xf32>,
    %c1_i32_494 = arith.constant 1 : i32
    %541 = arith.addi %532, %c1_i32_494 : i32
    %c0_495 = arith.constant 0 : index
    %542 = arith.index_cast %541 : i32 to index
    %c0_496 = arith.constant 0 : index
    %c0_497 = arith.constant 0 : index
    %543 = vector.load %arg2[%c0_495, %542, %c0_496, %c0_497] : memref<1x25x8x18xf32, #tpu.memory_space<vmem>>, vector<1x1x8x18xf32>
    %544 = vector.shape_cast %543 : vector<1x1x8x18xf32> to vector<8x18xf32>
    %545 = vector.extract_strided_slice %544 {offsets = [0, 0], sizes = [8, 17], strides = [1, 1]} : vector<8x18xf32> to vector<8x17xf32>
    %c16_498 = arith.constant 16 : index
    %c0_499 = arith.constant 0 : index
    %546 = vector.load %arg6[%c16_498, %c0_499] : memref<32x17xf32, #tpu.memory_space<vmem>>, vector<8x17xf32>
    tpu.vector_store %arg6[%c16_498, %c0_499], %545 {strides = array<i32>} : memref<32x17xf32, #tpu.memory_space<vmem>>, vector<8x17xf32>,
    %547 = vector.extract_strided_slice %544 {offsets = [0, 1], sizes = [8, 17], strides = [1, 1]} : vector<8x18xf32> to vector<8x17xf32>
    %c24_500 = arith.constant 24 : index
    %c0_501 = arith.constant 0 : index
    %548 = vector.load %arg6[%c24_500, %c0_501] : memref<32x17xf32, #tpu.memory_space<vmem>>, vector<8x17xf32>
    tpu.vector_store %arg6[%c24_500, %c0_501], %547 {strides = array<i32>} : memref<32x17xf32, #tpu.memory_space<vmem>>, vector<8x17xf32>,
    %c0_502 = arith.constant 0 : index
    %c0_503 = arith.constant 0 : index
    %549 = vector.load %arg6[%c0_502, %c0_503] : memref<32x17xf32, #tpu.memory_space<vmem>>, vector<32x17xf32>
    %cst_504 = arith.constant dense<0.000000e+00> : vector<8x17xf32>
    %550 = tpu.matmul %2, %549, %cst_504 {dimension_numbers = #tpu.dot_dimension_numbers<[1], [0], [0], [1], [0, 0, 1, 1], [], []>} : vector<8x32xf32>, vector<32x17xf32>, vector<8x17xf32> -> vector<8x17xf32>
    %551 = vector.broadcast %3 : vector<8x1xf32> to vector<8x17xf32>
    %552 = arith.addf %550, %551 : vector<8x17xf32>
    %c0_505 = arith.constant 0 : index
    %c22 = arith.constant 22 : index
    %c0_506 = arith.constant 0 : index
    %c0_507 = arith.constant 0 : index
    %553 = vector.load %arg5[%c0_505, %c22, %c0_506, %c0_507] : memref<1x24x8x17xf32, #tpu.memory_space<vmem>>, vector<1x1x8x17xf32>
    %554 = vector.shape_cast %553 : vector<1x1x8x17xf32> to vector<8x17xf32>
    %555 = vector.shape_cast %552 : vector<8x17xf32> to vector<1x1x8x17xf32>
    tpu.vector_store %arg5[%c0_505, %c22, %c0_506, %c0_507], %555 {strides = array<i32>} : memref<1x24x8x17xf32, #tpu.memory_space<vmem>>, vector<1x1x8x17xf32>,
    %c23_i32 = arith.constant 23 : i32
    %556 = arith.addi %1, %c23_i32 : i32
    %c0_i32_508 = arith.constant 0 : i32
    %557 = arith.addi %556, %c0_i32_508 : i32
    %c0_509 = arith.constant 0 : index
    %558 = arith.index_cast %557 : i32 to index
    %c0_510 = arith.constant 0 : index
    %c0_511 = arith.constant 0 : index
    %559 = vector.load %arg2[%c0_509, %558, %c0_510, %c0_511] : memref<1x25x8x18xf32, #tpu.memory_space<vmem>>, vector<1x1x8x18xf32>
    %560 = vector.shape_cast %559 : vector<1x1x8x18xf32> to vector<8x18xf32>
    %561 = vector.extract_strided_slice %560 {offsets = [0, 0], sizes = [8, 17], strides = [1, 1]} : vector<8x18xf32> to vector<8x17xf32>
    %c0_512 = arith.constant 0 : index
    %c0_513 = arith.constant 0 : index
    %562 = vector.load %arg6[%c0_512, %c0_513] : memref<32x17xf32, #tpu.memory_space<vmem>>, vector<8x17xf32>
    tpu.vector_store %arg6[%c0_512, %c0_513], %561 {strides = array<i32>} : memref<32x17xf32, #tpu.memory_space<vmem>>, vector<8x17xf32>,
    %563 = vector.extract_strided_slice %560 {offsets = [0, 1], sizes = [8, 17], strides = [1, 1]} : vector<8x18xf32> to vector<8x17xf32>
    %c8_514 = arith.constant 8 : index
    %c0_515 = arith.constant 0 : index
    %564 = vector.load %arg6[%c8_514, %c0_515] : memref<32x17xf32, #tpu.memory_space<vmem>>, vector<8x17xf32>
    tpu.vector_store %arg6[%c8_514, %c0_515], %563 {strides = array<i32>} : memref<32x17xf32, #tpu.memory_space<vmem>>, vector<8x17xf32>,
    %c1_i32_516 = arith.constant 1 : i32
    %565 = arith.addi %556, %c1_i32_516 : i32
    %c0_517 = arith.constant 0 : index
    %566 = arith.index_cast %565 : i32 to index
    %c0_518 = arith.constant 0 : index
    %c0_519 = arith.constant 0 : index
    %567 = vector.load %arg2[%c0_517, %566, %c0_518, %c0_519] : memref<1x25x8x18xf32, #tpu.memory_space<vmem>>, vector<1x1x8x18xf32>
    %568 = vector.shape_cast %567 : vector<1x1x8x18xf32> to vector<8x18xf32>
    %569 = vector.extract_strided_slice %568 {offsets = [0, 0], sizes = [8, 17], strides = [1, 1]} : vector<8x18xf32> to vector<8x17xf32>
    %c16_520 = arith.constant 16 : index
    %c0_521 = arith.constant 0 : index
    %570 = vector.load %arg6[%c16_520, %c0_521] : memref<32x17xf32, #tpu.memory_space<vmem>>, vector<8x17xf32>
    tpu.vector_store %arg6[%c16_520, %c0_521], %569 {strides = array<i32>} : memref<32x17xf32, #tpu.memory_space<vmem>>, vector<8x17xf32>,
    %571 = vector.extract_strided_slice %568 {offsets = [0, 1], sizes = [8, 17], strides = [1, 1]} : vector<8x18xf32> to vector<8x17xf32>
    %c24_522 = arith.constant 24 : index
    %c0_523 = arith.constant 0 : index
    %572 = vector.load %arg6[%c24_522, %c0_523] : memref<32x17xf32, #tpu.memory_space<vmem>>, vector<8x17xf32>
    tpu.vector_store %arg6[%c24_522, %c0_523], %571 {strides = array<i32>} : memref<32x17xf32, #tpu.memory_space<vmem>>, vector<8x17xf32>,
    %c0_524 = arith.constant 0 : index
    %c0_525 = arith.constant 0 : index
    %573 = vector.load %arg6[%c0_524, %c0_525] : memref<32x17xf32, #tpu.memory_space<vmem>>, vector<32x17xf32>
    %cst_526 = arith.constant dense<0.000000e+00> : vector<8x17xf32>
    %574 = tpu.matmul %2, %573, %cst_526 {dimension_numbers = #tpu.dot_dimension_numbers<[1], [0], [0], [1], [0, 0, 1, 1], [], []>} : vector<8x32xf32>, vector<32x17xf32>, vector<8x17xf32> -> vector<8x17xf32>
    %575 = vector.broadcast %3 : vector<8x1xf32> to vector<8x17xf32>
    %576 = arith.addf %574, %575 : vector<8x17xf32>
    %c0_527 = arith.constant 0 : index
    %c23 = arith.constant 23 : index
    %c0_528 = arith.constant 0 : index
    %c0_529 = arith.constant 0 : index
    %577 = vector.load %arg5[%c0_527, %c23, %c0_528, %c0_529] : memref<1x24x8x17xf32, #tpu.memory_space<vmem>>, vector<1x1x8x17xf32>
    %578 = vector.shape_cast %577 : vector<1x1x8x17xf32> to vector<8x17xf32>
    %579 = vector.shape_cast %576 : vector<8x17xf32> to vector<1x1x8x17xf32>
    tpu.vector_store %arg5[%c0_527, %c23, %c0_528, %c0_529], %579 {strides = array<i32>} : memref<1x24x8x17xf32, #tpu.memory_space<vmem>>, vector<1x1x8x17xf32>,
    return
  }
  func.func @transform_0(%arg0: i32, %arg1: i32) -> (i32, i32, i32, i32) {
    %c0_i32 = arith.constant 0 : i32
    %c0_i32_0 = arith.constant 0 : i32
    %c0_i32_1 = arith.constant 0 : i32
    %c0_i32_2 = arith.constant 0 : i32
    return %arg0, %c0_i32, %c0_i32_0, %c0_i32_1 : i32, i32, i32, i32
  }
  func.func @transform_1(%arg0: i32, %arg1: i32) -> (i32, i32) {
    %c0_i32 = arith.constant 0 : i32
    %c0_i32_0 = arith.constant 0 : i32
    %c0_i32_1 = arith.constant 0 : i32
    return %c0_i32, %c0_i32_0 : i32, i32
  }
  func.func @transform_2(%arg0: i32, %arg1: i32) -> (i32, i32) {
    %c0_i32 = arith.constant 0 : i32
    %c0_i32_0 = arith.constant 0 : i32
    %c0_i32_1 = arith.constant 0 : i32
    return %c0_i32, %c0_i32_0 : i32, i32
  }
  func.func @transform_3(%arg0: i32, %arg1: i32) -> (i32, i32, i32, i32) {
    %c0_i32 = arith.constant 0 : i32
    %c0_i32_0 = arith.constant 0 : i32
    %c0_i32_1 = arith.constant 0 : i32
    return %arg0, %arg1, %c0_i32, %c0_i32_0 : i32, i32, i32, i32
  }
}

</mosaic_0001>

<llo_original>
// kernel: tpu_custom_call.1
$region0: #{tpu_custom_call.1}
  #allocation0 [shape = 'u32[]', space=smem, size = 0x4, offset = 0x4, fixed_abs, tag = 'smem constant byte address 0x4 - core index']
  #allocation1 [shape = 'u32[72,128]{1,0:T(1,128)}', space=vmem, size = 0x9000, scoped, tag = 'internal scratch']
  #allocation2 [shape = 'f32[32,17]{1,0:T(8,128)}', space=vmem, size = 0x4000, scoped, tag = 'scratch operand']
  %s0 = inlined_call_operand.vmem [shape: f32[2,25,8,18], index: 0, kind: input, shape index: {}]
  %s1 = inlined_call_operand.vmem [shape: f32[8,32], index: 1, kind: input, shape index: {}]
  %s2 = inlined_call_operand.vmem [shape: f32[8,1], index: 2, kind: input, shape index: {}]
  %s3 = inlined_call_operand.vmem [shape: f32[2,24,8,17], index: 3, kind: output, shape index: {}]
  %s4 = sld [smem:[#allocation0]]
  $region45: #{tpu_custom_call.1} parent=0
    _
  %s6 = ssub.s32 1, %s4
  %s7 = scalar_select 0, %s6, %s4
  loop: start=0, step=1, limit=4
  $region2: #{tpu_custom_call.1} parent=0 // loop_pre_header
    _
  $region3: #{tpu_custom_call.1} parent=0 // loop_header
    %s9 = sphi 0, %s13
    %p10 = scmp.ge.s32.totalorder %s9, 4
    %s16 = sphi 0, %s28
    %s17 = sphi 0, %s24
    %s18 = sphi 0, %s16
    %s19 = sphi 0, %s17
    %s20 = sphi 0, %s18
    %s21 = sphi 0, %s19
    %s31 = sphi 0, %s33
    %s34 = sphi 0, %s31
    %s35 = sphi 0, %s34
    %s51 = sphi 0, %s35
    %s55 = sphi 0, %s55
    %s57 = sphi 0, %s55
    %s58 = sphi 0, %s57
    %s72 = sphi 0, %s58
    %s76 = sphi 0, %s76
    %s78 = sphi 0, %s76
    %s79 = sphi 0, %s78
    %s93 = sphi 0, %s79
    %s101 = sphi 0, %s103
    %s104 = sphi 0, %s101
    %s105 = sphi 0, %s104
    %s121 = sphi 0, %s105
  $region4: #{tpu_custom_call.1} parent=0 // loop_header_branch
    %12 = sbr.rel (%p10) target = $region8
  $region5: #{tpu_custom_call.1} parent=0 // loop_body
    %s14 = ssub.s32 %s9, 1
    %s15 = ssub.s32 %s9, 2
    %s22 = sadd.s32 1, %s17
    %p23 = scmp.ge.s32.totalorder %s22, 1
    %s24 = scalar_select %p23, 0, %s22
    %s25 = sadd.s32 1, %s16
    %s26 = scalar_select %p23, %s25, %s16
    %p27 = scmp.ge.s32.totalorder %s26, 2
    %s28 = scalar_select %p27, 0, %s26
    %s29 = ssub.s32 %s16, %s28
    %p30 = scmp.eq.s32.totalorder %s29, 0
    %s32 = sadd.s32 %s31, 1
    %s33 = scalar_select %p30, %s31, %s32
    %p36 = pneg %p30
    %p37 = scmp.eq.s32.totalorder %s9, 1
    %p38 = por %p36, %p37
    %p39 = scmp.ne.s32.totalorder %s31, %s34
    %p40 = scmp.eq.s32.totalorder %s9, 0
    %p41 = por %p39, %p40
    %p42 = scmp.ne.s32.totalorder %s31, %s34
    %p43 = scmp.eq.s32.totalorder %s14, 1
    %p44 = por %p42, %p43
    %p45 = scmp.ne.s32.totalorder %s34, %s35
    %p46 = scmp.eq.s32.totalorder %s14, 0
    %p47 = por %p45, %p46
    %p48 = scmp.ne.s32.totalorder %s34, %s35
    %p49 = scmp.eq.s32.totalorder %s15, 1
    %p50 = por %p48, %p49
    %p52 = scmp.ne.s32.totalorder %s35, %s51
    %p53 = scmp.eq.s32.totalorder %s15, 0
    %p54 = por %p52, %p53
    %s56 = sadd.s32 %s55, 1
    %p59 = scmp.eq.s32.totalorder %s9, 1
    %p60 = scmp.ne.s32.totalorder %s55, %s57
    %p61 = scmp.eq.s32.totalorder %s9, 0
    %p62 = por %p60, %p61
    %p63 = scmp.ne.s32.totalorder %s55, %s57
    %p64 = scmp.eq.s32.totalorder %s14, 1
    %p65 = por %p63, %p64
    %p66 = scmp.ne.s32.totalorder %s57, %s58
    %p67 = scmp.eq.s32.totalorder %s14, 0
    %p68 = por %p66, %p67
    %p69 = scmp.ne.s32.totalorder %s57, %s58
    %p70 = scmp.eq.s32.totalorder %s15, 1
    %p71 = por %p69, %p70
    %p73 = scmp.ne.s32.totalorder %s58, %s72
    %p74 = scmp.eq.s32.totalorder %s15, 0
    %p75 = por %p73, %p74
    %s77 = sadd.s32 %s76, 1
    %p80 = scmp.eq.s32.totalorder %s9, 1
    %p81 = scmp.ne.s32.totalorder %s76, %s78
    %p82 = scmp.eq.s32.totalorder %s9, 0
    %p83 = por %p81, %p82
    %p84 = scmp.ne.s32.totalorder %s76, %s78
    %p85 = scmp.eq.s32.totalorder %s14, 1
    %p86 = por %p84, %p85
    %p87 = scmp.ne.s32.totalorder %s78, %s79
    %p88 = scmp.eq.s32.totalorder %s14, 0
    %p89 = por %p87, %p88
    %p90 = scmp.ne.s32.totalorder %s78, %s79
    %p91 = scmp.eq.s32.totalorder %s15, 1
    %p92 = por %p90, %p91
    %p94 = scmp.ne.s32.totalorder %s79, %s93
    %p95 = scmp.eq.s32.totalorder %s15, 0
    %p96 = por %p94, %p95
    %s97 = ssub.s32 %s16, %s28
    %s98 = ssub.s32 %s17, %s24
    %s99 = sor.u32 %s97, %s98
    %p100 = scmp.eq.s32.totalorder %s99, 0
    %s102 = sadd.s32 %s101, 1
    %s103 = scalar_select %p100, %s101, %s102
    %p106 = pneg %p100
    %p107 = scmp.eq.s32.totalorder %s9, 1
    %p108 = por %p106, %p107
    %p109 = scmp.ne.s32.totalorder %s101, %s104
    %p110 = scmp.eq.s32.totalorder %s9, 0
    %p111 = por %p109, %p110
    %p112 = scmp.ne.s32.totalorder %s101, %s104
    %p113 = scmp.eq.s32.totalorder %s14, 1
    %p114 = por %p112, %p113
    %p115 = scmp.ne.s32.totalorder %s104, %s105
    %p116 = scmp.eq.s32.totalorder %s14, 0
    %p117 = por %p115, %p116
    %p118 = scmp.ne.s32.totalorder %s104, %s105
    %p119 = scmp.eq.s32.totalorder %s15, 1
    %p120 = por %p118, %p119
    %p122 = scmp.ne.s32.totalorder %s105, %s121
    %p123 = scmp.eq.s32.totalorder %s15, 0
    %p124 = por %p122, %p123
    %p125 = scmp.le.s32.totalorder 1, %s9
    %p126 = scmp.lt.s32.totalorder %s9, 3
    %p127 = pnand %p125, %p126
    %p128 = pneg %p127
    // Predicated region
    $region9: #{tpu_custom_call.1} parent=5 // pred_check
      _
    $region10: #{tpu_custom_call.1} parent=5 // pred_check_branch
      %130 = sbr.rel (%p127) target = $region12
    $region11: #{tpu_custom_call.1} parent=5 // pred_region
      %s131 = ssub.s32 %s9, 1
      // Predicated region
      $region13: #{tpu_custom_call.1} parent=11 // pred_check
        %p132 = pneg %p68
      $region14: #{tpu_custom_call.1} parent=11 // pred_check_branch
        %134 = sbr.rel (%p132) target = $region16
      $region15: #{tpu_custom_call.1} parent=11 // pred_region
        _
      $region16: #{tpu_custom_call.1} parent=11 // pred_fallthru
        _
      // Predicated region
      $region17: #{tpu_custom_call.1} parent=11 // pred_check
        %p135 = pneg %p89
      $region18: #{tpu_custom_call.1} parent=11 // pred_check_branch
        %137 = sbr.rel (%p135) target = $region20
      $region19: #{tpu_custom_call.1} parent=11 // pred_region
        _
      $region20: #{tpu_custom_call.1} parent=11 // pred_fallthru
        _
    $region12: #{tpu_custom_call.1} parent=5 // pred_fallthru
      _
    %p138 = scmp.lt.s32.totalorder %s9, 2
    // Predicated region
    $region21: #{tpu_custom_call.1} parent=5 // pred_check
      %p139 = pneg %p138
    $region22: #{tpu_custom_call.1} parent=5 // pred_check_branch
      %141 = sbr.rel (%p139) target = $region24
    $region23: #{tpu_custom_call.1} parent=5 // pred_region
      // Predicated region
      $region25: #{tpu_custom_call.1} parent=23 // pred_check
        %p142 = pneg %p41
      $region26: #{tpu_custom_call.1} parent=23 // pred_check_branch
        %144 = sbr.rel (%p142) target = $region28
      $region27: #{tpu_custom_call.1} parent=23 // pred_region
        %p145 = scmp.lt.s32.totalorder %s16, 1
        %s146 = scalar_select %p145, %s16, 1
        %s147 = smul.addr %s146, 25
        %s148 = smul.addr %s147, 8
        %s149 = scalar_lea.vmem %s0, %s148
      $region28: #{tpu_custom_call.1} parent=23 // pred_fallthru
        _
    $region24: #{tpu_custom_call.1} parent=5 // pred_fallthru
      _
    %p150 = scmp.le.s32.totalorder 1, %s9
    %p151 = scmp.lt.s32.totalorder %s9, 3
    %p152 = pnand %p150, %p151
    %p153 = pneg %p152
    // Predicated region
    $region29: #{tpu_custom_call.1} parent=5 // pred_check
      _
    $region30: #{tpu_custom_call.1} parent=5 // pred_check_branch
      %155 = sbr.rel (%p152) target = $region32
    $region31: #{tpu_custom_call.1} parent=5 // pred_region
      %s156 = ssub.s32 %s9, 1
      %p157 = scmp.lt.s32.totalorder %s18, 1
      %s158 = scalar_select %p157, %s18, 1
      %s159 = smul.addr %s158, 25
      %s160 = smul.addr %s159, 8
      %s161 = scalar_lea.vmem %s0, %s160
      %p162 = pneg %p47
      %p163 = pneg %p44
      %p164 = pneg %p68
      %p165 = pneg %p65
      %p166 = pneg %p89
      %p167 = pneg %p86
      %p168 = pneg %p117
      %p169 = pneg %p114
      %s170 = smul.u32 24, %s19
      %p171 = scmp.lt.s32.totalorder %s18, 1
      %s172 = scalar_select %p171, %s18, 1
      %p173 = scmp.lt.s32.totalorder %s170, 23
      %s174 = scalar_select %p173, %s170, 23
      %s175 = smul.addr %s172, 24
      %s176 = sadd.s32 %s174, %s175
      %s177 = smul.addr %s176, 8
      %s178 = scalar_lea.vmem %s3, %s177
      %p179 = scmp.lt.s32.totalorder %s18, 1
      %s180 = scalar_select %p179, %s18, 1
      %s181 = smul.addr %s180, 25
      %s182 = smul.addr %s181, 8
      %s183 = scalar_lea.vmem %s0, %s182
      %s184 = smul.u32 24, %s19
      %p185 = scmp.lt.s32.totalorder %s18, 1
      %s186 = scalar_select %p185, %s18, 1
      %p187 = scmp.lt.s32.totalorder %s184, 23
      %s188 = scalar_select %p187, %s184, 23
      %s189 = smul.addr %s186, 24
      %s190 = sadd.s32 %s188, %s189
      %s191 = smul.addr %s190, 8
      %s192 = scalar_lea.vmem %s3, %s191
      %s193 = smul.u32 24, %s19
      %s194 = smul.u32 %s19, 24
      %v195 = vld [vmem:[%s1] sm:$0xff]
      %v196 = vld [vmem:[%s2] sm:$0xff]
      %s197 = smul.u32 %s194, 8
      %s198 = scalar_lea.vmem %s183, %s197
      %v199 = vld [vmem:[%s198] sm:$0xff]
      %vm200 = vcmask 138240
      %201 = vst.msk [vmem:[#allocation2] sm:$0xff] %vm200, %v199
      %203 = vrot.lane.b32.xlu0 %v199, 127
      %v204 = vpop.permute.xlu0 %203
      %206 = vst.msk [vmem:[#allocation2 + $0x8] sm:$0xff] %vm200, %v204
      %s207 = sadd.s32 %s194, 1
      %s208 = smul.u32 %s207, 8
      %s209 = scalar_lea.vmem %s183, %s208
      %v210 = vld [vmem:[%s209] sm:$0xff]
      %211 = vst.msk [vmem:[#allocation2 + $0x10] sm:$0xff] %vm200, %v210
      %213 = vrot.lane.b32.xlu0 %v210, 127
      %v214 = vpop.permute.xlu0 %213
      %216 = vst.msk [vmem:[#allocation2 + $0x18] sm:$0xff] %vm200, %v214
      %v217 = vld [vmem:[#allocation2] sm:$0xff]
      %v218 = vld [vmem:[#allocation2 + $0x8] sm:$0xff]
      %v219 = vld [vmem:[#allocation2 + $0x10] sm:$0xff]
      %v220 = vld [vmem:[#allocation2 + $0x18] sm:$0xff]
      %222 = vset.pattern.permute.xlu0 0
      %223 = vperm.xlu0 %222, %v196
      %v224 = vpop.permute.xlu0 %223
      %vm226 = vcmask 261120
      %v228 = vsel %vm226, %v195, 0
      %230 = vmatpush.msra.mxu0 0.0
      %231 = vmatpush.msra.mxu0 0.0
      %232 = vmatpush.msra.mxu0 0.0
      %233 = vmatpush.msra.mxu0 0.0
      %234 = vmatpush.msra.mxu0 0.0
      %235 = vmatpush.msra.mxu0 0.0
      %236 = vmatpush.msra.mxu0 0.0
      %237 = vmatpush.msra.mxu0 0.0
      %238 = vmatpush.msra.mxu0 0.0
      %239 = vmatpush.msra.mxu0 0.0
      %240 = vmatpush.msra.mxu0 0.0
      %241 = vmatpush.msra.mxu0 0.0
      %242 = vmatpush.msra.mxu0 %v220
      %243 = vmatpush.msra.mxu0 %v219
      %244 = vmatpush.msra.mxu0 %v218
      %245 = vmatpush.msra.mxu0 %v217
      %246 = vmatmul.f32.gmra.mxu0 %v228
      %v247 = vpop.f32.mrf.mxu0
      %v248 = vadd.f32 %v224, %v247
      %249 = vdwg.mxu0
      %250 = vst.msk [vmem:[%s192] sm:$0xff] %vm200, %v248
      %v251 = vld [vmem:[%s209] sm:$0xff]
      %252 = vst.msk [vmem:[#allocation2] sm:$0xff] %vm200, %v251
      %254 = vrot.lane.b32.xlu0 %v251, 127
      %v255 = vpop.permute.xlu0 %254
      %257 = vst.msk [vmem:[#allocation2 + $0x8] sm:$0xff] %vm200, %v255
      %s258 = sadd.s32 %s194, 2
      %s259 = smul.u32 %s258, 8
      %s260 = scalar_lea.vmem %s183, %s259
      %v261 = vld [vmem:[%s260] sm:$0xff]
      %262 = vst.msk [vmem:[#allocation2 + $0x10] sm:$0xff] %vm200, %v261
      %264 = vrot.lane.b32.xlu0 %v261, 127
      %v265 = vpop.permute.xlu0 %264
      %267 = vst.msk [vmem:[#allocation2 + $0x18] sm:$0xff] %vm200, %v265
      %v268 = vld [vmem:[#allocation2] sm:$0xff]
      %v269 = vld [vmem:[#allocation2 + $0x8] sm:$0xff]
      %v270 = vld [vmem:[#allocation2 + $0x10] sm:$0xff]
      %v271 = vld [vmem:[#allocation2 + $0x18] sm:$0xff]
      %272 = vmatpush.msra.mxu0 0.0
      %273 = vmatpush.msra.mxu0 0.0
      %274 = vmatpush.msra.mxu0 0.0
      %275 = vmatpush.msra.mxu0 0.0
      %276 = vmatpush.msra.mxu0 0.0
      %277 = vmatpush.msra.mxu0 0.0
      %278 = vmatpush.msra.mxu0 0.0
      %279 = vmatpush.msra.mxu0 0.0
      %280 = vmatpush.msra.mxu0 0.0
      %281 = vmatpush.msra.mxu0 0.0
      %282 = vmatpush.msra.mxu0 0.0
      %283 = vmatpush.msra.mxu0 0.0
      %284 = vmatpush.msra.mxu0 %v271
      %285 = vmatpush.msra.mxu0 %v270
      %286 = vmatpush.msra.mxu0 %v269
      %287 = vmatpush.msra.mxu0 %v268
      %288 = vmatmul.f32.gmra.mxu0 %v228
      %v289 = vpop.f32.mrf.mxu0
      %v290 = vadd.f32 %v224, %v289
      %291 = vdwg.mxu0
      %s292 = scalar_lea.vmem %s192, 8
      %293 = vst.msk [vmem:[%s292] sm:$0xff] %vm200, %v290
      %v294 = vld [vmem:[%s260] sm:$0xff]
      %295 = vst.msk [vmem:[#allocation2] sm:$0xff] %vm200, %v294
      %297 = vrot.lane.b32.xlu0 %v294, 127
      %v298 = vpop.permute.xlu0 %297
      %300 = vst.msk [vmem:[#allocation2 + $0x8] sm:$0xff] %vm200, %v298
      %s301 = sadd.s32 %s194, 3
      %s302 = smul.u32 %s301, 8
      %s303 = scalar_lea.vmem %s183, %s302
      %v304 = vld [vmem:[%s303] sm:$0xff]
      %305 = vst.msk [vmem:[#allocation2 + $0x10] sm:$0xff] %vm200, %v304
      %307 = vrot.lane.b32.xlu0 %v304, 127
      %v308 = vpop.permute.xlu0 %307
      %310 = vst.msk [vmem:[#allocation2 + $0x18] sm:$0xff] %vm200, %v308
      %v311 = vld [vmem:[#allocation2] sm:$0xff]
      %v312 = vld [vmem:[#allocation2 + $0x8] sm:$0xff]
      %v313 = vld [vmem:[#allocation2 + $0x10] sm:$0xff]
      %v314 = vld [vmem:[#allocation2 + $0x18] sm:$0xff]
      %315 = vmatpush.msra.mxu0 0.0
      %316 = vmatpush.msra.mxu0 0.0
      %317 = vmatpush.msra.mxu0 0.0
      %318 = vmatpush.msra.mxu0 0.0
      %319 = vmatpush.msra.mxu0 0.0
      %320 = vmatpush.msra.mxu0 0.0
      %321 = vmatpush.msra.mxu0 0.0
      %322 = vmatpush.msra.mxu0 0.0
      %323 = vmatpush.msra.mxu0 0.0
      %324 = vmatpush.msra.mxu0 0.0
      %325 = vmatpush.msra.mxu0 0.0
      %326 = vmatpush.msra.mxu0 0.0
      %327 = vmatpush.msra.mxu0 %v314
      %328 = vmatpush.msra.mxu0 %v313
      %329 = vmatpush.msra.mxu0 %v312
      %330 = vmatpush.msra.mxu0 %v311
      %331 = vmatmul.f32.gmra.mxu0 %v228
      %v332 = vpop.f32.mrf.mxu0
      %v333 = vadd.f32 %v224, %v332
      %334 = vdwg.mxu0
      %s335 = scalar_lea.vmem %s192, 16
      %336 = vst.msk [vmem:[%s335] sm:$0xff] %vm200, %v333
      %v337 = vld [vmem:[%s303] sm:$0xff]
      %338 = vst.msk [vmem:[#allocation2] sm:$0xff] %vm200, %v337
      %340 = vrot.lane.b32.xlu0 %v337, 127
      %v341 = vpop.permute.xlu0 %340
      %343 = vst.msk [vmem:[#allocation2 + $0x8] sm:$0xff] %vm200, %v341
      %s344 = sadd.s32 %s194, 4
      %s345 = smul.u32 %s344, 8
      %s346 = scalar_lea.vmem %s183, %s345
      %v347 = vld [vmem:[%s346] sm:$0xff]
      %348 = vst.msk [vmem:[#allocation2 + $0x10] sm:$0xff] %vm200, %v347
      %350 = vrot.lane.b32.xlu0 %v347, 127
      %v351 = vpop.permute.xlu0 %350
      %353 = vst.msk [vmem:[#allocation2 + $0x18] sm:$0xff] %vm200, %v351
      %v354 = vld [vmem:[#allocation2] sm:$0xff]
      %v355 = vld [vmem:[#allocation2 + $0x8] sm:$0xff]
      %v356 = vld [vmem:[#allocation2 + $0x10] sm:$0xff]
      %v357 = vld [vmem:[#allocation2 + $0x18] sm:$0xff]
      %358 = vmatpush.msra.mxu0 0.0
      %359 = vmatpush.msra.mxu0 0.0
      %360 = vmatpush.msra.mxu0 0.0
      %361 = vmatpush.msra.mxu0 0.0
      %362 = vmatpush.msra.mxu0 0.0
      %363 = vmatpush.msra.mxu0 0.0
      %364 = vmatpush.msra.mxu0 0.0
      %365 = vmatpush.msra.mxu0 0.0
      %366 = vmatpush.msra.mxu0 0.0
      %367 = vmatpush.msra.mxu0 0.0
      %368 = vmatpush.msra.mxu0 0.0
      %369 = vmatpush.msra.mxu0 0.0
      %370 = vmatpush.msra.mxu0 %v357
      %371 = vmatpush.msra.mxu0 %v356
      %372 = vmatpush.msra.mxu0 %v355
      %373 = vmatpush.msra.mxu0 %v354
      %374 = vmatmul.f32.gmra.mxu0 %v228
      %v375 = vpop.f32.mrf.mxu0
      %v376 = vadd.f32 %v224, %v375
      %377 = vdwg.mxu0
      %s378 = scalar_lea.vmem %s192, 24
      %379 = vst.msk [vmem:[%s378] sm:$0xff] %vm200, %v376
      %v380 = vld [vmem:[%s346] sm:$0xff]
      %381 = vst.msk [vmem:[#allocation2] sm:$0xff] %vm200, %v380
      %383 = vrot.lane.b32.xlu0 %v380, 127
      %v384 = vpop.permute.xlu0 %383
      %386 = vst.msk [vmem:[#allocation2 + $0x8] sm:$0xff] %vm200, %v384
      %s387 = sadd.s32 %s194, 5
      %s388 = smul.u32 %s387, 8
      %s389 = scalar_lea.vmem %s183, %s388
      %v390 = vld [vmem:[%s389] sm:$0xff]
      %391 = vst.msk [vmem:[#allocation2 + $0x10] sm:$0xff] %vm200, %v390
      %393 = vrot.lane.b32.xlu0 %v390, 127
      %v394 = vpop.permute.xlu0 %393
      %396 = vst.msk [vmem:[#allocation2 + $0x18] sm:$0xff] %vm200, %v394
      %v397 = vld [vmem:[#allocation2] sm:$0xff]
      %v398 = vld [vmem:[#allocation2 + $0x8] sm:$0xff]
      %v399 = vld [vmem:[#allocation2 + $0x10] sm:$0xff]
      %v400 = vld [vmem:[#allocation2 + $0x18] sm:$0xff]
      %401 = vmatpush.msra.mxu0 0.0
      %402 = vmatpush.msra.mxu0 0.0
      %403 = vmatpush.msra.mxu0 0.0
      %404 = vmatpush.msra.mxu0 0.0
      %405 = vmatpush.msra.mxu0 0.0
      %406 = vmatpush.msra.mxu0 0.0
      %407 = vmatpush.msra.mxu0 0.0
      %408 = vmatpush.msra.mxu0 0.0
      %409 = vmatpush.msra.mxu0 0.0
      %410 = vmatpush.msra.mxu0 0.0
      %411 = vmatpush.msra.mxu0 0.0
      %412 = vmatpush.msra.mxu0 0.0
      %413 = vmatpush.msra.mxu0 %v400
      %414 = vmatpush.msra.mxu0 %v399
      %415 = vmatpush.msra.mxu0 %v398
      %416 = vmatpush.msra.mxu0 %v397
      %417 = vmatmul.f32.gmra.mxu0 %v228
      %v418 = vpop.f32.mrf.mxu0
      %v419 = vadd.f32 %v224, %v418
      %420 = vdwg.mxu0
      %s421 = scalar_lea.vmem %s192, 32
      %422 = vst.msk [vmem:[%s421] sm:$0xff] %vm200, %v419
      %v423 = vld [vmem:[%s389] sm:$0xff]
      %424 = vst.msk [vmem:[#allocation2] sm:$0xff] %vm200, %v423
      %426 = vrot.lane.b32.xlu0 %v423, 127
      %v427 = vpop.permute.xlu0 %426
      %429 = vst.msk [vmem:[#allocation2 + $0x8] sm:$0xff] %vm200, %v427
      %s430 = sadd.s32 %s194, 6
      %s431 = smul.u32 %s430, 8
      %s432 = scalar_lea.vmem %s183, %s431
      %v433 = vld [vmem:[%s432] sm:$0xff]
      %434 = vst.msk [vmem:[#allocation2 + $0x10] sm:$0xff] %vm200, %v433
      %436 = vrot.lane.b32.xlu0 %v433, 127
      %v437 = vpop.permute.xlu0 %436
      %439 = vst.msk [vmem:[#allocation2 + $0x18] sm:$0xff] %vm200, %v437
      %v440 = vld [vmem:[#allocation2] sm:$0xff]
      %v441 = vld [vmem:[#allocation2 + $0x8] sm:$0xff]
      %v442 = vld [vmem:[#allocation2 + $0x10] sm:$0xff]
      %v443 = vld [vmem:[#allocation2 + $0x18] sm:$0xff]
      %444 = vmatpush.msra.mxu0 0.0
      %445 = vmatpush.msra.mxu0 0.0
      %446 = vmatpush.msra.mxu0 0.0
      %447 = vmatpush.msra.mxu0 0.0
      %448 = vmatpush.msra.mxu0 0.0
      %449 = vmatpush.msra.mxu0 0.0
      %450 = vmatpush.msra.mxu0 0.0
      %451 = vmatpush.msra.mxu0 0.0
      %452 = vmatpush.msra.mxu0 0.0
      %453 = vmatpush.msra.mxu0 0.0
      %454 = vmatpush.msra.mxu0 0.0
      %455 = vmatpush.msra.mxu0 0.0
      %456 = vmatpush.msra.mxu0 %v443
      %457 = vmatpush.msra.mxu0 %v442
      %458 = vmatpush.msra.mxu0 %v441
      %459 = vmatpush.msra.mxu0 %v440
      %460 = vmatmul.f32.gmra.mxu0 %v228
      %v461 = vpop.f32.mrf.mxu0
      %v462 = vadd.f32 %v224, %v461
      %463 = vdwg.mxu0
      %s464 = scalar_lea.vmem %s192, 40
      %465 = vst.msk [vmem:[%s464] sm:$0xff] %vm200, %v462
      %v466 = vld [vmem:[%s432] sm:$0xff]
      %467 = vst.msk [vmem:[#allocation2] sm:$0xff] %vm200, %v466
      %469 = vrot.lane.b32.xlu0 %v466, 127
      %v470 = vpop.permute.xlu0 %469
      %472 = vst.msk [vmem:[#allocation2 + $0x8] sm:$0xff] %vm200, %v470
      %s473 = sadd.s32 %s194, 7
      %s474 = smul.u32 %s473, 8
      %s475 = scalar_lea.vmem %s183, %s474
      %v476 = vld [vmem:[%s475] sm:$0xff]
      %477 = vst.msk [vmem:[#allocation2 + $0x10] sm:$0xff] %vm200, %v476
      %479 = vrot.lane.b32.xlu0 %v476, 127
      %v480 = vpop.permute.xlu0 %479
      %482 = vst.msk [vmem:[#allocation2 + $0x18] sm:$0xff] %vm200, %v480
      %v483 = vld [vmem:[#allocation2] sm:$0xff]
      %v484 = vld [vmem:[#allocation2 + $0x8] sm:$0xff]
      %v485 = vld [vmem:[#allocation2 + $0x10] sm:$0xff]
      %v486 = vld [vmem:[#allocation2 + $0x18] sm:$0xff]
      %487 = vmatpush.msra.mxu0 0.0
      %488 = vmatpush.msra.mxu0 0.0
      %489 = vmatpush.msra.mxu0 0.0
      %490 = vmatpush.msra.mxu0 0.0
      %491 = vmatpush.msra.mxu0 0.0
      %492 = vmatpush.msra.mxu0 0.0
      %493 = vmatpush.msra.mxu0 0.0
      %494 = vmatpush.msra.mxu0 0.0
      %495 = vmatpush.msra.mxu0 0.0
      %496 = vmatpush.msra.mxu0 0.0
      %497 = vmatpush.msra.mxu0 0.0
      %498 = vmatpush.msra.mxu0 0.0
      %499 = vmatpush.msra.mxu0 %v486
      %500 = vmatpush.msra.mxu0 %v485
      %501 = vmatpush.msra.mxu0 %v484
      %502 = vmatpush.msra.mxu0 %v483
      %503 = vmatmul.f32.gmra.mxu0 %v228
      %v504 = vpop.f32.mrf.mxu0
      %v505 = vadd.f32 %v224, %v504
      %506 = vdwg.mxu0
      %s507 = scalar_lea.vmem %s192, 48
      %508 = vst.msk [vmem:[%s507] sm:$0xff] %vm200, %v505
      %v509 = vld [vmem:[%s475] sm:$0xff]
      %510 = vst.msk [vmem:[#allocation2] sm:$0xff] %vm200, %v509
      %512 = vrot.lane.b32.xlu0 %v509, 127
      %v513 = vpop.permute.xlu0 %512
      %515 = vst.msk [vmem:[#allocation2 + $0x8] sm:$0xff] %vm200, %v513
      %s516 = sadd.s32 %s194, 8
      %s517 = smul.u32 %s516, 8
      %s518 = scalar_lea.vmem %s183, %s517
      %v519 = vld [vmem:[%s518] sm:$0xff]
      %520 = vst.msk [vmem:[#allocation2 + $0x10] sm:$0xff] %vm200, %v519
      %522 = vrot.lane.b32.xlu0 %v519, 127
      %v523 = vpop.permute.xlu0 %522
      %525 = vst.msk [vmem:[#allocation2 + $0x18] sm:$0xff] %vm200, %v523
      %v526 = vld [vmem:[#allocation2] sm:$0xff]
      %v527 = vld [vmem:[#allocation2 + $0x8] sm:$0xff]
      %v528 = vld [vmem:[#allocation2 + $0x10] sm:$0xff]
      %v529 = vld [vmem:[#allocation2 + $0x18] sm:$0xff]
      %530 = vmatpush.msra.mxu0 0.0
      %531 = vmatpush.msra.mxu0 0.0
      %532 = vmatpush.msra.mxu0 0.0
      %533 = vmatpush.msra.mxu0 0.0
      %534 = vmatpush.msra.mxu0 0.0
      %535 = vmatpush.msra.mxu0 0.0
      %536 = vmatpush.msra.mxu0 0.0
      %537 = vmatpush.msra.mxu0 0.0
      %538 = vmatpush.msra.mxu0 0.0
      %539 = vmatpush.msra.mxu0 0.0
      %540 = vmatpush.msra.mxu0 0.0
      %541 = vmatpush.msra.mxu0 0.0
      %542 = vmatpush.msra.mxu0 %v529
      %543 = vmatpush.msra.mxu0 %v528
      %544 = vmatpush.msra.mxu0 %v527
      %545 = vmatpush.msra.mxu0 %v526
      %546 = vmatmul.f32.gmra.mxu0 %v228
      %v547 = vpop.f32.mrf.mxu0
      %v548 = vadd.f32 %v224, %v547
      %549 = vdwg.mxu0
      %s550 = scalar_lea.vmem %s192, 56
      %551 = vst.msk [vmem:[%s550] sm:$0xff] %vm200, %v548
      %v552 = vld [vmem:[%s518] sm:$0xff]
      %553 = vst.msk [vmem:[#allocation2] sm:$0xff] %vm200, %v552
      %555 = vrot.lane.b32.xlu0 %v552, 127
      %v556 = vpop.permute.xlu0 %555
      %558 = vst.msk [vmem:[#allocation2 + $0x8] sm:$0xff] %vm200, %v556
      %s559 = sadd.s32 %s194, 9
      %s560 = smul.u32 %s559, 8
      %s561 = scalar_lea.vmem %s183, %s560
      %v562 = vld [vmem:[%s561] sm:$0xff]
      %563 = vst.msk [vmem:[#allocation2 + $0x10] sm:$0xff] %vm200, %v562
      %565 = vrot.lane.b32.xlu0 %v562, 127
      %v566 = vpop.permute.xlu0 %565
      %568 = vst.msk [vmem:[#allocation2 + $0x18] sm:$0xff] %vm200, %v566
      %v569 = vld [vmem:[#allocation2] sm:$0xff]
      %v570 = vld [vmem:[#allocation2 + $0x8] sm:$0xff]
      %v571 = vld [vmem:[#allocation2 + $0x10] sm:$0xff]
      %v572 = vld [vmem:[#allocation2 + $0x18] sm:$0xff]
      %573 = vmatpush.msra.mxu0 0.0
      %574 = vmatpush.msra.mxu0 0.0
      %575 = vmatpush.msra.mxu0 0.0
      %576 = vmatpush.msra.mxu0 0.0
      %577 = vmatpush.msra.mxu0 0.0
      %578 = vmatpush.msra.mxu0 0.0
      %579 = vmatpush.msra.mxu0 0.0
      %580 = vmatpush.msra.mxu0 0.0
      %581 = vmatpush.msra.mxu0 0.0
      %582 = vmatpush.msra.mxu0 0.0
      %583 = vmatpush.msra.mxu0 0.0
      %584 = vmatpush.msra.mxu0 0.0
      %585 = vmatpush.msra.mxu0 %v572
      %586 = vmatpush.msra.mxu0 %v571
      %587 = vmatpush.msra.mxu0 %v570
      %588 = vmatpush.msra.mxu0 %v569
      %589 = vmatmul.f32.gmra.mxu0 %v228
      %v590 = vpop.f32.mrf.mxu0
      %v591 = vadd.f32 %v224, %v590
      %592 = vdwg.mxu0
      %s593 = scalar_lea.vmem %s192, 64
      %594 = vst.msk [vmem:[%s593] sm:$0xff] %vm200, %v591
      %v595 = vld [vmem:[%s561] sm:$0xff]
      %596 = vst.msk [vmem:[#allocation2] sm:$0xff] %vm200, %v595
      %598 = vrot.lane.b32.xlu0 %v595, 127
      %v599 = vpop.permute.xlu0 %598
      %601 = vst.msk [vmem:[#allocation2 + $0x8] sm:$0xff] %vm200, %v599
      %s602 = sadd.s32 %s194, 10
      %s603 = smul.u32 %s602, 8
      %s604 = scalar_lea.vmem %s183, %s603
      %v605 = vld [vmem:[%s604] sm:$0xff]
      %606 = vst.msk [vmem:[#allocation2 + $0x10] sm:$0xff] %vm200, %v605
      %608 = vrot.lane.b32.xlu0 %v605, 127
      %v609 = vpop.permute.xlu0 %608
      %611 = vst.msk [vmem:[#allocation2 + $0x18] sm:$0xff] %vm200, %v609
      %v612 = vld [vmem:[#allocation2] sm:$0xff]
      %v613 = vld [vmem:[#allocation2 + $0x8] sm:$0xff]
      %v614 = vld [vmem:[#allocation2 + $0x10] sm:$0xff]
      %v615 = vld [vmem:[#allocation2 + $0x18] sm:$0xff]
      %616 = vmatpush.msra.mxu0 0.0
      %617 = vmatpush.msra.mxu0 0.0
      %618 = vmatpush.msra.mxu0 0.0
      %619 = vmatpush.msra.mxu0 0.0
      %620 = vmatpush.msra.mxu0 0.0
      %621 = vmatpush.msra.mxu0 0.0
      %622 = vmatpush.msra.mxu0 0.0
      %623 = vmatpush.msra.mxu0 0.0
      %624 = vmatpush.msra.mxu0 0.0
      %625 = vmatpush.msra.mxu0 0.0
      %626 = vmatpush.msra.mxu0 0.0
      %627 = vmatpush.msra.mxu0 0.0
      %628 = vmatpush.msra.mxu0 %v615
      %629 = vmatpush.msra.mxu0 %v614
      %630 = vmatpush.msra.mxu0 %v613
      %631 = vmatpush.msra.mxu0 %v612
      %632 = vmatmul.f32.gmra.mxu0 %v228
      %v633 = vpop.f32.mrf.mxu0
      %v634 = vadd.f32 %v224, %v633
      %635 = vdwg.mxu0
      %s636 = scalar_lea.vmem %s192, 72
      %637 = vst.msk [vmem:[%s636] sm:$0xff] %vm200, %v634
      %v638 = vld [vmem:[%s604] sm:$0xff]
      %639 = vst.msk [vmem:[#allocation2] sm:$0xff] %vm200, %v638
      %641 = vrot.lane.b32.xlu0 %v638, 127
      %v642 = vpop.permute.xlu0 %641
      %644 = vst.msk [vmem:[#allocation2 + $0x8] sm:$0xff] %vm200, %v642
      %s645 = sadd.s32 %s194, 11
      %s646 = smul.u32 %s645, 8
      %s647 = scalar_lea.vmem %s183, %s646
      %v648 = vld [vmem:[%s647] sm:$0xff]
      %649 = vst.msk [vmem:[#allocation2 + $0x10] sm:$0xff] %vm200, %v648
      %651 = vrot.lane.b32.xlu0 %v648, 127
      %v652 = vpop.permute.xlu0 %651
      %654 = vst.msk [vmem:[#allocation2 + $0x18] sm:$0xff] %vm200, %v652
      %v655 = vld [vmem:[#allocation2] sm:$0xff]
      %v656 = vld [vmem:[#allocation2 + $0x8] sm:$0xff]
      %v657 = vld [vmem:[#allocation2 + $0x10] sm:$0xff]
      %v658 = vld [vmem:[#allocation2 + $0x18] sm:$0xff]
      %659 = vmatpush.msra.mxu0 0.0
      %660 = vmatpush.msra.mxu0 0.0
      %661 = vmatpush.msra.mxu0 0.0
      %662 = vmatpush.msra.mxu0 0.0
      %663 = vmatpush.msra.mxu0 0.0
      %664 = vmatpush.msra.mxu0 0.0
      %665 = vmatpush.msra.mxu0 0.0
      %666 = vmatpush.msra.mxu0 0.0
      %667 = vmatpush.msra.mxu0 0.0
      %668 = vmatpush.msra.mxu0 0.0
      %669 = vmatpush.msra.mxu0 0.0
      %670 = vmatpush.msra.mxu0 0.0
      %671 = vmatpush.msra.mxu0 %v658
      %672 = vmatpush.msra.mxu0 %v657
      %673 = vmatpush.msra.mxu0 %v656
      %674 = vmatpush.msra.mxu0 %v655
      %675 = vmatmul.f32.gmra.mxu0 %v228
      %v676 = vpop.f32.mrf.mxu0
      %v677 = vadd.f32 %v224, %v676
      %678 = vdwg.mxu0
      %s679 = scalar_lea.vmem %s192, 80
      %680 = vst.msk [vmem:[%s679] sm:$0xff] %vm200, %v677
      %v681 = vld [vmem:[%s647] sm:$0xff]
      %682 = vst.msk [vmem:[#allocation2] sm:$0xff] %vm200, %v681
      %684 = vrot.lane.b32.xlu0 %v681, 127
      %v685 = vpop.permute.xlu0 %684
      %687 = vst.msk [vmem:[#allocation2 + $0x8] sm:$0xff] %vm200, %v685
      %s688 = sadd.s32 %s194, 12
      %s689 = smul.u32 %s688, 8
      %s690 = scalar_lea.vmem %s183, %s689
      %v691 = vld [vmem:[%s690] sm:$0xff]
      %692 = vst.msk [vmem:[#allocation2 + $0x10] sm:$0xff] %vm200, %v691
      %694 = vrot.lane.b32.xlu0 %v691, 127
      %v695 = vpop.permute.xlu0 %694
      %697 = vst.msk [vmem:[#allocation2 + $0x18] sm:$0xff] %vm200, %v695
      %v698 = vld [vmem:[#allocation2] sm:$0xff]
      %v699 = vld [vmem:[#allocation2 + $0x8] sm:$0xff]
      %v700 = vld [vmem:[#allocation2 + $0x10] sm:$0xff]
      %v701 = vld [vmem:[#allocation2 + $0x18] sm:$0xff]
      %702 = vmatpush.msra.mxu0 0.0
      %703 = vmatpush.msra.mxu0 0.0
      %704 = vmatpush.msra.mxu0 0.0
      %705 = vmatpush.msra.mxu0 0.0
      %706 = vmatpush.msra.mxu0 0.0
      %707 = vmatpush.msra.mxu0 0.0
      %708 = vmatpush.msra.mxu0 0.0
      %709 = vmatpush.msra.mxu0 0.0
      %710 = vmatpush.msra.mxu0 0.0
      %711 = vmatpush.msra.mxu0 0.0
      %712 = vmatpush.msra.mxu0 0.0
      %713 = vmatpush.msra.mxu0 0.0
      %714 = vmatpush.msra.mxu0 %v701
      %715 = vmatpush.msra.mxu0 %v700
      %716 = vmatpush.msra.mxu0 %v699
      %717 = vmatpush.msra.mxu0 %v698
      %718 = vmatmul.f32.gmra.mxu0 %v228
      %v719 = vpop.f32.mrf.mxu0
      %v720 = vadd.f32 %v224, %v719
      %721 = vdwg.mxu0
      %s722 = scalar_lea.vmem %s192, 88
      %723 = vst.msk [vmem:[%s722] sm:$0xff] %vm200, %v720
      %v724 = vld [vmem:[%s690] sm:$0xff]
      %725 = vst.msk [vmem:[#allocation2] sm:$0xff] %vm200, %v724
      %727 = vrot.lane.b32.xlu0 %v724, 127
      %v728 = vpop.permute.xlu0 %727
      %730 = vst.msk [vmem:[#allocation2 + $0x8] sm:$0xff] %vm200, %v728
      %s731 = sadd.s32 %s194, 13
      %s732 = smul.u32 %s731, 8
      %s733 = scalar_lea.vmem %s183, %s732
      %v734 = vld [vmem:[%s733] sm:$0xff]
      %735 = vst.msk [vmem:[#allocation2 + $0x10] sm:$0xff] %vm200, %v734
      %737 = vrot.lane.b32.xlu0 %v734, 127
      %v738 = vpop.permute.xlu0 %737
      %740 = vst.msk [vmem:[#allocation2 + $0x18] sm:$0xff] %vm200, %v738
      %v741 = vld [vmem:[#allocation2] sm:$0xff]
      %v742 = vld [vmem:[#allocation2 + $0x8] sm:$0xff]
      %v743 = vld [vmem:[#allocation2 + $0x10] sm:$0xff]
      %v744 = vld [vmem:[#allocation2 + $0x18] sm:$0xff]
      %745 = vmatpush.msra.mxu0 0.0
      %746 = vmatpush.msra.mxu0 0.0
      %747 = vmatpush.msra.mxu0 0.0
      %748 = vmatpush.msra.mxu0 0.0
      %749 = vmatpush.msra.mxu0 0.0
      %750 = vmatpush.msra.mxu0 0.0
      %751 = vmatpush.msra.mxu0 0.0
      %752 = vmatpush.msra.mxu0 0.0
      %753 = vmatpush.msra.mxu0 0.0
      %754 = vmatpush.msra.mxu0 0.0
      %755 = vmatpush.msra.mxu0 0.0
      %756 = vmatpush.msra.mxu0 0.0
      %757 = vmatpush.msra.mxu0 %v744
      %758 = vmatpush.msra.mxu0 %v743
      %759 = vmatpush.msra.mxu0 %v742
      %760 = vmatpush.msra.mxu0 %v741
      %761 = vmatmul.f32.gmra.mxu0 %v228
      %v762 = vpop.f32.mrf.mxu0
      %v763 = vadd.f32 %v224, %v762
      %764 = vdwg.mxu0
      %s765 = scalar_lea.vmem %s192, 96
      %766 = vst.msk [vmem:[%s765] sm:$0xff] %vm200, %v763
      %v767 = vld [vmem:[%s733] sm:$0xff]
      %768 = vst.msk [vmem:[#allocation2] sm:$0xff] %vm200, %v767
      %770 = vrot.lane.b32.xlu0 %v767, 127
      %v771 = vpop.permute.xlu0 %770
      %773 = vst.msk [vmem:[#allocation2 + $0x8] sm:$0xff] %vm200, %v771
      %s774 = sadd.s32 %s194, 14
      %s775 = smul.u32 %s774, 8
      %s776 = scalar_lea.vmem %s183, %s775
      %v777 = vld [vmem:[%s776] sm:$0xff]
      %778 = vst.msk [vmem:[#allocation2 + $0x10] sm:$0xff] %vm200, %v777
      %780 = vrot.lane.b32.xlu0 %v777, 127
      %v781 = vpop.permute.xlu0 %780
      %783 = vst.msk [vmem:[#allocation2 + $0x18] sm:$0xff] %vm200, %v781
      %v784 = vld [vmem:[#allocation2] sm:$0xff]
      %v785 = vld [vmem:[#allocation2 + $0x8] sm:$0xff]
      %v786 = vld [vmem:[#allocation2 + $0x10] sm:$0xff]
      %v787 = vld [vmem:[#allocation2 + $0x18] sm:$0xff]
      %788 = vmatpush.msra.mxu0 0.0
      %789 = vmatpush.msra.mxu0 0.0
      %790 = vmatpush.msra.mxu0 0.0
      %791 = vmatpush.msra.mxu0 0.0
      %792 = vmatpush.msra.mxu0 0.0
      %793 = vmatpush.msra.mxu0 0.0
      %794 = vmatpush.msra.mxu0 0.0
      %795 = vmatpush.msra.mxu0 0.0
      %796 = vmatpush.msra.mxu0 0.0
      %797 = vmatpush.msra.mxu0 0.0
      %798 = vmatpush.msra.mxu0 0.0
      %799 = vmatpush.msra.mxu0 0.0
      %800 = vmatpush.msra.mxu0 %v787
      %801 = vmatpush.msra.mxu0 %v786
      %802 = vmatpush.msra.mxu0 %v785
      %803 = vmatpush.msra.mxu0 %v784
      %804 = vmatmul.f32.gmra.mxu0 %v228
      %v805 = vpop.f32.mrf.mxu0
      %v806 = vadd.f32 %v224, %v805
      %807 = vdwg.mxu0
      %s808 = scalar_lea.vmem %s192, 104
      %809 = vst.msk [vmem:[%s808] sm:$0xff] %vm200, %v806
      %v810 = vld [vmem:[%s776] sm:$0xff]
      %811 = vst.msk [vmem:[#allocation2] sm:$0xff] %vm200, %v810
      %813 = vrot.lane.b32.xlu0 %v810, 127
      %v814 = vpop.permute.xlu0 %813
      %816 = vst.msk [vmem:[#allocation2 + $0x8] sm:$0xff] %vm200, %v814
      %s817 = sadd.s32 %s194, 15
      %s818 = smul.u32 %s817, 8
      %s819 = scalar_lea.vmem %s183, %s818
      %v820 = vld [vmem:[%s819] sm:$0xff]
      %821 = vst.msk [vmem:[#allocation2 + $0x10] sm:$0xff] %vm200, %v820
      %823 = vrot.lane.b32.xlu0 %v820, 127
      %v824 = vpop.permute.xlu0 %823
      %826 = vst.msk [vmem:[#allocation2 + $0x18] sm:$0xff] %vm200, %v824
      %v827 = vld [vmem:[#allocation2] sm:$0xff]
      %v828 = vld [vmem:[#allocation2 + $0x8] sm:$0xff]
      %v829 = vld [vmem:[#allocation2 + $0x10] sm:$0xff]
      %v830 = vld [vmem:[#allocation2 + $0x18] sm:$0xff]
      %831 = vmatpush.msra.mxu0 0.0
      %832 = vmatpush.msra.mxu0 0.0
      %833 = vmatpush.msra.mxu0 0.0
      %834 = vmatpush.msra.mxu0 0.0
      %835 = vmatpush.msra.mxu0 0.0
      %836 = vmatpush.msra.mxu0 0.0
      %837 = vmatpush.msra.mxu0 0.0
      %838 = vmatpush.msra.mxu0 0.0
      %839 = vmatpush.msra.mxu0 0.0
      %840 = vmatpush.msra.mxu0 0.0
      %841 = vmatpush.msra.mxu0 0.0
      %842 = vmatpush.msra.mxu0 0.0
      %843 = vmatpush.msra.mxu0 %v830
      %844 = vmatpush.msra.mxu0 %v829
      %845 = vmatpush.msra.mxu0 %v828
      %846 = vmatpush.msra.mxu0 %v827
      %847 = vmatmul.f32.gmra.mxu0 %v228
      %v848 = vpop.f32.mrf.mxu0
      %v849 = vadd.f32 %v224, %v848
      %850 = vdwg.mxu0
      %s851 = scalar_lea.vmem %s192, 112
      %852 = vst.msk [vmem:[%s851] sm:$0xff] %vm200, %v849
      %v853 = vld [vmem:[%s819] sm:$0xff]
      %854 = vst.msk [vmem:[#allocation2] sm:$0xff] %vm200, %v853
      %856 = vrot.lane.b32.xlu0 %v853, 127
      %v857 = vpop.permute.xlu0 %856
      %859 = vst.msk [vmem:[#allocation2 + $0x8] sm:$0xff] %vm200, %v857
      %s860 = sadd.s32 %s194, 16
      %s861 = smul.u32 %s860, 8
      %s862 = scalar_lea.vmem %s183, %s861
      %v863 = vld [vmem:[%s862] sm:$0xff]
      %864 = vst.msk [vmem:[#allocation2 + $0x10] sm:$0xff] %vm200, %v863
      %866 = vrot.lane.b32.xlu0 %v863, 127
      %v867 = vpop.permute.xlu0 %866
      %869 = vst.msk [vmem:[#allocation2 + $0x18] sm:$0xff] %vm200, %v867
      %v870 = vld [vmem:[#allocation2] sm:$0xff]
      %v871 = vld [vmem:[#allocation2 + $0x8] sm:$0xff]
      %v872 = vld [vmem:[#allocation2 + $0x10] sm:$0xff]
      %v873 = vld [vmem:[#allocation2 + $0x18] sm:$0xff]
      %874 = vmatpush.msra.mxu0 0.0
      %875 = vmatpush.msra.mxu0 0.0
      %876 = vmatpush.msra.mxu0 0.0
      %877 = vmatpush.msra.mxu0 0.0
      %878 = vmatpush.msra.mxu0 0.0
      %879 = vmatpush.msra.mxu0 0.0
      %880 = vmatpush.msra.mxu0 0.0
      %881 = vmatpush.msra.mxu0 0.0
      %882 = vmatpush.msra.mxu0 0.0
      %883 = vmatpush.msra.mxu0 0.0
      %884 = vmatpush.msra.mxu0 0.0
      %885 = vmatpush.msra.mxu0 0.0
      %886 = vmatpush.msra.mxu0 %v873
      %887 = vmatpush.msra.mxu0 %v872
      %888 = vmatpush.msra.mxu0 %v871
      %889 = vmatpush.msra.mxu0 %v870
      %890 = vmatmul.f32.gmra.mxu0 %v228
      %v891 = vpop.f32.mrf.mxu0
      %v892 = vadd.f32 %v224, %v891
      %893 = vdwg.mxu0
      %s894 = scalar_lea.vmem %s192, 120
      %895 = vst.msk [vmem:[%s894] sm:$0xff] %vm200, %v892
      %v896 = vld [vmem:[%s862] sm:$0xff]
      %897 = vst.msk [vmem:[#allocation2] sm:$0xff] %vm200, %v896
      %899 = vrot.lane.b32.xlu0 %v896, 127
      %v900 = vpop.permute.xlu0 %899
      %902 = vst.msk [vmem:[#allocation2 + $0x8] sm:$0xff] %vm200, %v900
      %s903 = sadd.s32 %s194, 17
      %s904 = smul.u32 %s903, 8
      %s905 = scalar_lea.vmem %s183, %s904
      %v906 = vld [vmem:[%s905] sm:$0xff]
      %907 = vst.msk [vmem:[#allocation2 + $0x10] sm:$0xff] %vm200, %v906
      %909 = vrot.lane.b32.xlu0 %v906, 127
      %v910 = vpop.permute.xlu0 %909
      %912 = vst.msk [vmem:[#allocation2 + $0x18] sm:$0xff] %vm200, %v910
      %v913 = vld [vmem:[#allocation2] sm:$0xff]
      %v914 = vld [vmem:[#allocation2 + $0x8] sm:$0xff]
      %v915 = vld [vmem:[#allocation2 + $0x10] sm:$0xff]
      %v916 = vld [vmem:[#allocation2 + $0x18] sm:$0xff]
      %917 = vmatpush.msra.mxu0 0.0
      %918 = vmatpush.msra.mxu0 0.0
      %919 = vmatpush.msra.mxu0 0.0
      %920 = vmatpush.msra.mxu0 0.0
      %921 = vmatpush.msra.mxu0 0.0
      %922 = vmatpush.msra.mxu0 0.0
      %923 = vmatpush.msra.mxu0 0.0
      %924 = vmatpush.msra.mxu0 0.0
      %925 = vmatpush.msra.mxu0 0.0
      %926 = vmatpush.msra.mxu0 0.0
      %927 = vmatpush.msra.mxu0 0.0
      %928 = vmatpush.msra.mxu0 0.0
      %929 = vmatpush.msra.mxu0 %v916
      %930 = vmatpush.msra.mxu0 %v915
      %931 = vmatpush.msra.mxu0 %v914
      %932 = vmatpush.msra.mxu0 %v913
      %933 = vmatmul.f32.gmra.mxu0 %v228
      %v934 = vpop.f32.mrf.mxu0
      %v935 = vadd.f32 %v224, %v934
      %936 = vdwg.mxu0
      %s937 = scalar_lea.vmem %s192, 128
      %938 = vst.msk [vmem:[%s937] sm:$0xff] %vm200, %v935
      %v939 = vld [vmem:[%s905] sm:$0xff]
      %940 = vst.msk [vmem:[#allocation2] sm:$0xff] %vm200, %v939
      %942 = vrot.lane.b32.xlu0 %v939, 127
      %v943 = vpop.permute.xlu0 %942
      %945 = vst.msk [vmem:[#allocation2 + $0x8] sm:$0xff] %vm200, %v943
      %s946 = sadd.s32 %s194, 18
      %s947 = smul.u32 %s946, 8
      %s948 = scalar_lea.vmem %s183, %s947
      %v949 = vld [vmem:[%s948] sm:$0xff]
      %950 = vst.msk [vmem:[#allocation2 + $0x10] sm:$0xff] %vm200, %v949
      %952 = vrot.lane.b32.xlu0 %v949, 127
      %v953 = vpop.permute.xlu0 %952
      %955 = vst.msk [vmem:[#allocation2 + $0x18] sm:$0xff] %vm200, %v953
      %v956 = vld [vmem:[#allocation2] sm:$0xff]
      %v957 = vld [vmem:[#allocation2 + $0x8] sm:$0xff]
      %v958 = vld [vmem:[#allocation2 + $0x10] sm:$0xff]
      %v959 = vld [vmem:[#allocation2 + $0x18] sm:$0xff]
      %960 = vmatpush.msra.mxu0 0.0
      %961 = vmatpush.msra.mxu0 0.0
      %962 = vmatpush.msra.mxu0 0.0
      %963 = vmatpush.msra.mxu0 0.0
      %964 = vmatpush.msra.mxu0 0.0
      %965 = vmatpush.msra.mxu0 0.0
      %966 = vmatpush.msra.mxu0 0.0
      %967 = vmatpush.msra.mxu0 0.0
      %968 = vmatpush.msra.mxu0 0.0
      %969 = vmatpush.msra.mxu0 0.0
      %970 = vmatpush.msra.mxu0 0.0
      %971 = vmatpush.msra.mxu0 0.0
      %972 = vmatpush.msra.mxu0 %v959
      %973 = vmatpush.msra.mxu0 %v958
      %974 = vmatpush.msra.mxu0 %v957
      %975 = vmatpush.msra.mxu0 %v956
      %976 = vmatmul.f32.gmra.mxu0 %v228
      %v977 = vpop.f32.mrf.mxu0
      %v978 = vadd.f32 %v224, %v977
      %979 = vdwg.mxu0
      %s980 = scalar_lea.vmem %s192, 136
      %981 = vst.msk [vmem:[%s980] sm:$0xff] %vm200, %v978
      %v982 = vld [vmem:[%s948] sm:$0xff]
      %983 = vst.msk [vmem:[#allocation2] sm:$0xff] %vm200, %v982
      %985 = vrot.lane.b32.xlu0 %v982, 127
      %v986 = vpop.permute.xlu0 %985
      %988 = vst.msk [vmem:[#allocation2 + $0x8] sm:$0xff] %vm200, %v986
      %s989 = sadd.s32 %s194, 19
      %s990 = smul.u32 %s989, 8
      %s991 = scalar_lea.vmem %s183, %s990
      %v992 = vld [vmem:[%s991] sm:$0xff]
      %993 = vst.msk [vmem:[#allocation2 + $0x10] sm:$0xff] %vm200, %v992
      %995 = vrot.lane.b32.xlu0 %v992, 127
      %v996 = vpop.permute.xlu0 %995
      %998 = vst.msk [vmem:[#allocation2 + $0x18] sm:$0xff] %vm200, %v996
      %v999 = vld [vmem:[#allocation2] sm:$0xff]
      %v1000 = vld [vmem:[#allocation2 + $0x8] sm:$0xff]
      %v1001 = vld [vmem:[#allocation2 + $0x10] sm:$0xff]
      %v1002 = vld [vmem:[#allocation2 + $0x18] sm:$0xff]
      %1003 = vmatpush.msra.mxu0 0.0
      %1004 = vmatpush.msra.mxu0 0.0
      %1005 = vmatpush.msra.mxu0 0.0
      %1006 = vmatpush.msra.mxu0 0.0
      %1007 = vmatpush.msra.mxu0 0.0
      %1008 = vmatpush.msra.mxu0 0.0
      %1009 = vmatpush.msra.mxu0 0.0
      %1010 = vmatpush.msra.mxu0 0.0
      %1011 = vmatpush.msra.mxu0 0.0
      %1012 = vmatpush.msra.mxu0 0.0
      %1013 = vmatpush.msra.mxu0 0.0
      %1014 = vmatpush.msra.mxu0 0.0
      %1015 = vmatpush.msra.mxu0 %v1002
      %1016 = vmatpush.msra.mxu0 %v1001
      %1017 = vmatpush.msra.mxu0 %v1000
      %1018 = vmatpush.msra.mxu0 %v999
      %1019 = vmatmul.f32.gmra.mxu0 %v228
      %v1020 = vpop.f32.mrf.mxu0
      %v1021 = vadd.f32 %v224, %v1020
      %1022 = vdwg.mxu0
      %s1023 = scalar_lea.vmem %s192, 144
      %1024 = vst.msk [vmem:[%s1023] sm:$0xff] %vm200, %v1021
      %v1025 = vld [vmem:[%s991] sm:$0xff]
      %1026 = vst.msk [vmem:[#allocation2] sm:$0xff] %vm200, %v1025
      %1028 = vrot.lane.b32.xlu0 %v1025, 127
      %v1029 = vpop.permute.xlu0 %1028
      %1031 = vst.msk [vmem:[#allocation2 + $0x8] sm:$0xff] %vm200, %v1029
      %s1032 = sadd.s32 %s194, 20
      %s1033 = smul.u32 %s1032, 8
      %s1034 = scalar_lea.vmem %s183, %s1033
      %v1035 = vld [vmem:[%s1034] sm:$0xff]
      %1036 = vst.msk [vmem:[#allocation2 + $0x10] sm:$0xff] %vm200, %v1035
      %1038 = vrot.lane.b32.xlu0 %v1035, 127
      %v1039 = vpop.permute.xlu0 %1038
      %1041 = vst.msk [vmem:[#allocation2 + $0x18] sm:$0xff] %vm200, %v1039
      %v1042 = vld [vmem:[#allocation2] sm:$0xff]
      %v1043 = vld [vmem:[#allocation2 + $0x8] sm:$0xff]
      %v1044 = vld [vmem:[#allocation2 + $0x10] sm:$0xff]
      %v1045 = vld [vmem:[#allocation2 + $0x18] sm:$0xff]
      %1046 = vmatpush.msra.mxu0 0.0
      %1047 = vmatpush.msra.mxu0 0.0
      %1048 = vmatpush.msra.mxu0 0.0
      %1049 = vmatpush.msra.mxu0 0.0
      %1050 = vmatpush.msra.mxu0 0.0
      %1051 = vmatpush.msra.mxu0 0.0
      %1052 = vmatpush.msra.mxu0 0.0
      %1053 = vmatpush.msra.mxu0 0.0
      %1054 = vmatpush.msra.mxu0 0.0
      %1055 = vmatpush.msra.mxu0 0.0
      %1056 = vmatpush.msra.mxu0 0.0
      %1057 = vmatpush.msra.mxu0 0.0
      %1058 = vmatpush.msra.mxu0 %v1045
      %1059 = vmatpush.msra.mxu0 %v1044
      %1060 = vmatpush.msra.mxu0 %v1043
      %1061 = vmatpush.msra.mxu0 %v1042
      %1062 = vmatmul.f32.gmra.mxu0 %v228
      %v1063 = vpop.f32.mrf.mxu0
      %v1064 = vadd.f32 %v224, %v1063
      %1065 = vdwg.mxu0
      %s1066 = scalar_lea.vmem %s192, 152
      %1067 = vst.msk [vmem:[%s1066] sm:$0xff] %vm200, %v1064
      %v1068 = vld [vmem:[%s1034] sm:$0xff]
      %1069 = vst.msk [vmem:[#allocation2] sm:$0xff] %vm200, %v1068
      %1071 = vrot.lane.b32.xlu0 %v1068, 127
      %v1072 = vpop.permute.xlu0 %1071
      %1074 = vst.msk [vmem:[#allocation2 + $0x8] sm:$0xff] %vm200, %v1072
      %s1075 = sadd.s32 %s194, 21
      %s1076 = smul.u32 %s1075, 8
      %s1077 = scalar_lea.vmem %s183, %s1076
      %v1078 = vld [vmem:[%s1077] sm:$0xff]
      %1079 = vst.msk [vmem:[#allocation2 + $0x10] sm:$0xff] %vm200, %v1078
      %1081 = vrot.lane.b32.xlu0 %v1078, 127
      %v1082 = vpop.permute.xlu0 %1081
      %1084 = vst.msk [vmem:[#allocation2 + $0x18] sm:$0xff] %vm200, %v1082
      %v1085 = vld [vmem:[#allocation2] sm:$0xff]
      %v1086 = vld [vmem:[#allocation2 + $0x8] sm:$0xff]
      %v1087 = vld [vmem:[#allocation2 + $0x10] sm:$0xff]
      %v1088 = vld [vmem:[#allocation2 + $0x18] sm:$0xff]
      %1089 = vmatpush.msra.mxu0 0.0
      %1090 = vmatpush.msra.mxu0 0.0
      %1091 = vmatpush.msra.mxu0 0.0
      %1092 = vmatpush.msra.mxu0 0.0
      %1093 = vmatpush.msra.mxu0 0.0
      %1094 = vmatpush.msra.mxu0 0.0
      %1095 = vmatpush.msra.mxu0 0.0
      %1096 = vmatpush.msra.mxu0 0.0
      %1097 = vmatpush.msra.mxu0 0.0
      %1098 = vmatpush.msra.mxu0 0.0
      %1099 = vmatpush.msra.mxu0 0.0
      %1100 = vmatpush.msra.mxu0 0.0
      %1101 = vmatpush.msra.mxu0 %v1088
      %1102 = vmatpush.msra.mxu0 %v1087
      %1103 = vmatpush.msra.mxu0 %v1086
      %1104 = vmatpush.msra.mxu0 %v1085
      %1105 = vmatmul.f32.gmra.mxu0 %v228
      %v1106 = vpop.f32.mrf.mxu0
      %v1107 = vadd.f32 %v224, %v1106
      %1108 = vdwg.mxu0
      %s1109 = scalar_lea.vmem %s192, 160
      %1110 = vst.msk [vmem:[%s1109] sm:$0xff] %vm200, %v1107
      %v1111 = vld [vmem:[%s1077] sm:$0xff]
      %1112 = vst.msk [vmem:[#allocation2] sm:$0xff] %vm200, %v1111
      %1114 = vrot.lane.b32.xlu0 %v1111, 127
      %v1115 = vpop.permute.xlu0 %1114
      %1117 = vst.msk [vmem:[#allocation2 + $0x8] sm:$0xff] %vm200, %v1115
      %s1118 = sadd.s32 %s194, 22
      %s1119 = smul.u32 %s1118, 8
      %s1120 = scalar_lea.vmem %s183, %s1119
      %v1121 = vld [vmem:[%s1120] sm:$0xff]
      %1122 = vst.msk [vmem:[#allocation2 + $0x10] sm:$0xff] %vm200, %v1121
      %1124 = vrot.lane.b32.xlu0 %v1121, 127
      %v1125 = vpop.permute.xlu0 %1124
      %1127 = vst.msk [vmem:[#allocation2 + $0x18] sm:$0xff] %vm200, %v1125
      %v1128 = vld [vmem:[#allocation2] sm:$0xff]
      %v1129 = vld [vmem:[#allocation2 + $0x8] sm:$0xff]
      %v1130 = vld [vmem:[#allocation2 + $0x10] sm:$0xff]
      %v1131 = vld [vmem:[#allocation2 + $0x18] sm:$0xff]
      %1132 = vmatpush.msra.mxu0 0.0
      %1133 = vmatpush.msra.mxu0 0.0
      %1134 = vmatpush.msra.mxu0 0.0
      %1135 = vmatpush.msra.mxu0 0.0
      %1136 = vmatpush.msra.mxu0 0.0
      %1137 = vmatpush.msra.mxu0 0.0
      %1138 = vmatpush.msra.mxu0 0.0
      %1139 = vmatpush.msra.mxu0 0.0
      %1140 = vmatpush.msra.mxu0 0.0
      %1141 = vmatpush.msra.mxu0 0.0
      %1142 = vmatpush.msra.mxu0 0.0
      %1143 = vmatpush.msra.mxu0 0.0
      %1144 = vmatpush.msra.mxu0 %v1131
      %1145 = vmatpush.msra.mxu0 %v1130
      %1146 = vmatpush.msra.mxu0 %v1129
      %1147 = vmatpush.msra.mxu0 %v1128
      %1148 = vmatmul.f32.gmra.mxu0 %v228
      %v1149 = vpop.f32.mrf.mxu0
      %v1150 = vadd.f32 %v224, %v1149
      %1151 = vdwg.mxu0
      %s1152 = scalar_lea.vmem %s192, 168
      %1153 = vst.msk [vmem:[%s1152] sm:$0xff] %vm200, %v1150
      %v1154 = vld [vmem:[%s1120] sm:$0xff]
      %1155 = vst.msk [vmem:[#allocation2] sm:$0xff] %vm200, %v1154
      %1157 = vrot.lane.b32.xlu0 %v1154, 127
      %v1158 = vpop.permute.xlu0 %1157
      %1160 = vst.msk [vmem:[#allocation2 + $0x8] sm:$0xff] %vm200, %v1158
      %s1161 = sadd.s32 %s194, 23
      %s1162 = smul.u32 %s1161, 8
      %s1163 = scalar_lea.vmem %s183, %s1162
      %v1164 = vld [vmem:[%s1163] sm:$0xff]
      %1165 = vst.msk [vmem:[#allocation2 + $0x10] sm:$0xff] %vm200, %v1164
      %1167 = vrot.lane.b32.xlu0 %v1164, 127
      %v1168 = vpop.permute.xlu0 %1167
      %1170 = vst.msk [vmem:[#allocation2 + $0x18] sm:$0xff] %vm200, %v1168
      %v1171 = vld [vmem:[#allocation2] sm:$0xff]
      %v1172 = vld [vmem:[#allocation2 + $0x8] sm:$0xff]
      %v1173 = vld [vmem:[#allocation2 + $0x10] sm:$0xff]
      %v1174 = vld [vmem:[#allocation2 + $0x18] sm:$0xff]
      %1175 = vmatpush.msra.mxu0 0.0
      %1176 = vmatpush.msra.mxu0 0.0
      %1177 = vmatpush.msra.mxu0 0.0
      %1178 = vmatpush.msra.mxu0 0.0
      %1179 = vmatpush.msra.mxu0 0.0
      %1180 = vmatpush.msra.mxu0 0.0
      %1181 = vmatpush.msra.mxu0 0.0
      %1182 = vmatpush.msra.mxu0 0.0
      %1183 = vmatpush.msra.mxu0 0.0
      %1184 = vmatpush.msra.mxu0 0.0
      %1185 = vmatpush.msra.mxu0 0.0
      %1186 = vmatpush.msra.mxu0 0.0
      %1187 = vmatpush.msra.mxu0 %v1174
      %1188 = vmatpush.msra.mxu0 %v1173
      %1189 = vmatpush.msra.mxu0 %v1172
      %1190 = vmatpush.msra.mxu0 %v1171
      %1191 = vmatmul.f32.gmra.mxu0 %v228
      %v1192 = vpop.f32.mrf.mxu0
      %v1193 = vadd.f32 %v224, %v1192
      %1194 = vdwg.mxu0
      %s1195 = scalar_lea.vmem %s192, 176
      %1196 = vst.msk [vmem:[%s1195] sm:$0xff] %vm200, %v1193
      %v1197 = vld [vmem:[%s1163] sm:$0xff]
      %1198 = vst.msk [vmem:[#allocation2] sm:$0xff] %vm200, %v1197
      %1200 = vrot.lane.b32.xlu0 %v1197, 127
      %v1201 = vpop.permute.xlu0 %1200
      %1203 = vst.msk [vmem:[#allocation2 + $0x8] sm:$0xff] %vm200, %v1201
      %s1204 = sadd.s32 %s194, 24
      %s1205 = smul.u32 %s1204, 8
      %s1206 = scalar_lea.vmem %s183, %s1205
      %v1207 = vld [vmem:[%s1206] sm:$0xff]
      %1208 = vst.msk [vmem:[#allocation2 + $0x10] sm:$0xff] %vm200, %v1207
      %1210 = vrot.lane.b32.xlu0 %v1207, 127
      %v1211 = vpop.permute.xlu0 %1210
      %1213 = vst.msk [vmem:[#allocation2 + $0x18] sm:$0xff] %vm200, %v1211
      %v1214 = vld [vmem:[#allocation2] sm:$0xff]
      %v1215 = vld [vmem:[#allocation2 + $0x8] sm:$0xff]
      %v1216 = vld [vmem:[#allocation2 + $0x10] sm:$0xff]
      %v1217 = vld [vmem:[#allocation2 + $0x18] sm:$0xff]
      %1218 = vmatpush.msra.mxu0 0.0
      %1219 = vmatpush.msra.mxu0 0.0
      %1220 = vmatpush.msra.mxu0 0.0
      %1221 = vmatpush.msra.mxu0 0.0
      %1222 = vmatpush.msra.mxu0 0.0
      %1223 = vmatpush.msra.mxu0 0.0
      %1224 = vmatpush.msra.mxu0 0.0
      %1225 = vmatpush.msra.mxu0 0.0
      %1226 = vmatpush.msra.mxu0 0.0
      %1227 = vmatpush.msra.mxu0 0.0
      %1228 = vmatpush.msra.mxu0 0.0
      %1229 = vmatpush.msra.mxu0 0.0
      %1230 = vmatpush.msra.mxu0 %v1217
      %1231 = vmatpush.msra.mxu0 %v1216
      %1232 = vmatpush.msra.mxu0 %v1215
      %1233 = vmatpush.msra.mxu0 %v1214
      %1234 = vmatmul.f32.gmra.mxu0 %v228
      %v1235 = vpop.f32.mrf.mxu0
      %v1236 = vadd.f32 %v224, %v1235
      %1237 = vdwg.mxu0
      %s1238 = scalar_lea.vmem %s192, 184
      %1239 = vst.msk [vmem:[%s1238] sm:$0xff] %vm200, %v1236
      %s1240 = smul.u32 24, %s19
      %p1241 = scmp.lt.s32.totalorder %s18, 1
      %s1242 = scalar_select %p1241, %s18, 1
      %p1243 = scmp.lt.s32.totalorder %s1240, 23
      %s1244 = scalar_select %p1243, %s1240, 23
      %s1245 = smul.addr %s1242, 24
      %s1246 = sadd.s32 %s1244, %s1245
      %s1247 = smul.addr %s1246, 8
      %s1248 = scalar_lea.vmem %s3, %s1247
      // Predicated region
      $region33: #{tpu_custom_call.1} parent=31 // pred_check
        %p1249 = pneg %p114
      $region34: #{tpu_custom_call.1} parent=31 // pred_check_branch
        %1251 = sbr.rel (%p1249) target = $region36
      $region35: #{tpu_custom_call.1} parent=31 // pred_region
        %s1252 = smul.u32 24, %s19
      $region36: #{tpu_custom_call.1} parent=31 // pred_fallthru
        _
    $region32: #{tpu_custom_call.1} parent=5 // pred_fallthru
      _
    %p1253 = scmp.le.s32.totalorder 2, %s9
    // Predicated region
    $region37: #{tpu_custom_call.1} parent=5 // pred_check
      %p1254 = pneg %p1253
    $region38: #{tpu_custom_call.1} parent=5 // pred_check_branch
      %1256 = sbr.rel (%p1254) target = $region40
    $region39: #{tpu_custom_call.1} parent=5 // pred_region
      %s1257 = ssub.s32 %s9, 2
      // Predicated region
      $region41: #{tpu_custom_call.1} parent=39 // pred_check
        %p1258 = pneg %p120
      $region42: #{tpu_custom_call.1} parent=39 // pred_check_branch
        %1260 = sbr.rel (%p1258) target = $region44
      $region43: #{tpu_custom_call.1} parent=39 // pred_region
        %s1261 = smul.u32 24, %s21
        %p1262 = scmp.lt.s32.totalorder %s20, 1
        %s1263 = scalar_select %p1262, %s20, 1
        %p1264 = scmp.lt.s32.totalorder %s1261, 23
        %s1265 = scalar_select %p1264, %s1261, 23
        %s1266 = smul.addr %s1263, 24
        %s1267 = sadd.s32 %s1265, %s1266
        %s1268 = smul.addr %s1267, 8
        %s1269 = scalar_lea.vmem %s3, %s1268
      $region44: #{tpu_custom_call.1} parent=39 // pred_fallthru
        _
    $region40: #{tpu_custom_call.1} parent=5 // pred_fallthru
      _
  $region6: #{tpu_custom_call.1} parent=0 // loop_footer
    %s13 = sadd.s32 1, %s9
  $region7: #{tpu_custom_call.1} parent=0 // loop_footer_branch
    %8 = sbr.rel target = $region3
  $region8: #{tpu_custom_call.1} parent=0 // loop_exit
    _

</llo_original>
